<compile_context>
chip_gen: v7x
topology: tpu7x:2x2x1
jax: 0.10.0
libtpu: 0.0.40
codegen_flags: <defaults>
</compile_context>

<pallas_src>
import functools

import jax
import jax.numpy as jnp
from jax.experimental import pallas as pl
from jax.experimental.pallas import tpu as pltpu


def _round_up(n, m):
    return ((n + m - 1) // m) * m


# ---------------------------------------------------------------------------
# Fused kernel: one batch tile of the whole VAE forward.
# ---------------------------------------------------------------------------
def _vae_fused_kernel(x_ref, e_ref, *refs, n_enc, n_dec, lat_pad, compute_dtype):
    # refs layout:
    #   [W_enc_0 .. W_enc_{n_enc-1},      # encoder weights (in, out), bf16
    #    W_heads,                         # (latent, 2*lat_pad)  mu ‖ logvar
    #    W_dec_lin,                       # (lat_pad, latent)    linear_dec
    #    W_dec_0 .. W_dec_{n_dec-1},      # decoder weights
    #    bias_pack,                       # (n_layers, max_width) f32
    #    heads_out_ref, xhat_out_ref]
    n_w = n_enc + 2 + n_dec
    w_refs = refs[:n_w]
    b_ref = refs[n_w]
    heads_ref, xhat_ref = refs[n_w + 1], refs[n_w + 2]

    def linear(h, li):
        w = w_refs[li][...]                               # already compute_dtype
        out = w.shape[1]                                  # static
        acc = jnp.dot(h.astype(compute_dtype), w,
                      preferred_element_type=jnp.float32)
        return acc + b_ref[li:li + 1, :out]               # f32 bias, f32 accum

    # ---- encoder: Linear (+ReLU between hidden layers, none after last) ----
    h = x_ref[...]
    for i in range(n_enc):
        h = linear(h, i)
        if i < n_enc - 1:
            h = jnp.maximum(h, 0.0)

    # ---- merged mu / logvar head (each head padded to lat_pad lanes) ----
    heads = linear(h, n_enc)                              # (tile_b, 2*lat_pad) f32
    heads_ref[...] = heads.astype(heads_ref.dtype)        # lane-dense slab
    mu = heads[:, :lat_pad]                               # 128-aligned splits,
    logvar = heads[:, lat_pad:]                           # no lane shift

    # ---- reparameterization: z = exp(logvar) * e + mu,  e ~ U[0,1) ----
    # TODO(synk): could use in-kernel pltpu.prng_random_bits on real TPU; kept
    # host-side (streamed input) so the kernel also runs in interpret mode.
    z = jnp.exp(logvar) * e_ref[...].astype(jnp.float32) + mu

    # ---- linear_dec (zero rows absorb the lat_pad padding columns of z) ----
    z = linear(z, n_enc + 1)

    # ---- decoder: Linear (+ReLU between), Sigmoid on the last ----
    for i in range(n_dec):
        z = linear(z, n_enc + 2 + i)
        if i < n_dec - 1:
            z = jnp.maximum(z, 0.0)
    xhat_ref[...] = jax.nn.sigmoid(z).astype(xhat_ref.dtype)


# ---------------------------------------------------------------------------
# Deterministic parameter init (mirrors nn.Linear default init) + packing.
# ---------------------------------------------------------------------------
def _init_linear(key, in_f, out_f):
    kw, kb = jax.random.split(key)
    bound = 1.0 / (float(in_f) ** 0.5)
    # stored transposed relative to torch: (in, out) so the kernel does x @ W
    w = jax.random.uniform(kw, (in_f, out_f), jnp.float32, minval=-bound, maxval=bound)
    b = jax.random.uniform(kb, (out_f,), jnp.float32, minval=-bound, maxval=bound)
    return w, b


def init_vae_params(layers, seed=0, param_dtype=jnp.bfloat16):
    key = jax.random.PRNGKey(seed)
    n = len(layers)
    latent = layers[-1]
    lat_pad = max(128, _round_up(latent, 128))

    enc, dec = [], []
    for i in range(n - 1):                       # encoder: layers[i] -> layers[i+1]
        key, sub = jax.random.split(key)
        enc.append(_init_linear(sub, layers[i], layers[i + 1]))
    key, k_mu = jax.random.split(key)
    key, k_lv = jax.random.split(key)
    key, k_dc = jax.random.split(key)
    w_mu, b_mu = _init_linear(k_mu, latent, latent)
    w_lv, b_lv = _init_linear(k_lv, latent, latent)
    w_dc, b_dc = _init_linear(k_dc, latent, latent)
    for i in range(1, n):                        # decoder: layers[-i] -> layers[-i-1]
        key, sub = jax.random.split(key)
        dec.append(_init_linear(sub, layers[-i], layers[-i - 1]))

    # merged mu ‖ logvar head, each padded to lat_pad output lanes
    w_heads = jnp.concatenate(
        [jnp.pad(w_mu, ((0, 0), (0, lat_pad - latent))),
         jnp.pad(w_lv, ((0, 0), (0, lat_pad - latent)))], axis=1)
    b_heads = jnp.concatenate(
        [jnp.pad(b_mu, (0, lat_pad - latent)),
         jnp.pad(b_lv, (0, lat_pad - latent))])
    # linear_dec consumes the lat_pad-wide z slab: zero rows for padding cols
    w_dec_lin = jnp.pad(w_dc, ((0, lat_pad - latent), (0, 0)))

    weights = [w for w, _ in enc] + [w_heads, w_dec_lin] + [w for w, _ in dec]
    biases = [b for _, b in enc] + [b_heads, b_dc] + [b for _, b in dec]

    max_w = _round_up(max(b.shape[0] for b in biases), 128)
    bias_pack = jnp.stack([jnp.pad(b, (0, max_w - b.shape[0])) for b in biases])

    return {
        "weights": [w.astype(param_dtype) for w in weights],   # bf16 in HBM
        "bias_pack": bias_pack.astype(jnp.float32),            # f32 bias table
        "latent": latent,
        "lat_pad": lat_pad,
        "n_enc": len(enc),
        "n_dec": len(dec),
        "d_in": layers[0],
    }


# ---------------------------------------------------------------------------
# Forward wrapper: single fused pallas_call, 1-D grid over batch tiles.
# ---------------------------------------------------------------------------
def vae_forward(params, x, noise_key, *, compute_dtype=jnp.bfloat16, tile_b=256):
    """
    x: (B, C, H, W) with C*H*W == layers[0].
    Returns (x_hat, mu, logvar); x_hat reshaped back to (B, C, H, W).
    Pass bf16 x to halve activation HBM traffic (kernel is activation-bound
    at large B once weights are resident).
    """
    B, C, H, W = x.shape
    D0 = C * H * W
    assert D0 == params["d_in"], "flattened feature dim must match layers[0]"
    latent, lat_pad = params["latent"], params["lat_pad"]
    n_enc, n_dec = params["n_enc"], params["n_dec"]
    weights, bias_pack = params["weights"], params["bias_pack"]

    # pad batch to a multiple of tile_b rows (full-M MXU tiles per grid step)
    B_pad = max(tile_b, _round_up(B, tile_b))
    grid = (B_pad // tile_b,)

    x_flat = x.reshape(B, D0)
    if B_pad != B:
        x_flat = jnp.pad(x_flat, ((0, B_pad - B), (0, 0)))

    # e ~ U[0,1): same distribution as torch.rand_like(mu); per-row noise so
    # every batch tile draws distinct values.
    e = jax.random.uniform(noise_key, (B_pad, lat_pad), jnp.float32)

    kernel = functools.partial(
        _vae_fused_kernel,
        n_enc=n_enc, n_dec=n_dec, lat_pad=lat_pad, compute_dtype=compute_dtype)

    def act_spec(width):                       # streamed per batch tile
        return pl.BlockSpec((tile_b, width), lambda i: (i, 0))

    def res_spec(shape):                       # VMEM-resident across the grid
        return pl.BlockSpec(shape, lambda i: (0, 0))

    # advisory cost estimate for XLA's scheduler
    flops = 2 * B_pad * sum(w.shape[0] * w.shape[1] for w in weights)
    transcendentals = B_pad * (lat_pad + D0)                 # exp + sigmoid
    bytes_accessed = (sum(w.size * w.dtype.itemsize for w in weights)
                      + bias_pack.size * bias_pack.dtype.itemsize
                      + x_flat.size * x_flat.dtype.itemsize
                      + e.size * 4
                      + B_pad * 2 * lat_pad * 4
                      + B_pad * D0 * x.dtype.itemsize)
    cost = pl.CostEstimate(flops=int(flops),
                           transcendentals=int(transcendentals),
                           bytes_accessed=int(bytes_accessed))

    heads, xhat = pl.pallas_call(
        kernel,
        grid=grid,
        in_specs=([act_spec(D0), act_spec(lat_pad)]
                  + [res_spec(w.shape) for w in weights]
                  + [res_spec(bias_pack.shape)]),
        out_specs=(act_spec(2 * lat_pad), act_spec(D0)),
        out_shape=(
            jax.ShapeDtypeStruct((B_pad, 2 * lat_pad), jnp.float32),  # mu ‖ logvar
            jax.ShapeDtypeStruct((B_pad, D0), x.dtype),               # x_hat flat
        ),
        compiler_params=pltpu.CompilerParams(
            dimension_semantics=("parallel",),          # megacore on v7x
            vmem_limit_bytes=32 * 1024 * 1024),         # safe on v5e/v6e/v7x
        cost_estimate=cost,
    )(x_flat, e, *weights, bias_pack)

    mu = heads[:B, :latent]
    logvar = heads[:B, lat_pad:lat_pad + latent]
    x_hat = xhat[:B].reshape(B, C, H, W)
    return x_hat, mu, logvar


# ---------------------------------------------------------------------------
if __name__ == "__main__":
    # small shapes: B=2, C=4, H=W=16  ->  flattened feature dim = 1024
    B, C, H, W = 2, 4, 16, 16
    layers = [C * H * W, 128, 32]   # VariationalAutoencoder(layers=[1024, 128, 32])

    params = init_vae_params(layers, seed=0)

    key = jax.random.PRNGKey(0)
    kx, ke = jax.random.split(key)
    x = jax.random.uniform(kx, (B, C, H, W), jnp.float32)

    x_hat, mu, logvar = vae_forward(params, x, noise_key=ke)
    jax.block_until_ready((x_hat, mu, logvar))

    assert x_hat.shape == (B, C, H, W)
    assert mu.shape == (B, layers[-1])
    assert logvar.shape == (B, layers[-1])
    assert bool(jnp.all(x_hat >= 0.0)) and bool(jnp.all(x_hat <= 1.0))
    assert bool(jnp.all(jnp.isfinite(x_hat)))
    assert bool(jnp.all(jnp.isfinite(mu))) and bool(jnp.all(jnp.isfinite(logvar)))

    print("KERNEL_OK")
</pallas_src>

<mosaic_0001>
module attributes {stable_mosaic.version = 11 : i64} {
  func.func @_vae_fused_kernel(%arg0: i32, %arg1: memref<256x1024xf32, #tpu.memory_space<vmem>>, %arg2: memref<256x128xf32, #tpu.memory_space<vmem>>, %arg3: memref<1024x128xbf16, #tpu.memory_space<vmem>>, %arg4: memref<128x32xbf16, #tpu.memory_space<vmem>>, %arg5: memref<32x256xbf16, #tpu.memory_space<vmem>>, %arg6: memref<128x32xbf16, #tpu.memory_space<vmem>>, %arg7: memref<32x128xbf16, #tpu.memory_space<vmem>>, %arg8: memref<128x1024xbf16, #tpu.memory_space<vmem>>, %arg9: memref<6x1024xf32, #tpu.memory_space<vmem>>, %arg10: memref<256x256xf32, #tpu.memory_space<vmem>>, %arg11: memref<256x1024xf32, #tpu.memory_space<vmem>>) attributes {dimension_semantics = [#tpu.dimension_semantics<parallel>], iteration_bounds = array<i64: 1>, scalar_prefetch = 0 : i64, scratch_operands = 0 : i64, tpu.core_type = #tpu.core_type<tc>, window_params = [{transform_indices = @transform_0, window_bounds = array<i64: 256, 1024>}, {transform_indices = @transform_1, window_bounds = array<i64: 256, 128>}, {pipeline_mode = #tpu.pipeline_mode<synchronous>, transform_indices = @transform_2, window_bounds = array<i64: 1024, 128>}, {pipeline_mode = #tpu.pipeline_mode<synchronous>, transform_indices = @transform_3, window_bounds = array<i64: 128, 32>}, {pipeline_mode = #tpu.pipeline_mode<synchronous>, transform_indices = @transform_4, window_bounds = array<i64: 32, 256>}, {pipeline_mode = #tpu.pipeline_mode<synchronous>, transform_indices = @transform_5, window_bounds = array<i64: 128, 32>}, {pipeline_mode = #tpu.pipeline_mode<synchronous>, transform_indices = @transform_6, window_bounds = array<i64: 32, 128>}, {pipeline_mode = #tpu.pipeline_mode<synchronous>, transform_indices = @transform_7, window_bounds = array<i64: 128, 1024>}, {pipeline_mode = #tpu.pipeline_mode<synchronous>, transform_indices = @transform_8, window_bounds = array<i64: 6, 1024>}, {transform_indices = @transform_9, window_bounds = array<i64: 256, 256>}, {transform_indices = @transform_10, window_bounds = array<i64: 256, 1024>}]} {
    %c0 = arith.constant 0 : index
    %c0_0 = arith.constant 0 : index
    %0 = vector.load %arg1[%c0, %c0_0] : memref<256x1024xf32, #tpu.memory_space<vmem>>, vector<256x1024xf32>
    %c0_1 = arith.constant 0 : index
    %c0_2 = arith.constant 0 : index
    %1 = vector.load %arg3[%c0_1, %c0_2] : memref<1024x128xbf16, #tpu.memory_space<vmem>>, vector<1024x128xbf16>
    %2 = arith.truncf %0 : vector<256x1024xf32> to vector<256x1024xbf16>
    %cst = arith.constant dense<0.000000e+00> : vector<256x128xf32>
    %3 = tpu.matmul %2, %1, %cst {dimension_numbers = #tpu.dot_dimension_numbers<[1], [0], [0], [1], [0, 0, 1, 1], [], []>} : vector<256x1024xbf16>, vector<1024x128xbf16>, vector<256x128xf32> -> vector<256x128xf32>
    %c0_3 = arith.constant 0 : index
    %c0_4 = arith.constant 0 : index
    %4 = vector.load %arg9[%c0_3, %c0_4] : memref<6x1024xf32, #tpu.memory_space<vmem>>, vector<1x128xf32>
    %5 = vector.broadcast %4 : vector<1x128xf32> to vector<256x128xf32>
    %6 = arith.addf %3, %5 : vector<256x128xf32>
    %cst_5 = arith.constant 0.000000e+00 : f32
    %7 = vector.broadcast %cst_5 : f32 to vector<256x128xf32>
    %8 = arith.maximumf %6, %7 : vector<256x128xf32>
    %c0_6 = arith.constant 0 : index
    %c0_7 = arith.constant 0 : index
    %9 = vector.load %arg4[%c0_6, %c0_7] : memref<128x32xbf16, #tpu.memory_space<vmem>>, vector<128x32xbf16>
    %10 = arith.truncf %8 : vector<256x128xf32> to vector<256x128xbf16>
    %cst_8 = arith.constant dense<0.000000e+00> : vector<256x32xf32>
    %11 = tpu.matmul %10, %9, %cst_8 {dimension_numbers = #tpu.dot_dimension_numbers<[1], [0], [0], [1], [0, 0, 1, 1], [], []>} : vector<256x128xbf16>, vector<128x32xbf16>, vector<256x32xf32> -> vector<256x32xf32>
    %c1 = arith.constant 1 : index
    %c0_9 = arith.constant 0 : index
    %12 = vector.load %arg9[%c1, %c0_9] : memref<6x1024xf32, #tpu.memory_space<vmem>>, vector<1x32xf32>
    %13 = vector.broadcast %12 : vector<1x32xf32> to vector<256x32xf32>
    %14 = arith.addf %11, %13 : vector<256x32xf32>
    %c0_10 = arith.constant 0 : index
    %c0_11 = arith.constant 0 : index
    %15 = vector.load %arg5[%c0_10, %c0_11] : memref<32x256xbf16, #tpu.memory_space<vmem>>, vector<32x256xbf16>
    %16 = arith.truncf %14 : vector<256x32xf32> to vector<256x32xbf16>
    %cst_12 = arith.constant dense<0.000000e+00> : vector<256x256xf32>
    %17 = tpu.matmul %16, %15, %cst_12 {dimension_numbers = #tpu.dot_dimension_numbers<[1], [0], [0], [1], [0, 0, 1, 1], [], []>} : vector<256x32xbf16>, vector<32x256xbf16>, vector<256x256xf32> -> vector<256x256xf32>
    %c2 = arith.constant 2 : index
    %c0_13 = arith.constant 0 : index
    %18 = vector.load %arg9[%c2, %c0_13] : memref<6x1024xf32, #tpu.memory_space<vmem>>, vector<1x256xf32>
    %19 = vector.broadcast %18 : vector<1x256xf32> to vector<256x256xf32>
    %20 = arith.addf %17, %19 : vector<256x256xf32>
    %c0_14 = arith.constant 0 : index
    %c0_15 = arith.constant 0 : index
    %21 = vector.load %arg10[%c0_14, %c0_15] : memref<256x256xf32, #tpu.memory_space<vmem>>, vector<256x256xf32>
    tpu.vector_store %arg10[%c0_14, %c0_15], %20 {strides = array<i32>} : memref<256x256xf32, #tpu.memory_space<vmem>>, vector<256x256xf32>,
    %22 = vector.extract_strided_slice %20 {offsets = [0, 0], sizes = [256, 128], strides = [1, 1]} : vector<256x256xf32> to vector<256x128xf32>
    %23 = vector.extract_strided_slice %20 {offsets = [0, 128], sizes = [256, 128], strides = [1, 1]} : vector<256x256xf32> to vector<256x128xf32>
    %24 = math.exp %23 : vector<256x128xf32>
    %c0_16 = arith.constant 0 : index
    %c0_17 = arith.constant 0 : index
    %25 = vector.load %arg2[%c0_16, %c0_17] : memref<256x128xf32, #tpu.memory_space<vmem>>, vector<256x128xf32>
    %26 = arith.mulf %24, %25 : vector<256x128xf32>
    %27 = arith.addf %26, %22 : vector<256x128xf32>
    %c0_18 = arith.constant 0 : index
    %c0_19 = arith.constant 0 : index
    %28 = vector.load %arg6[%c0_18, %c0_19] : memref<128x32xbf16, #tpu.memory_space<vmem>>, vector<128x32xbf16>
    %29 = arith.truncf %27 : vector<256x128xf32> to vector<256x128xbf16>
    %cst_20 = arith.constant dense<0.000000e+00> : vector<256x32xf32>
    %30 = tpu.matmul %29, %28, %cst_20 {dimension_numbers = #tpu.dot_dimension_numbers<[1], [0], [0], [1], [0, 0, 1, 1], [], []>} : vector<256x128xbf16>, vector<128x32xbf16>, vector<256x32xf32> -> vector<256x32xf32>
    %c3 = arith.constant 3 : index
    %c0_21 = arith.constant 0 : index
    %31 = vector.load %arg9[%c3, %c0_21] : memref<6x1024xf32, #tpu.memory_space<vmem>>, vector<1x32xf32>
    %32 = vector.broadcast %31 : vector<1x32xf32> to vector<256x32xf32>
    %33 = arith.addf %30, %32 : vector<256x32xf32>
    %c0_22 = arith.constant 0 : index
    %c0_23 = arith.constant 0 : index
    %34 = vector.load %arg7[%c0_22, %c0_23] : memref<32x128xbf16, #tpu.memory_space<vmem>>, vector<32x128xbf16>
    %35 = arith.truncf %33 : vector<256x32xf32> to vector<256x32xbf16>
    %cst_24 = arith.constant dense<0.000000e+00> : vector<256x128xf32>
    %36 = tpu.matmul %35, %34, %cst_24 {dimension_numbers = #tpu.dot_dimension_numbers<[1], [0], [0], [1], [0, 0, 1, 1], [], []>} : vector<256x32xbf16>, vector<32x128xbf16>, vector<256x128xf32> -> vector<256x128xf32>
    %c4 = arith.constant 4 : index
    %c0_25 = arith.constant 0 : index
    %37 = vector.load %arg9[%c4, %c0_25] : memref<6x1024xf32, #tpu.memory_space<vmem>>, vector<1x128xf32>
    %38 = vector.broadcast %37 : vector<1x128xf32> to vector<256x128xf32>
    %39 = arith.addf %36, %38 : vector<256x128xf32>
    %cst_26 = arith.constant 0.000000e+00 : f32
    %40 = vector.broadcast %cst_26 : f32 to vector<256x128xf32>
    %41 = arith.maximumf %39, %40 : vector<256x128xf32>
    %c0_27 = arith.constant 0 : index
    %c0_28 = arith.constant 0 : index
    %42 = vector.load %arg8[%c0_27, %c0_28] : memref<128x1024xbf16, #tpu.memory_space<vmem>>, vector<128x1024xbf16>
    %43 = arith.truncf %41 : vector<256x128xf32> to vector<256x128xbf16>
    %cst_29 = arith.constant dense<0.000000e+00> : vector<256x1024xf32>
    %44 = tpu.matmul %43, %42, %cst_29 {dimension_numbers = #tpu.dot_dimension_numbers<[1], [0], [0], [1], [0, 0, 1, 1], [], []>} : vector<256x128xbf16>, vector<128x1024xbf16>, vector<256x1024xf32> -> vector<256x1024xf32>
    %c5 = arith.constant 5 : index
    %c0_30 = arith.constant 0 : index
    %45 = vector.load %arg9[%c5, %c0_30] : memref<6x1024xf32, #tpu.memory_space<vmem>>, vector<1x1024xf32>
    %46 = vector.broadcast %45 : vector<1x1024xf32> to vector<256x1024xf32>
    %47 = arith.addf %44, %46 : vector<256x1024xf32>
    %48 = arith.negf %47 : vector<256x1024xf32>
    %49 = math.exp %48 : vector<256x1024xf32>
    %cst_31 = arith.constant 1.000000e+00 : f32
    %50 = vector.broadcast %cst_31 : f32 to vector<256x1024xf32>
    %51 = arith.addf %50, %49 : vector<256x1024xf32>
    %52 = arith.divf %50, %51 : vector<256x1024xf32>
    %c0_32 = arith.constant 0 : index
    %c0_33 = arith.constant 0 : index
    %53 = vector.load %arg11[%c0_32, %c0_33] : memref<256x1024xf32, #tpu.memory_space<vmem>>, vector<256x1024xf32>
    tpu.vector_store %arg11[%c0_32, %c0_33], %52 {strides = array<i32>} : memref<256x1024xf32, #tpu.memory_space<vmem>>, vector<256x1024xf32>,
    return
  }
  func.func @transform_0(%arg0: i32) -> (i32, i32) {
    %c0_i32 = arith.constant 0 : i32
    %c0_i32_0 = arith.constant 0 : i32
    return %arg0, %c0_i32 : i32, i32
  }
  func.func @transform_1(%arg0: i32) -> (i32, i32) {
    %c0_i32 = arith.constant 0 : i32
    %c0_i32_0 = arith.constant 0 : i32
    return %arg0, %c0_i32 : i32, i32
  }
  func.func @transform_2(%arg0: i32) -> (i32, i32) {
    %c0_i32 = arith.constant 0 : i32
    %c0_i32_0 = arith.constant 0 : i32
    %c0_i32_1 = arith.constant 0 : i32
    return %c0_i32, %c0_i32_0 : i32, i32
  }
  func.func @transform_3(%arg0: i32) -> (i32, i32) {
    %c0_i32 = arith.constant 0 : i32
    %c0_i32_0 = arith.constant 0 : i32
    %c0_i32_1 = arith.constant 0 : i32
    return %c0_i32, %c0_i32_0 : i32, i32
  }
  func.func @transform_4(%arg0: i32) -> (i32, i32) {
    %c0_i32 = arith.constant 0 : i32
    %c0_i32_0 = arith.constant 0 : i32
    %c0_i32_1 = arith.constant 0 : i32
    return %c0_i32, %c0_i32_0 : i32, i32
  }
  func.func @transform_5(%arg0: i32) -> (i32, i32) {
    %c0_i32 = arith.constant 0 : i32
    %c0_i32_0 = arith.constant 0 : i32
    %c0_i32_1 = arith.constant 0 : i32
    return %c0_i32, %c0_i32_0 : i32, i32
  }
  func.func @transform_6(%arg0: i32) -> (i32, i32) {
    %c0_i32 = arith.constant 0 : i32
    %c0_i32_0 = arith.constant 0 : i32
    %c0_i32_1 = arith.constant 0 : i32
    return %c0_i32, %c0_i32_0 : i32, i32
  }
  func.func @transform_7(%arg0: i32) -> (i32, i32) {
    %c0_i32 = arith.constant 0 : i32
    %c0_i32_0 = arith.constant 0 : i32
    %c0_i32_1 = arith.constant 0 : i32
    return %c0_i32, %c0_i32_0 : i32, i32
  }
  func.func @transform_8(%arg0: i32) -> (i32, i32) {
    %c0_i32 = arith.constant 0 : i32
    %c0_i32_0 = arith.constant 0 : i32
    %c0_i32_1 = arith.constant 0 : i32
    return %c0_i32, %c0_i32_0 : i32, i32
  }
  func.func @transform_9(%arg0: i32) -> (i32, i32) {
    %c0_i32 = arith.constant 0 : i32
    %c0_i32_0 = arith.constant 0 : i32
    return %arg0, %c0_i32 : i32, i32
  }
  func.func @transform_10(%arg0: i32) -> (i32, i32) {
    %c0_i32 = arith.constant 0 : i32
    %c0_i32_0 = arith.constant 0 : i32
    return %arg0, %c0_i32 : i32, i32
  }
}

</mosaic_0001>

<llo_original>
// kernel: tpu_custom_call.1
$region0: #{tpu_custom_call.1}
  #allocation0 [shape = 'u32[]', space=smem, size = 0x4, offset = 0x4, fixed_abs, tag = 'smem constant byte address 0x4 - core index']
  #allocation1 [shape = 'u32[144,128]{1,0:T(1,128)}', space=vmem, size = 0x12000, scoped, tag = 'internal scratch']
  %s0 = inlined_call_operand.hbm [shape: f32[256,1024], index: 0, kind: input, shape index: {}]
  %s1 = inlined_call_operand.hbm [shape: f32[256,128], index: 1, kind: input, shape index: {}]
  %s2 = inlined_call_operand.hbm [shape: bf16[1024,128], index: 2, kind: input, shape index: {}]
  %s3 = inlined_call_operand.vmem [shape: bf16[128,32], index: 3, kind: input, shape index: {}]
  %s4 = inlined_call_operand.vmem [shape: bf16[32,256], index: 4, kind: input, shape index: {}]
  %s5 = inlined_call_operand.vmem [shape: bf16[128,32], index: 5, kind: input, shape index: {}]
  %s6 = inlined_call_operand.vmem [shape: bf16[32,128], index: 6, kind: input, shape index: {}]
  %s7 = inlined_call_operand.hbm [shape: bf16[128,1024], index: 7, kind: input, shape index: {}]
  %s8 = inlined_call_operand.vmem [shape: f32[6,1024], index: 8, kind: input, shape index: {}]
  %s9 = inlined_call_operand.hbm [shape: f32[256,256], index: 9, kind: output, shape index: {0}]
  %s10 = inlined_call_operand.hbm [shape: f32[256,1024], index: 10, kind: output, shape index: {1}]
  %11 = xla_tuple %s9, %s10
  %s12 = sld [smem:[#allocation0]]
  $region70: #{tpu_custom_call.1} parent=0
    _
  %s14 = ssub.s32 1, %s12
  %s15 = scalar_select 0, %s14, %s12
  $region1: #{tpu_custom_call.1} parent=0
    #allocation2 [shape = 'u8[1048576]{0}', space=vmem, size = 0x100000, scoped, tag = 'input window, operand 0, single buffered']
    #allocation3 [shape = 's32[1]{0}', space=sflag, size = 0x4, scoped, tag = 'scoped memory for tpu_custom_call.1']
    #allocation4 [shape = 's32[1]{0}', space=sflag, size = 0x4, scoped, tag = 'scoped memory for tpu_custom_call.1']
    #allocation5 [shape = 'u8[131072]{0}', space=vmem, size = 0x20000, scoped, tag = 'input window, operand 1, single buffered']
    #allocation6 [shape = 's32[1]{0}', space=sflag, size = 0x4, scoped, tag = 'scoped memory for tpu_custom_call.1']
    #allocation7 [shape = 'u8[262144]{0}', space=vmem, size = 0x40000, scoped, tag = 'input window, operand 2, single buffered']
    #allocation8 [shape = 'u8[262144]{0}', space=vmem, size = 0x40000, scoped, tag = 'input window, operand 7, single buffered']
    #allocation9 [shape = 's32[1]{0}', space=sflag, size = 0x4, scoped, tag = 'scoped memory for tpu_custom_call.1']
    #allocation10 [shape = 'u8[262144]{0}', space=vmem, size = 0x40000, scoped, tag = 'output window, operand 0, single buffered']
    #allocation11 [shape = 'u8[1048576]{0}', space=vmem, size = 0x100000, scoped, tag = 'output window, operand 1, single buffered']
    #allocation12 [shape = 's32[1]{0}', space=sflag, size = 0x4, scoped, tag = 'scoped memory for tpu_custom_call.1']
    %16 = vsyncpa [#allocation3], 0
    %17 = vsyncpa [#allocation6], 0
    %18 = vsyncpa [#allocation9], 0
    %19 = vsyncpa [#allocation4], 0
    %20 = vsyncpa [#allocation12], 0
    // Predicated region
    $region2: #{tpu_custom_call.1} parent=1 // pred_check
      _
    $region3: #{tpu_custom_call.1} parent=1 // pred_check_branch
      %22 = sbr.rel (0) target = $region5
    $region4: #{tpu_custom_call.1} parent=1 // pred_region
      %s24 = ssub.s32 32768, 32768
      %25 = vsyncadd [#allocation3], %s24
      %s26 = sshll.u32 [#allocation2], 4
      %s27 = int_to_ptr.vmem [resolvable:$true] %s26
      %32 = dma.hbm_to_vmem [thread:$0]  %s0, 32768, %s27, [#allocation3], 1024, 1024, 64
    $region5: #{tpu_custom_call.1} parent=1 // pred_fallthru
      _
    // Predicated region
    $region6: #{tpu_custom_call.1} parent=1 // pred_check
      _
    $region7: #{tpu_custom_call.1} parent=1 // pred_check_branch
      %34 = sbr.rel (0) target = $region9
    $region8: #{tpu_custom_call.1} parent=1 // pred_region
      %s36 = ssub.s32 4096, 4096
      %37 = vsyncadd [#allocation6], %s36
      %s38 = sshll.u32 [#allocation5], 4
      %s39 = int_to_ptr.vmem [resolvable:$true] %s38
      %44 = dma.hbm_to_vmem [thread:$0]  %s1, 4096, %s39, [#allocation6], 128, 128, 8
    $region9: #{tpu_custom_call.1} parent=1 // pred_fallthru
      _
    // Predicated region
    $region10: #{tpu_custom_call.1} parent=1 // pred_check
      _
    $region11: #{tpu_custom_call.1} parent=1 // pred_check_branch
      %46 = sbr.rel (0) target = $region13
    $region12: #{tpu_custom_call.1} parent=1 // pred_region
      %s48 = ssub.s32 8192, 8192
      %49 = vsyncadd [#allocation6], %s48
      %s50 = sshll.u32 [#allocation7], 4
      %s51 = int_to_ptr.vmem [resolvable:$true] %s50
      %56 = dma.hbm_to_vmem [thread:$0]  %s2, 8192, %s51, [#allocation6], 64, 64, 4
    $region13: #{tpu_custom_call.1} parent=1 // pred_fallthru
      _
    // Predicated region
    $region14: #{tpu_custom_call.1} parent=1 // pred_check
      _
    $region15: #{tpu_custom_call.1} parent=1 // pred_check_branch
      %58 = sbr.rel (0) target = $region17
    $region16: #{tpu_custom_call.1} parent=1 // pred_region
      _
    $region17: #{tpu_custom_call.1} parent=1 // pred_fallthru
      _
    // Predicated region
    $region18: #{tpu_custom_call.1} parent=1 // pred_check
      _
    $region19: #{tpu_custom_call.1} parent=1 // pred_check_branch
      %60 = sbr.rel (0) target = $region21
    $region20: #{tpu_custom_call.1} parent=1 // pred_region
      _
    $region21: #{tpu_custom_call.1} parent=1 // pred_fallthru
      _
    // Predicated region
    $region22: #{tpu_custom_call.1} parent=1 // pred_check
      _
    $region23: #{tpu_custom_call.1} parent=1 // pred_check_branch
      %62 = sbr.rel (0) target = $region25
    $region24: #{tpu_custom_call.1} parent=1 // pred_region
      _
    $region25: #{tpu_custom_call.1} parent=1 // pred_fallthru
      _
    // Predicated region
    $region26: #{tpu_custom_call.1} parent=1 // pred_check
      _
    $region27: #{tpu_custom_call.1} parent=1 // pred_check_branch
      %64 = sbr.rel (0) target = $region29
    $region28: #{tpu_custom_call.1} parent=1 // pred_region
      _
    $region29: #{tpu_custom_call.1} parent=1 // pred_fallthru
      _
    // Predicated region
    $region30: #{tpu_custom_call.1} parent=1 // pred_check
      _
    $region31: #{tpu_custom_call.1} parent=1 // pred_check_branch
      %66 = sbr.rel (0) target = $region33
    $region32: #{tpu_custom_call.1} parent=1 // pred_region
      %s68 = ssub.s32 8192, 8192
      %69 = vsyncadd [#allocation9], %s68
      %s70 = sshll.u32 [#allocation8], 4
      %s71 = int_to_ptr.vmem [resolvable:$true] %s70
      %76 = dma.hbm_to_vmem [thread:$0]  %s7, 8192, %s71, [#allocation9], 512, 512, 32
    $region33: #{tpu_custom_call.1} parent=1 // pred_fallthru
      _
    // Predicated region
    $region34: #{tpu_custom_call.1} parent=1 // pred_check
      _
    $region35: #{tpu_custom_call.1} parent=1 // pred_check_branch
      %78 = sbr.rel (0) target = $region37
    $region36: #{tpu_custom_call.1} parent=1 // pred_region
      _
    $region37: #{tpu_custom_call.1} parent=1 // pred_fallthru
      _
    // Predicated region
    $region38: #{tpu_custom_call.1} parent=1 // pred_check
      _
    $region39: #{tpu_custom_call.1} parent=1 // pred_check_branch
      %80 = sbr.rel (0) target = $region41
    $region40: #{tpu_custom_call.1} parent=1 // pred_region
      %81 = dma.done [#allocation3], 32768
    $region41: #{tpu_custom_call.1} parent=1 // pred_fallthru
      _
    // Predicated region
    $region42: #{tpu_custom_call.1} parent=1 // pred_check
      _
    $region43: #{tpu_custom_call.1} parent=1 // pred_check_branch
      %83 = sbr.rel (0) target = $region45
    $region44: #{tpu_custom_call.1} parent=1 // pred_region
      %84 = dma.done [#allocation6], 4096
    $region45: #{tpu_custom_call.1} parent=1 // pred_fallthru
      _
    // Predicated region
    $region46: #{tpu_custom_call.1} parent=1 // pred_check
      _
    $region47: #{tpu_custom_call.1} parent=1 // pred_check_branch
      %86 = sbr.rel (0) target = $region49
    $region48: #{tpu_custom_call.1} parent=1 // pred_region
      %87 = dma.done [#allocation6], 8192
    $region49: #{tpu_custom_call.1} parent=1 // pred_fallthru
      _
    // Predicated region
    $region50: #{tpu_custom_call.1} parent=1 // pred_check
      _
    $region51: #{tpu_custom_call.1} parent=1 // pred_check_branch
      %89 = sbr.rel (0) target = $region53
    $region52: #{tpu_custom_call.1} parent=1 // pred_region
      %90 = dma.done [#allocation9], 8192
    $region53: #{tpu_custom_call.1} parent=1 // pred_fallthru
      _
    %v92 = vld [vmem:[#allocation2] sm:$0xff]
    %v93 = vld [vmem:[#allocation2 + $0x8] sm:$0xff]
    %v94 = vld [vmem:[#allocation2 + $0x10] sm:$0xff]
    %v95 = vld [vmem:[#allocation2 + $0x18] sm:$0xff]
    %v96 = vld [vmem:[#allocation2 + $0x20] sm:$0xff]
    %v97 = vld [vmem:[#allocation2 + $0x28] sm:$0xff]
    %v98 = vld [vmem:[#allocation2 + $0x30] sm:$0xff]
    %v99 = vld [vmem:[#allocation2 + $0x38] sm:$0xff]
    %v100 = vld [vmem:[#allocation2 + $0x40] sm:$0xff]
    %v101 = vld [vmem:[#allocation2 + $0x48] sm:$0xff]
    %v102 = vld [vmem:[#allocation2 + $0x50] sm:$0xff]
    %v103 = vld [vmem:[#allocation2 + $0x58] sm:$0xff]
    %v104 = vld [vmem:[#allocation2 + $0x60] sm:$0xff]
    %v105 = vld [vmem:[#allocation2 + $0x68] sm:$0xff]
    %v106 = vld [vmem:[#allocation2 + $0x70] sm:$0xff]
    %v107 = vld [vmem:[#allocation2 + $0x78] sm:$0xff]
    %v108 = vld [vmem:[#allocation2 + $0x80] sm:$0xff]
    %v109 = vld [vmem:[#allocation2 + $0x88] sm:$0xff]
    %v110 = vld [vmem:[#allocation2 + $0x90] sm:$0xff]
    %v111 = vld [vmem:[#allocation2 + $0x98] sm:$0xff]
    %v112 = vld [vmem:[#allocation2 + $0xa0] sm:$0xff]
    %v113 = vld [vmem:[#allocation2 + $0xa8] sm:$0xff]
    %v114 = vld [vmem:[#allocation2 + $0xb0] sm:$0xff]
    %v115 = vld [vmem:[#allocation2 + $0xb8] sm:$0xff]
    %v116 = vld [vmem:[#allocation2 + $0xc0] sm:$0xff]
    %v117 = vld [vmem:[#allocation2 + $0xc8] sm:$0xff]
    %v118 = vld [vmem:[#allocation2 + $0xd0] sm:$0xff]
    %v119 = vld [vmem:[#allocation2 + $0xd8] sm:$0xff]
    %v120 = vld [vmem:[#allocation2 + $0xe0] sm:$0xff]
    %v121 = vld [vmem:[#allocation2 + $0xe8] sm:$0xff]
    %v122 = vld [vmem:[#allocation2 + $0xf0] sm:$0xff]
    %v123 = vld [vmem:[#allocation2 + $0xf8] sm:$0xff]
    %v124 = vld [vmem:[#allocation2 + $0x100] sm:$0xff]
    %v125 = vld [vmem:[#allocation2 + $0x108] sm:$0xff]
    %v126 = vld [vmem:[#allocation2 + $0x110] sm:$0xff]
    %v127 = vld [vmem:[#allocation2 + $0x118] sm:$0xff]
    %v128 = vld [vmem:[#allocation2 + $0x120] sm:$0xff]
    %v129 = vld [vmem:[#allocation2 + $0x128] sm:$0xff]
    %v130 = vld [vmem:[#allocation2 + $0x130] sm:$0xff]
    %v131 = vld [vmem:[#allocation2 + $0x138] sm:$0xff]
    %v132 = vld [vmem:[#allocation2 + $0x140] sm:$0xff]
    %v133 = vld [vmem:[#allocation2 + $0x148] sm:$0xff]
    %v134 = vld [vmem:[#allocation2 + $0x150] sm:$0xff]
    %v135 = vld [vmem:[#allocation2 + $0x158] sm:$0xff]
    %v136 = vld [vmem:[#allocation2 + $0x160] sm:$0xff]
    %v137 = vld [vmem:[#allocation2 + $0x168] sm:$0xff]
    %v138 = vld [vmem:[#allocation2 + $0x170] sm:$0xff]
    %v139 = vld [vmem:[#allocation2 + $0x178] sm:$0xff]
    %v140 = vld [vmem:[#allocation2 + $0x180] sm:$0xff]
    %v141 = vld [vmem:[#allocation2 + $0x188] sm:$0xff]
    %v142 = vld [vmem:[#allocation2 + $0x190] sm:$0xff]
    %v143 = vld [vmem:[#allocation2 + $0x198] sm:$0xff]
    %v144 = vld [vmem:[#allocation2 + $0x1a0] sm:$0xff]
    %v145 = vld [vmem:[#allocation2 + $0x1a8] sm:$0xff]
    %v146 = vld [vmem:[#allocation2 + $0x1b0] sm:$0xff]
    %v147 = vld [vmem:[#allocation2 + $0x1b8] sm:$0xff]
    %v148 = vld [vmem:[#allocation2 + $0x1c0] sm:$0xff]
    %v149 = vld [vmem:[#allocation2 + $0x1c8] sm:$0xff]
    %v150 = vld [vmem:[#allocation2 + $0x1d0] sm:$0xff]
    %v151 = vld [vmem:[#allocation2 + $0x1d8] sm:$0xff]
    %v152 = vld [vmem:[#allocation2 + $0x1e0] sm:$0xff]
    %v153 = vld [vmem:[#allocation2 + $0x1e8] sm:$0xff]
    %v154 = vld [vmem:[#allocation2 + $0x1f0] sm:$0xff]
    %v155 = vld [vmem:[#allocation2 + $0x1f8] sm:$0xff]
    %v156 = vld [vmem:[#allocation2 + $0x200] sm:$0xff]
    %v157 = vld [vmem:[#allocation2 + $0x208] sm:$0xff]
    %v158 = vld [vmem:[#allocation2 + $0x210] sm:$0xff]
    %v159 = vld [vmem:[#allocation2 + $0x218] sm:$0xff]
    %v160 = vld [vmem:[#allocation2 + $0x220] sm:$0xff]
    %v161 = vld [vmem:[#allocation2 + $0x228] sm:$0xff]
    %v162 = vld [vmem:[#allocation2 + $0x230] sm:$0xff]
    %v163 = vld [vmem:[#allocation2 + $0x238] sm:$0xff]
    %v164 = vld [vmem:[#allocation2 + $0x240] sm:$0xff]
    %v165 = vld [vmem:[#allocation2 + $0x248] sm:$0xff]
    %v166 = vld [vmem:[#allocation2 + $0x250] sm:$0xff]
    %v167 = vld [vmem:[#allocation2 + $0x258] sm:$0xff]
    %v168 = vld [vmem:[#allocation2 + $0x260] sm:$0xff]
    %v169 = vld [vmem:[#allocation2 + $0x268] sm:$0xff]
    %v170 = vld [vmem:[#allocation2 + $0x270] sm:$0xff]
    %v171 = vld [vmem:[#allocation2 + $0x278] sm:$0xff]
    %v172 = vld [vmem:[#allocation2 + $0x280] sm:$0xff]
    %v173 = vld [vmem:[#allocation2 + $0x288] sm:$0xff]
    %v174 = vld [vmem:[#allocation2 + $0x290] sm:$0xff]
    %v175 = vld [vmem:[#allocation2 + $0x298] sm:$0xff]
    %v176 = vld [vmem:[#allocation2 + $0x2a0] sm:$0xff]
    %v177 = vld [vmem:[#allocation2 + $0x2a8] sm:$0xff]
    %v178 = vld [vmem:[#allocation2 + $0x2b0] sm:$0xff]
    %v179 = vld [vmem:[#allocation2 + $0x2b8] sm:$0xff]
    %v180 = vld [vmem:[#allocation2 + $0x2c0] sm:$0xff]
    %v181 = vld [vmem:[#allocation2 + $0x2c8] sm:$0xff]
    %v182 = vld [vmem:[#allocation2 + $0x2d0] sm:$0xff]
    %v183 = vld [vmem:[#allocation2 + $0x2d8] sm:$0xff]
    %v184 = vld [vmem:[#allocation2 + $0x2e0] sm:$0xff]
    %v185 = vld [vmem:[#allocation2 + $0x2e8] sm:$0xff]
    %v186 = vld [vmem:[#allocation2 + $0x2f0] sm:$0xff]
    %v187 = vld [vmem:[#allocation2 + $0x2f8] sm:$0xff]
    %v188 = vld [vmem:[#allocation2 + $0x300] sm:$0xff]
    %v189 = vld [vmem:[#allocation2 + $0x308] sm:$0xff]
    %v190 = vld [vmem:[#allocation2 + $0x310] sm:$0xff]
    %v191 = vld [vmem:[#allocation2 + $0x318] sm:$0xff]
    %v192 = vld [vmem:[#allocation2 + $0x320] sm:$0xff]
    %v193 = vld [vmem:[#allocation2 + $0x328] sm:$0xff]
    %v194 = vld [vmem:[#allocation2 + $0x330] sm:$0xff]
    %v195 = vld [vmem:[#allocation2 + $0x338] sm:$0xff]
    %v196 = vld [vmem:[#allocation2 + $0x340] sm:$0xff]
    %v197 = vld [vmem:[#allocation2 + $0x348] sm:$0xff]
    %v198 = vld [vmem:[#allocation2 + $0x350] sm:$0xff]
    %v199 = vld [vmem:[#allocation2 + $0x358] sm:$0xff]
    %v200 = vld [vmem:[#allocation2 + $0x360] sm:$0xff]
    %v201 = vld [vmem:[#allocation2 + $0x368] sm:$0xff]
    %v202 = vld [vmem:[#allocation2 + $0x370] sm:$0xff]
    %v203 = vld [vmem:[#allocation2 + $0x378] sm:$0xff]
    %v204 = vld [vmem:[#allocation2 + $0x380] sm:$0xff]
    %v205 = vld [vmem:[#allocation2 + $0x388] sm:$0xff]
    %v206 = vld [vmem:[#allocation2 + $0x390] sm:$0xff]
    %v207 = vld [vmem:[#allocation2 + $0x398] sm:$0xff]
    %v208 = vld [vmem:[#allocation2 + $0x3a0] sm:$0xff]
    %v209 = vld [vmem:[#allocation2 + $0x3a8] sm:$0xff]
    %v210 = vld [vmem:[#allocation2 + $0x3b0] sm:$0xff]
    %v211 = vld [vmem:[#allocation2 + $0x3b8] sm:$0xff]
    %v212 = vld [vmem:[#allocation2 + $0x3c0] sm:$0xff]
    %v213 = vld [vmem:[#allocation2 + $0x3c8] sm:$0xff]
    %v214 = vld [vmem:[#allocation2 + $0x3d0] sm:$0xff]
    %v215 = vld [vmem:[#allocation2 + $0x3d8] sm:$0xff]
    %v216 = vld [vmem:[#allocation2 + $0x3e0] sm:$0xff]
    %v217 = vld [vmem:[#allocation2 + $0x3e8] sm:$0xff]
    %v218 = vld [vmem:[#allocation2 + $0x3f0] sm:$0xff]
    %v219 = vld [vmem:[#allocation2 + $0x3f8] sm:$0xff]
    %v220 = vld [vmem:[#allocation2 + $0x400] sm:$0xff]
    %v221 = vld [vmem:[#allocation2 + $0x408] sm:$0xff]
    %v222 = vld [vmem:[#allocation2 + $0x410] sm:$0xff]
    %v223 = vld [vmem:[#allocation2 + $0x418] sm:$0xff]
    %v224 = vld [vmem:[#allocation2 + $0x420] sm:$0xff]
    %v225 = vld [vmem:[#allocation2 + $0x428] sm:$0xff]
    %v226 = vld [vmem:[#allocation2 + $0x430] sm:$0xff]
    %v227 = vld [vmem:[#allocation2 + $0x438] sm:$0xff]
    %v228 = vld [vmem:[#allocation2 + $0x440] sm:$0xff]
    %v229 = vld [vmem:[#allocation2 + $0x448] sm:$0xff]
    %v230 = vld [vmem:[#allocation2 + $0x450] sm:$0xff]
    %v231 = vld [vmem:[#allocation2 + $0x458] sm:$0xff]
    %v232 = vld [vmem:[#allocation2 + $0x460] sm:$0xff]
    %v233 = vld [vmem:[#allocation2 + $0x468] sm:$0xff]
    %v234 = vld [vmem:[#allocation2 + $0x470] sm:$0xff]
    %v235 = vld [vmem:[#allocation2 + $0x478] sm:$0xff]
    %v236 = vld [vmem:[#allocation2 + $0x480] sm:$0xff]
    %v237 = vld [vmem:[#allocation2 + $0x488] sm:$0xff]
    %v238 = vld [vmem:[#allocation2 + $0x490] sm:$0xff]
    %v239 = vld [vmem:[#allocation2 + $0x498] sm:$0xff]
    %v240 = vld [vmem:[#allocation2 + $0x4a0] sm:$0xff]
    %v241 = vld [vmem:[#allocation2 + $0x4a8] sm:$0xff]
    %v242 = vld [vmem:[#allocation2 + $0x4b0] sm:$0xff]
    %v243 = vld [vmem:[#allocation2 + $0x4b8] sm:$0xff]
    %v244 = vld [vmem:[#allocation2 + $0x4c0] sm:$0xff]
    %v245 = vld [vmem:[#allocation2 + $0x4c8] sm:$0xff]
    %v246 = vld [vmem:[#allocation2 + $0x4d0] sm:$0xff]
    %v247 = vld [vmem:[#allocation2 + $0x4d8] sm:$0xff]
    %v248 = vld [vmem:[#allocation2 + $0x4e0] sm:$0xff]
    %v249 = vld [vmem:[#allocation2 + $0x4e8] sm:$0xff]
    %v250 = vld [vmem:[#allocation2 + $0x4f0] sm:$0xff]
    %v251 = vld [vmem:[#allocation2 + $0x4f8] sm:$0xff]
    %v252 = vld [vmem:[#allocation2 + $0x500] sm:$0xff]
    %v253 = vld [vmem:[#allocation2 + $0x508] sm:$0xff]
    %v254 = vld [vmem:[#allocation2 + $0x510] sm:$0xff]
    %v255 = vld [vmem:[#allocation2 + $0x518] sm:$0xff]
    %v256 = vld [vmem:[#allocation2 + $0x520] sm:$0xff]
    %v257 = vld [vmem:[#allocation2 + $0x528] sm:$0xff]
    %v258 = vld [vmem:[#allocation2 + $0x530] sm:$0xff]
    %v259 = vld [vmem:[#allocation2 + $0x538] sm:$0xff]
    %v260 = vld [vmem:[#allocation2 + $0x540] sm:$0xff]
    %v261 = vld [vmem:[#allocation2 + $0x548] sm:$0xff]
    %v262 = vld [vmem:[#allocation2 + $0x550] sm:$0xff]
    %v263 = vld [vmem:[#allocation2 + $0x558] sm:$0xff]
    %v264 = vld [vmem:[#allocation2 + $0x560] sm:$0xff]
    %v265 = vld [vmem:[#allocation2 + $0x568] sm:$0xff]
    %v266 = vld [vmem:[#allocation2 + $0x570] sm:$0xff]
    %v267 = vld [vmem:[#allocation2 + $0x578] sm:$0xff]
    %v268 = vld [vmem:[#allocation2 + $0x580] sm:$0xff]
    %v269 = vld [vmem:[#allocation2 + $0x588] sm:$0xff]
    %v270 = vld [vmem:[#allocation2 + $0x590] sm:$0xff]
    %v271 = vld [vmem:[#allocation2 + $0x598] sm:$0xff]
    %v272 = vld [vmem:[#allocation2 + $0x5a0] sm:$0xff]
    %v273 = vld [vmem:[#allocation2 + $0x5a8] sm:$0xff]
    %v274 = vld [vmem:[#allocation2 + $0x5b0] sm:$0xff]
    %v275 = vld [vmem:[#allocation2 + $0x5b8] sm:$0xff]
    %v276 = vld [vmem:[#allocation2 + $0x5c0] sm:$0xff]
    %v277 = vld [vmem:[#allocation2 + $0x5c8] sm:$0xff]
    %v278 = vld [vmem:[#allocation2 + $0x5d0] sm:$0xff]
    %v279 = vld [vmem:[#allocation2 + $0x5d8] sm:$0xff]
    %v280 = vld [vmem:[#allocation2 + $0x5e0] sm:$0xff]
    %v281 = vld [vmem:[#allocation2 + $0x5e8] sm:$0xff]
    %v282 = vld [vmem:[#allocation2 + $0x5f0] sm:$0xff]
    %v283 = vld [vmem:[#allocation2 + $0x5f8] sm:$0xff]
    %v284 = vld [vmem:[#allocation2 + $0x600] sm:$0xff]
    %v285 = vld [vmem:[#allocation2 + $0x608] sm:$0xff]
    %v286 = vld [vmem:[#allocation2 + $0x610] sm:$0xff]
    %v287 = vld [vmem:[#allocation2 + $0x618] sm:$0xff]
    %v288 = vld [vmem:[#allocation2 + $0x620] sm:$0xff]
    %v289 = vld [vmem:[#allocation2 + $0x628] sm:$0xff]
    %v290 = vld [vmem:[#allocation2 + $0x630] sm:$0xff]
    %v291 = vld [vmem:[#allocation2 + $0x638] sm:$0xff]
    %v292 = vld [vmem:[#allocation2 + $0x640] sm:$0xff]
    %v293 = vld [vmem:[#allocation2 + $0x648] sm:$0xff]
    %v294 = vld [vmem:[#allocation2 + $0x650] sm:$0xff]
    %v295 = vld [vmem:[#allocation2 + $0x658] sm:$0xff]
    %v296 = vld [vmem:[#allocation2 + $0x660] sm:$0xff]
    %v297 = vld [vmem:[#allocation2 + $0x668] sm:$0xff]
    %v298 = vld [vmem:[#allocation2 + $0x670] sm:$0xff]
    %v299 = vld [vmem:[#allocation2 + $0x678] sm:$0xff]
    %v300 = vld [vmem:[#allocation2 + $0x680] sm:$0xff]
    %v301 = vld [vmem:[#allocation2 + $0x688] sm:$0xff]
    %v302 = vld [vmem:[#allocation2 + $0x690] sm:$0xff]
    %v303 = vld [vmem:[#allocation2 + $0x698] sm:$0xff]
    %v304 = vld [vmem:[#allocation2 + $0x6a0] sm:$0xff]
    %v305 = vld [vmem:[#allocation2 + $0x6a8] sm:$0xff]
    %v306 = vld [vmem:[#allocation2 + $0x6b0] sm:$0xff]
    %v307 = vld [vmem:[#allocation2 + $0x6b8] sm:$0xff]
    %v308 = vld [vmem:[#allocation2 + $0x6c0] sm:$0xff]
    %v309 = vld [vmem:[#allocation2 + $0x6c8] sm:$0xff]
    %v310 = vld [vmem:[#allocation2 + $0x6d0] sm:$0xff]
    %v311 = vld [vmem:[#allocation2 + $0x6d8] sm:$0xff]
    %v312 = vld [vmem:[#allocation2 + $0x6e0] sm:$0xff]
    %v313 = vld [vmem:[#allocation2 + $0x6e8] sm:$0xff]
    %v314 = vld [vmem:[#allocation2 + $0x6f0] sm:$0xff]
    %v315 = vld [vmem:[#allocation2 + $0x6f8] sm:$0xff]
    %v316 = vld [vmem:[#allocation2 + $0x700] sm:$0xff]
    %v317 = vld [vmem:[#allocation2 + $0x708] sm:$0xff]
    %v318 = vld [vmem:[#allocation2 + $0x710] sm:$0xff]
    %v319 = vld [vmem:[#allocation2 + $0x718] sm:$0xff]
    %v320 = vld [vmem:[#allocation2 + $0x720] sm:$0xff]
    %v321 = vld [vmem:[#allocation2 + $0x728] sm:$0xff]
    %v322 = vld [vmem:[#allocation2 + $0x730] sm:$0xff]
    %v323 = vld [vmem:[#allocation2 + $0x738] sm:$0xff]
    %v324 = vld [vmem:[#allocation2 + $0x740] sm:$0xff]
    %v325 = vld [vmem:[#allocation2 + $0x748] sm:$0xff]
    %v326 = vld [vmem:[#allocation2 + $0x750] sm:$0xff]
    %v327 = vld [vmem:[#allocation2 + $0x758] sm:$0xff]
    %v328 = vld [vmem:[#allocation2 + $0x760] sm:$0xff]
    %v329 = vld [vmem:[#allocation2 + $0x768] sm:$0xff]
    %v330 = vld [vmem:[#allocation2 + $0x770] sm:$0xff]
    %v331 = vld [vmem:[#allocation2 + $0x778] sm:$0xff]
    %v332 = vld [vmem:[#allocation2 + $0x780] sm:$0xff]
    %v333 = vld [vmem:[#allocation2 + $0x788] sm:$0xff]
    %v334 = vld [vmem:[#allocation2 + $0x790] sm:$0xff]
    %v335 = vld [vmem:[#allocation2 + $0x798] sm:$0xff]
    %v336 = vld [vmem:[#allocation2 + $0x7a0] sm:$0xff]
    %v337 = vld [vmem:[#allocation2 + $0x7a8] sm:$0xff]
    %v338 = vld [vmem:[#allocation2 + $0x7b0] sm:$0xff]
    %v339 = vld [vmem:[#allocation2 + $0x7b8] sm:$0xff]
    %v340 = vld [vmem:[#allocation2 + $0x7c0] sm:$0xff]
    %v341 = vld [vmem:[#allocation2 + $0x7c8] sm:$0xff]
    %v342 = vld [vmem:[#allocation2 + $0x7d0] sm:$0xff]
    %v343 = vld [vmem:[#allocation2 + $0x7d8] sm:$0xff]
    %v344 = vld [vmem:[#allocation2 + $0x7e0] sm:$0xff]
    %v345 = vld [vmem:[#allocation2 + $0x7e8] sm:$0xff]
    %v346 = vld [vmem:[#allocation2 + $0x7f0] sm:$0xff]
    %v347 = vld [vmem:[#allocation2 + $0x7f8] sm:$0xff]
    %v348 = vld [vmem:[#allocation7] sm:$0xf]
    %v349 = vld [vmem:[#allocation7 + $0x4] sm:$0xf]
    %v350 = vld [vmem:[#allocation7 + $0x8] sm:$0xf]
    %v351 = vld [vmem:[#allocation7 + $0xc] sm:$0xf]
    %v352 = vld [vmem:[#allocation7 + $0x10] sm:$0xf]
    %v353 = vld [vmem:[#allocation7 + $0x14] sm:$0xf]
    %v354 = vld [vmem:[#allocation7 + $0x18] sm:$0xf]
    %v355 = vld [vmem:[#allocation7 + $0x1c] sm:$0xf]
    %v356 = vld [vmem:[#allocation7 + $0x20] sm:$0xf]
    %v357 = vld [vmem:[#allocation7 + $0x24] sm:$0xf]
    %v358 = vld [vmem:[#allocation7 + $0x28] sm:$0xf]
    %v359 = vld [vmem:[#allocation7 + $0x2c] sm:$0xf]
    %v360 = vld [vmem:[#allocation7 + $0x30] sm:$0xf]
    %v361 = vld [vmem:[#allocation7 + $0x34] sm:$0xf]
    %v362 = vld [vmem:[#allocation7 + $0x38] sm:$0xf]
    %v363 = vld [vmem:[#allocation7 + $0x3c] sm:$0xf]
    %v364 = vld [vmem:[#allocation7 + $0x40] sm:$0xf]
    %v365 = vld [vmem:[#allocation7 + $0x44] sm:$0xf]
    %v366 = vld [vmem:[#allocation7 + $0x48] sm:$0xf]
    %v367 = vld [vmem:[#allocation7 + $0x4c] sm:$0xf]
    %v368 = vld [vmem:[#allocation7 + $0x50] sm:$0xf]
    %v369 = vld [vmem:[#allocation7 + $0x54] sm:$0xf]
    %v370 = vld [vmem:[#allocation7 + $0x58] sm:$0xf]
    %v371 = vld [vmem:[#allocation7 + $0x5c] sm:$0xf]
    %v372 = vld [vmem:[#allocation7 + $0x60] sm:$0xf]
    %v373 = vld [vmem:[#allocation7 + $0x64] sm:$0xf]
    %v374 = vld [vmem:[#allocation7 + $0x68] sm:$0xf]
    %v375 = vld [vmem:[#allocation7 + $0x6c] sm:$0xf]
    %v376 = vld [vmem:[#allocation7 + $0x70] sm:$0xf]
    %v377 = vld [vmem:[#allocation7 + $0x74] sm:$0xf]
    %v378 = vld [vmem:[#allocation7 + $0x78] sm:$0xf]
    %v379 = vld [vmem:[#allocation7 + $0x7c] sm:$0xf]
    %v380 = vld [vmem:[#allocation7 + $0x80] sm:$0xf]
    %v381 = vld [vmem:[#allocation7 + $0x84] sm:$0xf]
    %v382 = vld [vmem:[#allocation7 + $0x88] sm:$0xf]
    %v383 = vld [vmem:[#allocation7 + $0x8c] sm:$0xf]
    %v384 = vld [vmem:[#allocation7 + $0x90] sm:$0xf]
    %v385 = vld [vmem:[#allocation7 + $0x94] sm:$0xf]
    %v386 = vld [vmem:[#allocation7 + $0x98] sm:$0xf]
    %v387 = vld [vmem:[#allocation7 + $0x9c] sm:$0xf]
    %v388 = vld [vmem:[#allocation7 + $0xa0] sm:$0xf]
    %v389 = vld [vmem:[#allocation7 + $0xa4] sm:$0xf]
    %v390 = vld [vmem:[#allocation7 + $0xa8] sm:$0xf]
    %v391 = vld [vmem:[#allocation7 + $0xac] sm:$0xf]
    %v392 = vld [vmem:[#allocation7 + $0xb0] sm:$0xf]
    %v393 = vld [vmem:[#allocation7 + $0xb4] sm:$0xf]
    %v394 = vld [vmem:[#allocation7 + $0xb8] sm:$0xf]
    %v395 = vld [vmem:[#allocation7 + $0xbc] sm:$0xf]
    %v396 = vld [vmem:[#allocation7 + $0xc0] sm:$0xf]
    %v397 = vld [vmem:[#allocation7 + $0xc4] sm:$0xf]
    %v398 = vld [vmem:[#allocation7 + $0xc8] sm:$0xf]
    %v399 = vld [vmem:[#allocation7 + $0xcc] sm:$0xf]
    %v400 = vld [vmem:[#allocation7 + $0xd0] sm:$0xf]
    %v401 = vld [vmem:[#allocation7 + $0xd4] sm:$0xf]
    %v402 = vld [vmem:[#allocation7 + $0xd8] sm:$0xf]
    %v403 = vld [vmem:[#allocation7 + $0xdc] sm:$0xf]
    %v404 = vld [vmem:[#allocation7 + $0xe0] sm:$0xf]
    %v405 = vld [vmem:[#allocation7 + $0xe4] sm:$0xf]
    %v406 = vld [vmem:[#allocation7 + $0xe8] sm:$0xf]
    %v407 = vld [vmem:[#allocation7 + $0xec] sm:$0xf]
    %v408 = vld [vmem:[#allocation7 + $0xf0] sm:$0xf]
    %v409 = vld [vmem:[#allocation7 + $0xf4] sm:$0xf]
    %v410 = vld [vmem:[#allocation7 + $0xf8] sm:$0xf]
    %v411 = vld [vmem:[#allocation7 + $0xfc] sm:$0xf]
    %v412 = vld [vmem:[#allocation7 + $0x100] sm:$0xf]
    %v413 = vld [vmem:[#allocation7 + $0x104] sm:$0xf]
    %v414 = vld [vmem:[#allocation7 + $0x108] sm:$0xf]
    %v415 = vld [vmem:[#allocation7 + $0x10c] sm:$0xf]
    %v416 = vld [vmem:[#allocation7 + $0x110] sm:$0xf]
    %v417 = vld [vmem:[#allocation7 + $0x114] sm:$0xf]
    %v418 = vld [vmem:[#allocation7 + $0x118] sm:$0xf]
    %v419 = vld [vmem:[#allocation7 + $0x11c] sm:$0xf]
    %v420 = vld [vmem:[#allocation7 + $0x120] sm:$0xf]
    %v421 = vld [vmem:[#allocation7 + $0x124] sm:$0xf]
    %v422 = vld [vmem:[#allocation7 + $0x128] sm:$0xf]
    %v423 = vld [vmem:[#allocation7 + $0x12c] sm:$0xf]
    %v424 = vld [vmem:[#allocation7 + $0x130] sm:$0xf]
    %v425 = vld [vmem:[#allocation7 + $0x134] sm:$0xf]
    %v426 = vld [vmem:[#allocation7 + $0x138] sm:$0xf]
    %v427 = vld [vmem:[#allocation7 + $0x13c] sm:$0xf]
    %v428 = vld [vmem:[#allocation7 + $0x140] sm:$0xf]
    %v429 = vld [vmem:[#allocation7 + $0x144] sm:$0xf]
    %v430 = vld [vmem:[#allocation7 + $0x148] sm:$0xf]
    %v431 = vld [vmem:[#allocation7 + $0x14c] sm:$0xf]
    %v432 = vld [vmem:[#allocation7 + $0x150] sm:$0xf]
    %v433 = vld [vmem:[#allocation7 + $0x154] sm:$0xf]
    %v434 = vld [vmem:[#allocation7 + $0x158] sm:$0xf]
    %v435 = vld [vmem:[#allocation7 + $0x15c] sm:$0xf]
    %v436 = vld [vmem:[#allocation7 + $0x160] sm:$0xf]
    %v437 = vld [vmem:[#allocation7 + $0x164] sm:$0xf]
    %v438 = vld [vmem:[#allocation7 + $0x168] sm:$0xf]
    %v439 = vld [vmem:[#allocation7 + $0x16c] sm:$0xf]
    %v440 = vld [vmem:[#allocation7 + $0x170] sm:$0xf]
    %v441 = vld [vmem:[#allocation7 + $0x174] sm:$0xf]
    %v442 = vld [vmem:[#allocation7 + $0x178] sm:$0xf]
    %v443 = vld [vmem:[#allocation7 + $0x17c] sm:$0xf]
    %v444 = vld [vmem:[#allocation7 + $0x180] sm:$0xf]
    %v445 = vld [vmem:[#allocation7 + $0x184] sm:$0xf]
    %v446 = vld [vmem:[#allocation7 + $0x188] sm:$0xf]
    %v447 = vld [vmem:[#allocation7 + $0x18c] sm:$0xf]
    %v448 = vld [vmem:[#allocation7 + $0x190] sm:$0xf]
    %v449 = vld [vmem:[#allocation7 + $0x194] sm:$0xf]
    %v450 = vld [vmem:[#allocation7 + $0x198] sm:$0xf]
    %v451 = vld [vmem:[#allocation7 + $0x19c] sm:$0xf]
    %v452 = vld [vmem:[#allocation7 + $0x1a0] sm:$0xf]
    %v453 = vld [vmem:[#allocation7 + $0x1a4] sm:$0xf]
    %v454 = vld [vmem:[#allocation7 + $0x1a8] sm:$0xf]
    %v455 = vld [vmem:[#allocation7 + $0x1ac] sm:$0xf]
    %v456 = vld [vmem:[#allocation7 + $0x1b0] sm:$0xf]
    %v457 = vld [vmem:[#allocation7 + $0x1b4] sm:$0xf]
    %v458 = vld [vmem:[#allocation7 + $0x1b8] sm:$0xf]
    %v459 = vld [vmem:[#allocation7 + $0x1bc] sm:$0xf]
    %v460 = vld [vmem:[#allocation7 + $0x1c0] sm:$0xf]
    %v461 = vld [vmem:[#allocation7 + $0x1c4] sm:$0xf]
    %v462 = vld [vmem:[#allocation7 + $0x1c8] sm:$0xf]
    %v463 = vld [vmem:[#allocation7 + $0x1cc] sm:$0xf]
    %v464 = vld [vmem:[#allocation7 + $0x1d0] sm:$0xf]
    %v465 = vld [vmem:[#allocation7 + $0x1d4] sm:$0xf]
    %v466 = vld [vmem:[#allocation7 + $0x1d8] sm:$0xf]
    %v467 = vld [vmem:[#allocation7 + $0x1dc] sm:$0xf]
    %v468 = vld [vmem:[#allocation7 + $0x1e0] sm:$0xf]
    %v469 = vld [vmem:[#allocation7 + $0x1e4] sm:$0xf]
    %v470 = vld [vmem:[#allocation7 + $0x1e8] sm:$0xf]
    %v471 = vld [vmem:[#allocation7 + $0x1ec] sm:$0xf]
    %v472 = vld [vmem:[#allocation7 + $0x1f0] sm:$0xf]
    %v473 = vld [vmem:[#allocation7 + $0x1f4] sm:$0xf]
    %v474 = vld [vmem:[#allocation7 + $0x1f8] sm:$0xf]
    %v475 = vld [vmem:[#allocation7 + $0x1fc] sm:$0xf]
    %v476 = vpack.c.bf16 %v100, %v92
    %v477 = vpack.c.bf16 %v101, %v93
    %v478 = vpack.c.bf16 %v102, %v94
    %v479 = vpack.c.bf16 %v103, %v95
    %v480 = vpack.c.bf16 %v104, %v96
    %v481 = vpack.c.bf16 %v105, %v97
    %v482 = vpack.c.bf16 %v106, %v98
    %v483 = vpack.c.bf16 %v107, %v99
    %v484 = vpack.c.bf16 %v116, %v108
    %v485 = vpack.c.bf16 %v117, %v109
    %v486 = vpack.c.bf16 %v118, %v110
    %v487 = vpack.c.bf16 %v119, %v111
    %v488 = vpack.c.bf16 %v120, %v112
    %v489 = vpack.c.bf16 %v121, %v113
    %v490 = vpack.c.bf16 %v122, %v114
    %v491 = vpack.c.bf16 %v123, %v115
    %v492 = vpack.c.bf16 %v132, %v124
    %v493 = vpack.c.bf16 %v133, %v125
    %v494 = vpack.c.bf16 %v134, %v126
    %v495 = vpack.c.bf16 %v135, %v127
    %v496 = vpack.c.bf16 %v136, %v128
    %v497 = vpack.c.bf16 %v137, %v129
    %v498 = vpack.c.bf16 %v138, %v130
    %v499 = vpack.c.bf16 %v139, %v131
    %v500 = vpack.c.bf16 %v148, %v140
    %v501 = vpack.c.bf16 %v149, %v141
    %v502 = vpack.c.bf16 %v150, %v142
    %v503 = vpack.c.bf16 %v151, %v143
    %v504 = vpack.c.bf16 %v152, %v144
    %v505 = vpack.c.bf16 %v153, %v145
    %v506 = vpack.c.bf16 %v154, %v146
    %v507 = vpack.c.bf16 %v155, %v147
    %v508 = vpack.c.bf16 %v164, %v156
    %v509 = vpack.c.bf16 %v165, %v157
    %v510 = vpack.c.bf16 %v166, %v158
    %v511 = vpack.c.bf16 %v167, %v159
    %v512 = vpack.c.bf16 %v168, %v160
    %v513 = vpack.c.bf16 %v169, %v161
    %v514 = vpack.c.bf16 %v170, %v162
    %v515 = vpack.c.bf16 %v171, %v163
    %v516 = vpack.c.bf16 %v180, %v172
    %v517 = vpack.c.bf16 %v181, %v173
    %v518 = vpack.c.bf16 %v182, %v174
    %v519 = vpack.c.bf16 %v183, %v175
    %v520 = vpack.c.bf16 %v184, %v176
    %v521 = vpack.c.bf16 %v185, %v177
    %v522 = vpack.c.bf16 %v186, %v178
    %v523 = vpack.c.bf16 %v187, %v179
    %v524 = vpack.c.bf16 %v196, %v188
    %v525 = vpack.c.bf16 %v197, %v189
    %v526 = vpack.c.bf16 %v198, %v190
    %v527 = vpack.c.bf16 %v199, %v191
    %v528 = vpack.c.bf16 %v200, %v192
    %v529 = vpack.c.bf16 %v201, %v193
    %v530 = vpack.c.bf16 %v202, %v194
    %v531 = vpack.c.bf16 %v203, %v195
    %v532 = vpack.c.bf16 %v212, %v204
    %v533 = vpack.c.bf16 %v213, %v205
    %v534 = vpack.c.bf16 %v214, %v206
    %v535 = vpack.c.bf16 %v215, %v207
    %v536 = vpack.c.bf16 %v216, %v208
    %v537 = vpack.c.bf16 %v217, %v209
    %v538 = vpack.c.bf16 %v218, %v210
    %v539 = vpack.c.bf16 %v219, %v211
    %v540 = vpack.c.bf16 %v228, %v220
    %v541 = vpack.c.bf16 %v229, %v221
    %v542 = vpack.c.bf16 %v230, %v222
    %v543 = vpack.c.bf16 %v231, %v223
    %v544 = vpack.c.bf16 %v232, %v224
    %v545 = vpack.c.bf16 %v233, %v225
    %v546 = vpack.c.bf16 %v234, %v226
    %v547 = vpack.c.bf16 %v235, %v227
    %v548 = vpack.c.bf16 %v244, %v236
    %v549 = vpack.c.bf16 %v245, %v237
    %v550 = vpack.c.bf16 %v246, %v238
    %v551 = vpack.c.bf16 %v247, %v239
    %v552 = vpack.c.bf16 %v248, %v240
    %v553 = vpack.c.bf16 %v249, %v241
    %v554 = vpack.c.bf16 %v250, %v242
    %v555 = vpack.c.bf16 %v251, %v243
    %v556 = vpack.c.bf16 %v260, %v252
    %v557 = vpack.c.bf16 %v261, %v253
    %v558 = vpack.c.bf16 %v262, %v254
    %v559 = vpack.c.bf16 %v263, %v255
    %v560 = vpack.c.bf16 %v264, %v256
    %v561 = vpack.c.bf16 %v265, %v257
    %v562 = vpack.c.bf16 %v266, %v258
    %v563 = vpack.c.bf16 %v267, %v259
    %v564 = vpack.c.bf16 %v276, %v268
    %v565 = vpack.c.bf16 %v277, %v269
    %v566 = vpack.c.bf16 %v278, %v270
    %v567 = vpack.c.bf16 %v279, %v271
    %v568 = vpack.c.bf16 %v280, %v272
    %v569 = vpack.c.bf16 %v281, %v273
    %v570 = vpack.c.bf16 %v282, %v274
    %v571 = vpack.c.bf16 %v283, %v275
    %v572 = vpack.c.bf16 %v292, %v284
    %v573 = vpack.c.bf16 %v293, %v285
    %v574 = vpack.c.bf16 %v294, %v286
    %v575 = vpack.c.bf16 %v295, %v287
    %v576 = vpack.c.bf16 %v296, %v288
    %v577 = vpack.c.bf16 %v297, %v289
    %v578 = vpack.c.bf16 %v298, %v290
    %v579 = vpack.c.bf16 %v299, %v291
    %v580 = vpack.c.bf16 %v308, %v300
    %v581 = vpack.c.bf16 %v309, %v301
    %v582 = vpack.c.bf16 %v310, %v302
    %v583 = vpack.c.bf16 %v311, %v303
    %v584 = vpack.c.bf16 %v312, %v304
    %v585 = vpack.c.bf16 %v313, %v305
    %v586 = vpack.c.bf16 %v314, %v306
    %v587 = vpack.c.bf16 %v315, %v307
    %v588 = vpack.c.bf16 %v324, %v316
    %v589 = vpack.c.bf16 %v325, %v317
    %v590 = vpack.c.bf16 %v326, %v318
    %v591 = vpack.c.bf16 %v327, %v319
    %v592 = vpack.c.bf16 %v328, %v320
    %v593 = vpack.c.bf16 %v329, %v321
    %v594 = vpack.c.bf16 %v330, %v322
    %v595 = vpack.c.bf16 %v331, %v323
    %v596 = vpack.c.bf16 %v340, %v332
    %v597 = vpack.c.bf16 %v341, %v333
    %v598 = vpack.c.bf16 %v342, %v334
    %v599 = vpack.c.bf16 %v343, %v335
    %v600 = vpack.c.bf16 %v344, %v336
    %v601 = vpack.c.bf16 %v345, %v337
    %v602 = vpack.c.bf16 %v346, %v338
    %v603 = vpack.c.bf16 %v347, %v339
    %v604 = vld [vmem:[%s8] ss:$0 sm:$0xff]
    %v733 = vunpack.c.l.b16 %v348
    %v734 = vunpack.c.l.b16 %v349
    %v735 = vunpack.c.l.b16 %v350
    %v736 = vunpack.c.l.b16 %v351
    %v737 = vunpack.c.l.b16 %v352
    %v738 = vunpack.c.l.b16 %v353
    %v739 = vunpack.c.l.b16 %v354
    %v740 = vunpack.c.l.b16 %v355
    %v741 = vunpack.c.l.b16 %v356
    %v742 = vunpack.c.l.b16 %v357
    %v743 = vunpack.c.l.b16 %v358
    %v744 = vunpack.c.l.b16 %v359
    %v745 = vunpack.c.l.b16 %v360
    %v746 = vunpack.c.l.b16 %v361
    %v747 = vunpack.c.l.b16 %v362
    %v748 = vunpack.c.l.b16 %v363
    %v749 = vunpack.c.l.b16 %v364
    %v750 = vunpack.c.l.b16 %v365
    %v751 = vunpack.c.l.b16 %v366
    %v752 = vunpack.c.l.b16 %v367
    %v753 = vunpack.c.l.b16 %v368
    %v754 = vunpack.c.l.b16 %v369
    %v755 = vunpack.c.l.b16 %v370
    %v756 = vunpack.c.l.b16 %v371
    %v757 = vunpack.c.l.b16 %v372
    %v758 = vunpack.c.l.b16 %v373
    %v759 = vunpack.c.l.b16 %v374
    %v760 = vunpack.c.l.b16 %v375
    %v761 = vunpack.c.l.b16 %v376
    %v762 = vunpack.c.l.b16 %v377
    %v763 = vunpack.c.l.b16 %v378
    %v764 = vunpack.c.l.b16 %v379
    %v765 = vunpack.c.l.b16 %v380
    %v766 = vunpack.c.l.b16 %v381
    %v767 = vunpack.c.l.b16 %v382
    %v768 = vunpack.c.l.b16 %v383
    %v769 = vunpack.c.l.b16 %v384
    %v770 = vunpack.c.l.b16 %v385
    %v771 = vunpack.c.l.b16 %v386
    %v772 = vunpack.c.l.b16 %v387
    %v773 = vunpack.c.l.b16 %v388
    %v774 = vunpack.c.l.b16 %v389
    %v775 = vunpack.c.l.b16 %v390
    %v776 = vunpack.c.l.b16 %v391
    %v777 = vunpack.c.l.b16 %v392
    %v778 = vunpack.c.l.b16 %v393
    %v779 = vunpack.c.l.b16 %v394
    %v780 = vunpack.c.l.b16 %v395
    %v781 = vunpack.c.l.b16 %v396
    %v782 = vunpack.c.l.b16 %v397
    %v783 = vunpack.c.l.b16 %v398
    %v784 = vunpack.c.l.b16 %v399
    %v785 = vunpack.c.l.b16 %v400
    %v786 = vunpack.c.l.b16 %v401
    %v787 = vunpack.c.l.b16 %v402
    %v788 = vunpack.c.l.b16 %v403
    %v789 = vunpack.c.l.b16 %v404
    %v790 = vunpack.c.l.b16 %v405
    %v791 = vunpack.c.l.b16 %v406
    %v792 = vunpack.c.l.b16 %v407
    %v793 = vunpack.c.l.b16 %v408
    %v794 = vunpack.c.l.b16 %v409
    %v795 = vunpack.c.l.b16 %v410
    %v796 = vunpack.c.l.b16 %v411
    %v797 = vunpack.c.l.b16 %v412
    %v798 = vunpack.c.l.b16 %v413
    %v799 = vunpack.c.l.b16 %v414
    %v800 = vunpack.c.l.b16 %v415
    %v801 = vunpack.c.l.b16 %v416
    %v802 = vunpack.c.l.b16 %v417
    %v803 = vunpack.c.l.b16 %v418
    %v804 = vunpack.c.l.b16 %v419
    %v805 = vunpack.c.l.b16 %v420
    %v806 = vunpack.c.l.b16 %v421
    %v807 = vunpack.c.l.b16 %v422
    %v808 = vunpack.c.l.b16 %v423
    %v809 = vunpack.c.l.b16 %v424
    %v810 = vunpack.c.l.b16 %v425
    %v811 = vunpack.c.l.b16 %v426
    %v812 = vunpack.c.l.b16 %v427
    %v813 = vunpack.c.l.b16 %v428
    %v814 = vunpack.c.l.b16 %v429
    %v815 = vunpack.c.l.b16 %v430
    %v816 = vunpack.c.l.b16 %v431
    %v817 = vunpack.c.l.b16 %v432
    %v818 = vunpack.c.l.b16 %v433
    %v819 = vunpack.c.l.b16 %v434
    %v820 = vunpack.c.l.b16 %v435
    %v821 = vunpack.c.l.b16 %v436
    %v822 = vunpack.c.l.b16 %v437
    %v823 = vunpack.c.l.b16 %v438
    %v824 = vunpack.c.l.b16 %v439
    %v825 = vunpack.c.l.b16 %v440
    %v826 = vunpack.c.l.b16 %v441
    %v827 = vunpack.c.l.b16 %v442
    %v828 = vunpack.c.l.b16 %v443
    %v829 = vunpack.c.l.b16 %v444
    %v830 = vunpack.c.l.b16 %v445
    %v831 = vunpack.c.l.b16 %v446
    %v832 = vunpack.c.l.b16 %v447
    %v833 = vunpack.c.l.b16 %v448
    %v834 = vunpack.c.l.b16 %v449
    %v835 = vunpack.c.l.b16 %v450
    %v836 = vunpack.c.l.b16 %v451
    %v837 = vunpack.c.l.b16 %v452
    %v838 = vunpack.c.l.b16 %v453
    %v839 = vunpack.c.l.b16 %v454
    %v840 = vunpack.c.l.b16 %v455
    %v841 = vunpack.c.l.b16 %v456
    %v842 = vunpack.c.l.b16 %v457
    %v843 = vunpack.c.l.b16 %v458
    %v844 = vunpack.c.l.b16 %v459
    %v845 = vunpack.c.l.b16 %v460
    %v846 = vunpack.c.l.b16 %v461
    %v847 = vunpack.c.l.b16 %v462
    %v848 = vunpack.c.l.b16 %v463
    %v849 = vunpack.c.l.b16 %v464
    %v850 = vunpack.c.l.b16 %v465
    %v851 = vunpack.c.l.b16 %v466
    %v852 = vunpack.c.l.b16 %v467
    %v853 = vunpack.c.l.b16 %v468
    %v854 = vunpack.c.l.b16 %v469
    %v855 = vunpack.c.l.b16 %v470
    %v856 = vunpack.c.l.b16 %v471
    %v857 = vunpack.c.l.b16 %v472
    %v858 = vunpack.c.l.b16 %v473
    %v859 = vunpack.c.l.b16 %v474
    %v860 = vunpack.c.l.b16 %v475
    %v861 = vpack.c.b16 %v734, %v733
    %v862 = vpack.c.b16 %v736, %v735
    %v863 = vpack.c.b16 %v738, %v737
    %v864 = vpack.c.b16 %v740, %v739
    %v865 = vpack.c.b16 %v742, %v741
    %v866 = vpack.c.b16 %v744, %v743
    %v867 = vpack.c.b16 %v746, %v745
    %v868 = vpack.c.b16 %v748, %v747
    %v869 = vpack.c.b16 %v750, %v749
    %v870 = vpack.c.b16 %v752, %v751
    %v871 = vpack.c.b16 %v754, %v753
    %v872 = vpack.c.b16 %v756, %v755
    %v873 = vpack.c.b16 %v758, %v757
    %v874 = vpack.c.b16 %v760, %v759
    %v875 = vpack.c.b16 %v762, %v761
    %v876 = vpack.c.b16 %v764, %v763
    %v877 = vpack.c.b16 %v766, %v765
    %v878 = vpack.c.b16 %v768, %v767
    %v879 = vpack.c.b16 %v770, %v769
    %v880 = vpack.c.b16 %v772, %v771
    %v881 = vpack.c.b16 %v774, %v773
    %v882 = vpack.c.b16 %v776, %v775
    %v883 = vpack.c.b16 %v778, %v777
    %v884 = vpack.c.b16 %v780, %v779
    %v885 = vpack.c.b16 %v782, %v781
    %v886 = vpack.c.b16 %v784, %v783
    %v887 = vpack.c.b16 %v786, %v785
    %v888 = vpack.c.b16 %v788, %v787
    %v889 = vpack.c.b16 %v790, %v789
    %v890 = vpack.c.b16 %v792, %v791
    %v891 = vpack.c.b16 %v794, %v793
    %v892 = vpack.c.b16 %v796, %v795
    %v893 = vpack.c.b16 %v798, %v797
    %v894 = vpack.c.b16 %v800, %v799
    %v895 = vpack.c.b16 %v802, %v801
    %v896 = vpack.c.b16 %v804, %v803
    %v897 = vpack.c.b16 %v806, %v805
    %v898 = vpack.c.b16 %v808, %v807
    %v899 = vpack.c.b16 %v810, %v809
    %v900 = vpack.c.b16 %v812, %v811
    %v901 = vpack.c.b16 %v814, %v813
    %v902 = vpack.c.b16 %v816, %v815
    %v903 = vpack.c.b16 %v818, %v817
    %v904 = vpack.c.b16 %v820, %v819
    %v905 = vpack.c.b16 %v822, %v821
    %v906 = vpack.c.b16 %v824, %v823
    %v907 = vpack.c.b16 %v826, %v825
    %v908 = vpack.c.b16 %v828, %v827
    %v909 = vpack.c.b16 %v830, %v829
    %v910 = vpack.c.b16 %v832, %v831
    %v911 = vpack.c.b16 %v834, %v833
    %v912 = vpack.c.b16 %v836, %v835
    %v913 = vpack.c.b16 %v838, %v837
    %v914 = vpack.c.b16 %v840, %v839
    %v915 = vpack.c.b16 %v842, %v841
    %v916 = vpack.c.b16 %v844, %v843
    %v917 = vpack.c.b16 %v846, %v845
    %v918 = vpack.c.b16 %v848, %v847
    %v919 = vpack.c.b16 %v850, %v849
    %v920 = vpack.c.b16 %v852, %v851
    %v921 = vpack.c.b16 %v854, %v853
    %v922 = vpack.c.b16 %v856, %v855
    %v923 = vpack.c.b16 %v858, %v857
    %v924 = vpack.c.b16 %v860, %v859
    %989 = vmatprep.subr.bf16.mxu0 0
    %990 = vmatpush1.bf16.msra.mxu0 %v861
    %991 = vmatprep.subr.bf16.mxu0 0
    %992 = vmatpush1.bf16.msra.mxu0 %v862
    %993 = vmatprep.subr.bf16.mxu0 0
    %994 = vmatpush1.bf16.msra.mxu0 %v863
    %995 = vmatprep.subr.bf16.mxu0 0
    %996 = vmatpush1.bf16.msra.mxu0 %v864
    %997 = vmatprep.subr.bf16.mxu0 0
    %998 = vmatpush1.bf16.msra.mxu0 %v865
    %999 = vmatprep.subr.bf16.mxu0 0
    %1000 = vmatpush1.bf16.msra.mxu0 %v866
    %1001 = vmatprep.subr.bf16.mxu0 0
    %1002 = vmatpush1.bf16.msra.mxu0 %v867
    %1003 = vmatprep.subr.bf16.mxu0 0
    %1004 = vmatpush1.bf16.msra.mxu0 %v868
    %1005 = vmatprep.subr.bf16.mxu0 0
    %1006 = vmatpush1.bf16.msra.mxu0 %v869
    %1007 = vmatprep.subr.bf16.mxu0 0
    %1008 = vmatpush1.bf16.msra.mxu0 %v870
    %1009 = vmatprep.subr.bf16.mxu0 0
    %1010 = vmatpush1.bf16.msra.mxu0 %v871
    %1011 = vmatprep.subr.bf16.mxu0 0
    %1012 = vmatpush1.bf16.msra.mxu0 %v872
    %1013 = vmatprep.subr.bf16.mxu0 0
    %1014 = vmatpush1.bf16.msra.mxu0 %v873
    %1015 = vmatprep.subr.bf16.mxu0 0
    %1016 = vmatpush1.bf16.msra.mxu0 %v874
    %1017 = vmatprep.subr.bf16.mxu0 0
    %1018 = vmatpush1.bf16.msra.mxu0 %v875
    %1019 = vmatprep.subr.bf16.mxu0 0
    %1020 = vmatpush1.bf16.msra.mxu0 %v876
    %1021 = vmatprep.mubr.bf16.mxu0 %v477
    %1022 = vmatmul.mubr.bf16.gmra.mrb[0].mxu0 %v476
    %v1023 = vpop.f32.mrb[0].mxu0
    %v1024 = vadd.f32 %v604, %v1023
    %v1025 = vpop.f32.mrb[0].mxu0
    %v1026 = vpop.f32.mrb[0].mxu0
    %v1027 = vadd.f32 %v604, %v1026
    %v1028 = vpop.f32.mrb[0].mxu0
    %1029 = vmatprep.mubr.bf16.mxu0 %v485
    %1030 = vmatmul.mubr.bf16.gmra.mrb[0].mxu0 %v484
    %v1031 = vpop.f32.mrb[0].mxu0
    %v1032 = vadd.f32 %v604, %v1031
    %v1033 = vpop.f32.mrb[0].mxu0
    %v1034 = vpop.f32.mrb[0].mxu0
    %v1035 = vadd.f32 %v604, %v1034
    %v1036 = vpop.f32.mrb[0].mxu0
    %1037 = vmatprep.mubr.bf16.mxu0 %v493
    %1038 = vmatmul.mubr.bf16.gmra.mrb[0].mxu0 %v492
    %v1039 = vpop.f32.mrb[0].mxu0
    %v1040 = vadd.f32 %v604, %v1039
    %v1041 = vpop.f32.mrb[0].mxu0
    %v1042 = vpop.f32.mrb[0].mxu0
    %v1043 = vadd.f32 %v604, %v1042
    %v1044 = vpop.f32.mrb[0].mxu0
    %1045 = vmatprep.mubr.bf16.mxu0 %v501
    %1046 = vmatmul.mubr.bf16.gmra.mrb[0].mxu0 %v500
    %v1047 = vpop.f32.mrb[0].mxu0
    %v1048 = vadd.f32 %v604, %v1047
    %v1049 = vpop.f32.mrb[0].mxu0
    %v1050 = vpop.f32.mrb[0].mxu0
    %v1051 = vadd.f32 %v604, %v1050
    %v1052 = vpop.f32.mrb[0].mxu0
    %1053 = vmatprep.mubr.bf16.mxu0 %v509
    %1054 = vmatmul.mubr.bf16.gmra.mrb[0].mxu0 %v508
    %v1055 = vpop.f32.mrb[0].mxu0
    %v1056 = vadd.f32 %v604, %v1055
    %v1057 = vpop.f32.mrb[0].mxu0
    %v1058 = vpop.f32.mrb[0].mxu0
    %v1059 = vadd.f32 %v604, %v1058
    %v1060 = vpop.f32.mrb[0].mxu0
    %1061 = vmatprep.mubr.bf16.mxu0 %v517
    %1062 = vmatmul.mubr.bf16.gmra.mrb[0].mxu0 %v516
    %v1063 = vpop.f32.mrb[0].mxu0
    %v1064 = vadd.f32 %v604, %v1063
    %v1065 = vpop.f32.mrb[0].mxu0
    %v1066 = vpop.f32.mrb[0].mxu0
    %v1067 = vadd.f32 %v604, %v1066
    %v1068 = vpop.f32.mrb[0].mxu0
    %1069 = vmatprep.mubr.bf16.mxu0 %v525
    %1070 = vmatmul.mubr.bf16.gmra.mrb[0].mxu0 %v524
    %v1071 = vpop.f32.mrb[0].mxu0
    %v1072 = vadd.f32 %v604, %v1071
    %v1073 = vpop.f32.mrb[0].mxu0
    %v1074 = vpop.f32.mrb[0].mxu0
    %v1075 = vadd.f32 %v604, %v1074
    %v1076 = vpop.f32.mrb[0].mxu0
    %1077 = vmatprep.mubr.bf16.mxu0 %v533
    %1078 = vmatmul.mubr.bf16.gmra.mrb[0].mxu0 %v532
    %v1079 = vpop.f32.mrb[0].mxu0
    %v1080 = vadd.f32 %v604, %v1079
    %v1081 = vpop.f32.mrb[0].mxu0
    %v1082 = vpop.f32.mrb[0].mxu0
    %v1083 = vadd.f32 %v604, %v1082
    %v1084 = vpop.f32.mrb[0].mxu0
    %1085 = vmatprep.mubr.bf16.mxu0 %v541
    %1086 = vmatmul.mubr.bf16.gmra.mrb[0].mxu0 %v540
    %v1087 = vpop.f32.mrb[0].mxu0
    %v1088 = vadd.f32 %v604, %v1087
    %v1089 = vpop.f32.mrb[0].mxu0
    %v1090 = vpop.f32.mrb[0].mxu0
    %v1091 = vadd.f32 %v604, %v1090
    %v1092 = vpop.f32.mrb[0].mxu0
    %1093 = vmatprep.mubr.bf16.mxu0 %v549
    %1094 = vmatmul.mubr.bf16.gmra.mrb[0].mxu0 %v548
    %v1095 = vpop.f32.mrb[0].mxu0
    %v1096 = vadd.f32 %v604, %v1095
    %v1097 = vpop.f32.mrb[0].mxu0
    %v1098 = vpop.f32.mrb[0].mxu0
    %v1099 = vadd.f32 %v604, %v1098
    %v1100 = vpop.f32.mrb[0].mxu0
    %1101 = vmatprep.mubr.bf16.mxu0 %v557
    %1102 = vmatmul.mubr.bf16.gmra.mrb[0].mxu0 %v556
    %v1103 = vpop.f32.mrb[0].mxu0
    %v1104 = vadd.f32 %v604, %v1103
    %v1105 = vpop.f32.mrb[0].mxu0
    %v1106 = vpop.f32.mrb[0].mxu0
    %v1107 = vadd.f32 %v604, %v1106
    %v1108 = vpop.f32.mrb[0].mxu0
    %1109 = vmatprep.mubr.bf16.mxu0 %v565
    %1110 = vmatmul.mubr.bf16.gmra.mrb[0].mxu0 %v564
    %v1111 = vpop.f32.mrb[0].mxu0
    %v1112 = vadd.f32 %v604, %v1111
    %v1113 = vpop.f32.mrb[0].mxu0
    %v1114 = vpop.f32.mrb[0].mxu0
    %v1115 = vadd.f32 %v604, %v1114
    %v1116 = vpop.f32.mrb[0].mxu0
    %1117 = vmatprep.mubr.bf16.mxu0 %v573
    %1118 = vmatmul.mubr.bf16.gmra.mrb[0].mxu0 %v572
    %v1119 = vpop.f32.mrb[0].mxu0
    %v1120 = vadd.f32 %v604, %v1119
    %v1121 = vpop.f32.mrb[0].mxu0
    %v1122 = vpop.f32.mrb[0].mxu0
    %v1123 = vadd.f32 %v604, %v1122
    %v1124 = vpop.f32.mrb[0].mxu0
    %1125 = vmatprep.mubr.bf16.mxu0 %v581
    %1126 = vmatmul.mubr.bf16.gmra.mrb[0].mxu0 %v580
    %v1127 = vpop.f32.mrb[0].mxu0
    %v1128 = vadd.f32 %v604, %v1127
    %v1129 = vpop.f32.mrb[0].mxu0
    %v1130 = vpop.f32.mrb[0].mxu0
    %v1131 = vadd.f32 %v604, %v1130
    %v1132 = vpop.f32.mrb[0].mxu0
    %1133 = vmatprep.mubr.bf16.mxu0 %v589
    %1134 = vmatmul.mubr.bf16.gmra.mrb[0].mxu0 %v588
    %v1135 = vpop.f32.mrb[0].mxu0
    %v1136 = vadd.f32 %v604, %v1135
    %v1137 = vpop.f32.mrb[0].mxu0
    %v1138 = vpop.f32.mrb[0].mxu0
    %v1139 = vadd.f32 %v604, %v1138
    %v1140 = vpop.f32.mrb[0].mxu0
    %1141 = vmatprep.mubr.bf16.mxu0 %v597
    %1142 = vmatmul.mubr.bf16.gmra.mrb[0].mxu0 %v596
    %v1143 = vpop.f32.mrb[0].mxu0
    %v1144 = vadd.f32 %v604, %v1143
    %v1145 = vpop.f32.mrb[0].mxu0
    %v1146 = vpop.f32.mrb[0].mxu0
    %v1147 = vadd.f32 %v604, %v1146
    %v1148 = vpop.f32.mrb[0].mxu0
    %1149 = vdwg.mxu0
    %1150 = vmatprep.subr.bf16.mxu0 0
    %1151 = vmatpush1.bf16.msra.mxu0 %v877
    %1152 = vmatprep.subr.bf16.mxu0 0
    %1153 = vmatpush1.bf16.msra.mxu0 %v878
    %1154 = vmatprep.subr.bf16.mxu0 0
    %1155 = vmatpush1.bf16.msra.mxu0 %v879
    %1156 = vmatprep.subr.bf16.mxu0 0
    %1157 = vmatpush1.bf16.msra.mxu0 %v880
    %1158 = vmatprep.subr.bf16.mxu0 0
    %1159 = vmatpush1.bf16.msra.mxu0 %v881
    %1160 = vmatprep.subr.bf16.mxu0 0
    %1161 = vmatpush1.bf16.msra.mxu0 %v882
    %1162 = vmatprep.subr.bf16.mxu0 0
    %1163 = vmatpush1.bf16.msra.mxu0 %v883
    %1164 = vmatprep.subr.bf16.mxu0 0
    %1165 = vmatpush1.bf16.msra.mxu0 %v884
    %1166 = vmatprep.subr.bf16.mxu0 0
    %1167 = vmatpush1.bf16.msra.mxu0 %v885
    %1168 = vmatprep.subr.bf16.mxu0 0
    %1169 = vmatpush1.bf16.msra.mxu0 %v886
    %1170 = vmatprep.subr.bf16.mxu0 0
    %1171 = vmatpush1.bf16.msra.mxu0 %v887
    %1172 = vmatprep.subr.bf16.mxu0 0
    %1173 = vmatpush1.bf16.msra.mxu0 %v888
    %1174 = vmatprep.subr.bf16.mxu0 0
    %1175 = vmatpush1.bf16.msra.mxu0 %v889
    %1176 = vmatprep.subr.bf16.mxu0 0
    %1177 = vmatpush1.bf16.msra.mxu0 %v890
    %1178 = vmatprep.subr.bf16.mxu0 0
    %1179 = vmatpush1.bf16.msra.mxu0 %v891
    %1180 = vmatprep.subr.bf16.mxu0 0
    %1181 = vmatpush1.bf16.msra.mxu0 %v892
    %1182 = vmatprep.mubr.bf16.mxu0 %v479
    %1183 = vmatmul.mubr.bf16.gmra.mrb[0].mxu0 %v478
    %v1184 = vpop.f32.mrb[0].mxu0
    %v1185 = vadd.f32 %v1024, %v1184
    %v1186 = vpop.f32.mrb[0].mxu0
    %v1187 = vpop.f32.mrb[0].mxu0
    %v1188 = vadd.f32 %v1027, %v1187
    %v1189 = vpop.f32.mrb[0].mxu0
    %1190 = vmatprep.mubr.bf16.mxu0 %v487
    %1191 = vmatmul.mubr.bf16.gmra.mrb[0].mxu0 %v486
    %v1192 = vpop.f32.mrb[0].mxu0
    %v1193 = vadd.f32 %v1032, %v1192
    %v1194 = vpop.f32.mrb[0].mxu0
    %v1195 = vpop.f32.mrb[0].mxu0
    %v1196 = vadd.f32 %v1035, %v1195
    %v1197 = vpop.f32.mrb[0].mxu0
    %1198 = vmatprep.mubr.bf16.mxu0 %v495
    %1199 = vmatmul.mubr.bf16.gmra.mrb[0].mxu0 %v494
    %v1200 = vpop.f32.mrb[0].mxu0
    %v1201 = vadd.f32 %v1040, %v1200
    %v1202 = vpop.f32.mrb[0].mxu0
    %v1203 = vpop.f32.mrb[0].mxu0
    %v1204 = vadd.f32 %v1043, %v1203
    %v1205 = vpop.f32.mrb[0].mxu0
    %1206 = vmatprep.mubr.bf16.mxu0 %v503
    %1207 = vmatmul.mubr.bf16.gmra.mrb[0].mxu0 %v502
    %v1208 = vpop.f32.mrb[0].mxu0
    %v1209 = vadd.f32 %v1048, %v1208
    %v1210 = vpop.f32.mrb[0].mxu0
    %v1211 = vpop.f32.mrb[0].mxu0
    %v1212 = vadd.f32 %v1051, %v1211
    %v1213 = vpop.f32.mrb[0].mxu0
    %1214 = vmatprep.mubr.bf16.mxu0 %v511
    %1215 = vmatmul.mubr.bf16.gmra.mrb[0].mxu0 %v510
    %v1216 = vpop.f32.mrb[0].mxu0
    %v1217 = vadd.f32 %v1056, %v1216
    %v1218 = vpop.f32.mrb[0].mxu0
    %v1219 = vpop.f32.mrb[0].mxu0
    %v1220 = vadd.f32 %v1059, %v1219
    %v1221 = vpop.f32.mrb[0].mxu0
    %1222 = vmatprep.mubr.bf16.mxu0 %v519
    %1223 = vmatmul.mubr.bf16.gmra.mrb[0].mxu0 %v518
    %v1224 = vpop.f32.mrb[0].mxu0
    %v1225 = vadd.f32 %v1064, %v1224
    %v1226 = vpop.f32.mrb[0].mxu0
    %v1227 = vpop.f32.mrb[0].mxu0
    %v1228 = vadd.f32 %v1067, %v1227
    %v1229 = vpop.f32.mrb[0].mxu0
    %1230 = vmatprep.mubr.bf16.mxu0 %v527
    %1231 = vmatmul.mubr.bf16.gmra.mrb[0].mxu0 %v526
    %v1232 = vpop.f32.mrb[0].mxu0
    %v1233 = vadd.f32 %v1072, %v1232
    %v1234 = vpop.f32.mrb[0].mxu0
    %v1235 = vpop.f32.mrb[0].mxu0
    %v1236 = vadd.f32 %v1075, %v1235
    %v1237 = vpop.f32.mrb[0].mxu0
    %1238 = vmatprep.mubr.bf16.mxu0 %v535
    %1239 = vmatmul.mubr.bf16.gmra.mrb[0].mxu0 %v534
    %v1240 = vpop.f32.mrb[0].mxu0
    %v1241 = vadd.f32 %v1080, %v1240
    %v1242 = vpop.f32.mrb[0].mxu0
    %v1243 = vpop.f32.mrb[0].mxu0
    %v1244 = vadd.f32 %v1083, %v1243
    %v1245 = vpop.f32.mrb[0].mxu0
    %1246 = vmatprep.mubr.bf16.mxu0 %v543
    %1247 = vmatmul.mubr.bf16.gmra.mrb[0].mxu0 %v542
    %v1248 = vpop.f32.mrb[0].mxu0
    %v1249 = vadd.f32 %v1088, %v1248
    %v1250 = vpop.f32.mrb[0].mxu0
    %v1251 = vpop.f32.mrb[0].mxu0
    %v1252 = vadd.f32 %v1091, %v1251
    %v1253 = vpop.f32.mrb[0].mxu0
    %1254 = vmatprep.mubr.bf16.mxu0 %v551
    %1255 = vmatmul.mubr.bf16.gmra.mrb[0].mxu0 %v550
    %v1256 = vpop.f32.mrb[0].mxu0
    %v1257 = vadd.f32 %v1096, %v1256
    %v1258 = vpop.f32.mrb[0].mxu0
    %v1259 = vpop.f32.mrb[0].mxu0
    %v1260 = vadd.f32 %v1099, %v1259
    %v1261 = vpop.f32.mrb[0].mxu0
    %1262 = vmatprep.mubr.bf16.mxu0 %v559
    %1263 = vmatmul.mubr.bf16.gmra.mrb[0].mxu0 %v558
    %v1264 = vpop.f32.mrb[0].mxu0
    %v1265 = vadd.f32 %v1104, %v1264
    %v1266 = vpop.f32.mrb[0].mxu0
    %v1267 = vpop.f32.mrb[0].mxu0
    %v1268 = vadd.f32 %v1107, %v1267
    %v1269 = vpop.f32.mrb[0].mxu0
    %1270 = vmatprep.mubr.bf16.mxu0 %v567
    %1271 = vmatmul.mubr.bf16.gmra.mrb[0].mxu0 %v566
    %v1272 = vpop.f32.mrb[0].mxu0
    %v1273 = vadd.f32 %v1112, %v1272
    %v1274 = vpop.f32.mrb[0].mxu0
    %v1275 = vpop.f32.mrb[0].mxu0
    %v1276 = vadd.f32 %v1115, %v1275
    %v1277 = vpop.f32.mrb[0].mxu0
    %1278 = vmatprep.mubr.bf16.mxu0 %v575
    %1279 = vmatmul.mubr.bf16.gmra.mrb[0].mxu0 %v574
    %v1280 = vpop.f32.mrb[0].mxu0
    %v1281 = vadd.f32 %v1120, %v1280
    %v1282 = vpop.f32.mrb[0].mxu0
    %v1283 = vpop.f32.mrb[0].mxu0
    %v1284 = vadd.f32 %v1123, %v1283
    %v1285 = vpop.f32.mrb[0].mxu0
    %1286 = vmatprep.mubr.bf16.mxu0 %v583
    %1287 = vmatmul.mubr.bf16.gmra.mrb[0].mxu0 %v582
    %v1288 = vpop.f32.mrb[0].mxu0
    %v1289 = vadd.f32 %v1128, %v1288
    %v1290 = vpop.f32.mrb[0].mxu0
    %v1291 = vpop.f32.mrb[0].mxu0
    %v1292 = vadd.f32 %v1131, %v1291
    %v1293 = vpop.f32.mrb[0].mxu0
    %1294 = vmatprep.mubr.bf16.mxu0 %v591
    %1295 = vmatmul.mubr.bf16.gmra.mrb[0].mxu0 %v590
    %v1296 = vpop.f32.mrb[0].mxu0
    %v1297 = vadd.f32 %v1136, %v1296
    %v1298 = vpop.f32.mrb[0].mxu0
    %v1299 = vpop.f32.mrb[0].mxu0
    %v1300 = vadd.f32 %v1139, %v1299
    %v1301 = vpop.f32.mrb[0].mxu0
    %1302 = vmatprep.mubr.bf16.mxu0 %v599
    %1303 = vmatmul.mubr.bf16.gmra.mrb[0].mxu0 %v598
    %v1304 = vpop.f32.mrb[0].mxu0
    %v1305 = vadd.f32 %v1144, %v1304
    %v1306 = vpop.f32.mrb[0].mxu0
    %v1307 = vpop.f32.mrb[0].mxu0
    %v1308 = vadd.f32 %v1147, %v1307
    %v1309 = vpop.f32.mrb[0].mxu0
    %1310 = vdwg.mxu0
    %1311 = vmatprep.subr.bf16.mxu0 0
    %1312 = vmatpush1.bf16.msra.mxu0 %v893
    %1313 = vmatprep.subr.bf16.mxu0 0
    %1314 = vmatpush1.bf16.msra.mxu0 %v894
    %1315 = vmatprep.subr.bf16.mxu0 0
    %1316 = vmatpush1.bf16.msra.mxu0 %v895
    %1317 = vmatprep.subr.bf16.mxu0 0
    %1318 = vmatpush1.bf16.msra.mxu0 %v896
    %1319 = vmatprep.subr.bf16.mxu0 0
    %1320 = vmatpush1.bf16.msra.mxu0 %v897
    %1321 = vmatprep.subr.bf16.mxu0 0
    %1322 = vmatpush1.bf16.msra.mxu0 %v898
    %1323 = vmatprep.subr.bf16.mxu0 0
    %1324 = vmatpush1.bf16.msra.mxu0 %v899
    %1325 = vmatprep.subr.bf16.mxu0 0
    %1326 = vmatpush1.bf16.msra.mxu0 %v900
    %1327 = vmatprep.subr.bf16.mxu0 0
    %1328 = vmatpush1.bf16.msra.mxu0 %v901
    %1329 = vmatprep.subr.bf16.mxu0 0
    %1330 = vmatpush1.bf16.msra.mxu0 %v902
    %1331 = vmatprep.subr.bf16.mxu0 0
    %1332 = vmatpush1.bf16.msra.mxu0 %v903
    %1333 = vmatprep.subr.bf16.mxu0 0
    %1334 = vmatpush1.bf16.msra.mxu0 %v904
    %1335 = vmatprep.subr.bf16.mxu0 0
    %1336 = vmatpush1.bf16.msra.mxu0 %v905
    %1337 = vmatprep.subr.bf16.mxu0 0
    %1338 = vmatpush1.bf16.msra.mxu0 %v906
    %1339 = vmatprep.subr.bf16.mxu0 0
    %1340 = vmatpush1.bf16.msra.mxu0 %v907
    %1341 = vmatprep.subr.bf16.mxu0 0
    %1342 = vmatpush1.bf16.msra.mxu0 %v908
    %1343 = vmatprep.mubr.bf16.mxu0 %v481
    %1344 = vmatmul.mubr.bf16.gmra.mrb[0].mxu0 %v480
    %v1345 = vpop.f32.mrb[0].mxu0
    %v1346 = vadd.f32 %v1185, %v1345
    %v1347 = vpop.f32.mrb[0].mxu0
    %v1348 = vpop.f32.mrb[0].mxu0
    %v1349 = vadd.f32 %v1188, %v1348
    %v1350 = vpop.f32.mrb[0].mxu0
    %1351 = vmatprep.mubr.bf16.mxu0 %v489
    %1352 = vmatmul.mubr.bf16.gmra.mrb[0].mxu0 %v488
    %v1353 = vpop.f32.mrb[0].mxu0
    %v1354 = vadd.f32 %v1193, %v1353
    %v1355 = vpop.f32.mrb[0].mxu0
    %v1356 = vpop.f32.mrb[0].mxu0
    %v1357 = vadd.f32 %v1196, %v1356
    %v1358 = vpop.f32.mrb[0].mxu0
    %1359 = vmatprep.mubr.bf16.mxu0 %v497
    %1360 = vmatmul.mubr.bf16.gmra.mrb[0].mxu0 %v496
    %v1361 = vpop.f32.mrb[0].mxu0
    %v1362 = vadd.f32 %v1201, %v1361
    %v1363 = vpop.f32.mrb[0].mxu0
    %v1364 = vpop.f32.mrb[0].mxu0
    %v1365 = vadd.f32 %v1204, %v1364
    %v1366 = vpop.f32.mrb[0].mxu0
    %1367 = vmatprep.mubr.bf16.mxu0 %v505
    %1368 = vmatmul.mubr.bf16.gmra.mrb[0].mxu0 %v504
    %v1369 = vpop.f32.mrb[0].mxu0
    %v1370 = vadd.f32 %v1209, %v1369
    %v1371 = vpop.f32.mrb[0].mxu0
    %v1372 = vpop.f32.mrb[0].mxu0
    %v1373 = vadd.f32 %v1212, %v1372
    %v1374 = vpop.f32.mrb[0].mxu0
    %1375 = vmatprep.mubr.bf16.mxu0 %v513
    %1376 = vmatmul.mubr.bf16.gmra.mrb[0].mxu0 %v512
    %v1377 = vpop.f32.mrb[0].mxu0
    %v1378 = vadd.f32 %v1217, %v1377
    %v1379 = vpop.f32.mrb[0].mxu0
    %v1380 = vpop.f32.mrb[0].mxu0
    %v1381 = vadd.f32 %v1220, %v1380
    %v1382 = vpop.f32.mrb[0].mxu0
    %1383 = vmatprep.mubr.bf16.mxu0 %v521
    %1384 = vmatmul.mubr.bf16.gmra.mrb[0].mxu0 %v520
    %v1385 = vpop.f32.mrb[0].mxu0
    %v1386 = vadd.f32 %v1225, %v1385
    %v1387 = vpop.f32.mrb[0].mxu0
    %v1388 = vpop.f32.mrb[0].mxu0
    %v1389 = vadd.f32 %v1228, %v1388
    %v1390 = vpop.f32.mrb[0].mxu0
    %1391 = vmatprep.mubr.bf16.mxu0 %v529
    %1392 = vmatmul.mubr.bf16.gmra.mrb[0].mxu0 %v528
    %v1393 = vpop.f32.mrb[0].mxu0
    %v1394 = vadd.f32 %v1233, %v1393
    %v1395 = vpop.f32.mrb[0].mxu0
    %v1396 = vpop.f32.mrb[0].mxu0
    %v1397 = vadd.f32 %v1236, %v1396
    %v1398 = vpop.f32.mrb[0].mxu0
    %1399 = vmatprep.mubr.bf16.mxu0 %v537
    %1400 = vmatmul.mubr.bf16.gmra.mrb[0].mxu0 %v536
    %v1401 = vpop.f32.mrb[0].mxu0
    %v1402 = vadd.f32 %v1241, %v1401
    %v1403 = vpop.f32.mrb[0].mxu0
    %v1404 = vpop.f32.mrb[0].mxu0
    %v1405 = vadd.f32 %v1244, %v1404
    %v1406 = vpop.f32.mrb[0].mxu0
    %1407 = vmatprep.mubr.bf16.mxu0 %v545
    %1408 = vmatmul.mubr.bf16.gmra.mrb[0].mxu0 %v544
    %v1409 = vpop.f32.mrb[0].mxu0
    %v1410 = vadd.f32 %v1249, %v1409
    %v1411 = vpop.f32.mrb[0].mxu0
    %v1412 = vpop.f32.mrb[0].mxu0
    %v1413 = vadd.f32 %v1252, %v1412
    %v1414 = vpop.f32.mrb[0].mxu0
    %1415 = vmatprep.mubr.bf16.mxu0 %v553
    %1416 = vmatmul.mubr.bf16.gmra.mrb[0].mxu0 %v552
    %v1417 = vpop.f32.mrb[0].mxu0
    %v1418 = vadd.f32 %v1257, %v1417
    %v1419 = vpop.f32.mrb[0].mxu0
    %v1420 = vpop.f32.mrb[0].mxu0
    %v1421 = vadd.f32 %v1260, %v1420
    %v1422 = vpop.f32.mrb[0].mxu0
    %1423 = vmatprep.mubr.bf16.mxu0 %v561
    %1424 = vmatmul.mubr.bf16.gmra.mrb[0].mxu0 %v560
    %v1425 = vpop.f32.mrb[0].mxu0
    %v1426 = vadd.f32 %v1265, %v1425
    %v1427 = vpop.f32.mrb[0].mxu0
    %v1428 = vpop.f32.mrb[0].mxu0
    %v1429 = vadd.f32 %v1268, %v1428
    %v1430 = vpop.f32.mrb[0].mxu0
    %1431 = vmatprep.mubr.bf16.mxu0 %v569
    %1432 = vmatmul.mubr.bf16.gmra.mrb[0].mxu0 %v568
    %v1433 = vpop.f32.mrb[0].mxu0
    %v1434 = vadd.f32 %v1273, %v1433
    %v1435 = vpop.f32.mrb[0].mxu0
    %v1436 = vpop.f32.mrb[0].mxu0
    %v1437 = vadd.f32 %v1276, %v1436
    %v1438 = vpop.f32.mrb[0].mxu0
    %1439 = vmatprep.mubr.bf16.mxu0 %v577
    %1440 = vmatmul.mubr.bf16.gmra.mrb[0].mxu0 %v576
    %v1441 = vpop.f32.mrb[0].mxu0
    %v1442 = vadd.f32 %v1281, %v1441
    %v1443 = vpop.f32.mrb[0].mxu0
    %v1444 = vpop.f32.mrb[0].mxu0
    %v1445 = vadd.f32 %v1284, %v1444
    %v1446 = vpop.f32.mrb[0].mxu0
    %1447 = vmatprep.mubr.bf16.mxu0 %v585
    %1448 = vmatmul.mubr.bf16.gmra.mrb[0].mxu0 %v584
    %v1449 = vpop.f32.mrb[0].mxu0
    %v1450 = vadd.f32 %v1289, %v1449
    %v1451 = vpop.f32.mrb[0].mxu0
    %v1452 = vpop.f32.mrb[0].mxu0
    %v1453 = vadd.f32 %v1292, %v1452
    %v1454 = vpop.f32.mrb[0].mxu0
    %1455 = vmatprep.mubr.bf16.mxu0 %v593
    %1456 = vmatmul.mubr.bf16.gmra.mrb[0].mxu0 %v592
    %v1457 = vpop.f32.mrb[0].mxu0
    %v1458 = vadd.f32 %v1297, %v1457
    %v1459 = vpop.f32.mrb[0].mxu0
    %v1460 = vpop.f32.mrb[0].mxu0
    %v1461 = vadd.f32 %v1300, %v1460
    %v1462 = vpop.f32.mrb[0].mxu0
    %1463 = vmatprep.mubr.bf16.mxu0 %v601
    %1464 = vmatmul.mubr.bf16.gmra.mrb[0].mxu0 %v600
    %v1465 = vpop.f32.mrb[0].mxu0
    %v1466 = vadd.f32 %v1305, %v1465
    %v1467 = vpop.f32.mrb[0].mxu0
    %v1468 = vpop.f32.mrb[0].mxu0
    %v1469 = vadd.f32 %v1308, %v1468
    %v1470 = vpop.f32.mrb[0].mxu0
    %1471 = vdwg.mxu0
    %1472 = vmatprep.subr.bf16.mxu0 0
    %1473 = vmatpush1.bf16.msra.mxu0 %v909
    %1474 = vmatprep.subr.bf16.mxu0 0
    %1475 = vmatpush1.bf16.msra.mxu0 %v910
    %1476 = vmatprep.subr.bf16.mxu0 0
    %1477 = vmatpush1.bf16.msra.mxu0 %v911
    %1478 = vmatprep.subr.bf16.mxu0 0
    %1479 = vmatpush1.bf16.msra.mxu0 %v912
    %1480 = vmatprep.subr.bf16.mxu0 0
    %1481 = vmatpush1.bf16.msra.mxu0 %v913
    %1482 = vmatprep.subr.bf16.mxu0 0
    %1483 = vmatpush1.bf16.msra.mxu0 %v914
    %1484 = vmatprep.subr.bf16.mxu0 0
    %1485 = vmatpush1.bf16.msra.mxu0 %v915
    %1486 = vmatprep.subr.bf16.mxu0 0
    %1487 = vmatpush1.bf16.msra.mxu0 %v916
    %1488 = vmatprep.subr.bf16.mxu0 0
    %1489 = vmatpush1.bf16.msra.mxu0 %v917
    %1490 = vmatprep.subr.bf16.mxu0 0
    %1491 = vmatpush1.bf16.msra.mxu0 %v918
    %1492 = vmatprep.subr.bf16.mxu0 0
    %1493 = vmatpush1.bf16.msra.mxu0 %v919
    %1494 = vmatprep.subr.bf16.mxu0 0
    %1495 = vmatpush1.bf16.msra.mxu0 %v920
    %1496 = vmatprep.subr.bf16.mxu0 0
    %1497 = vmatpush1.bf16.msra.mxu0 %v921
    %1498 = vmatprep.subr.bf16.mxu0 0
    %1499 = vmatpush1.bf16.msra.mxu0 %v922
    %1500 = vmatprep.subr.bf16.mxu0 0
    %1501 = vmatpush1.bf16.msra.mxu0 %v923
    %1502 = vmatprep.subr.bf16.mxu0 0
    %1503 = vmatpush1.bf16.msra.mxu0 %v924
    %1504 = vmatprep.mubr.bf16.mxu0 %v483
    %1505 = vmatmul.mubr.bf16.gmra.mrb[0].mxu0 %v482
    %v1506 = vpop.f32.mrb[0].mxu0
    %v1507 = vadd.f32 %v1346, %v1506
    %v1508 = vpop.f32.mrb[0].mxu0
    %v1509 = vpop.f32.mrb[0].mxu0
    %v1510 = vadd.f32 %v1349, %v1509
    %v1511 = vpop.f32.mrb[0].mxu0
    %1512 = vmatprep.mubr.bf16.mxu0 %v491
    %1513 = vmatmul.mubr.bf16.gmra.mrb[0].mxu0 %v490
    %v1514 = vpop.f32.mrb[0].mxu0
    %v1515 = vadd.f32 %v1354, %v1514
    %v1516 = vpop.f32.mrb[0].mxu0
    %v1517 = vpop.f32.mrb[0].mxu0
    %v1518 = vadd.f32 %v1357, %v1517
    %v1519 = vpop.f32.mrb[0].mxu0
    %1520 = vmatprep.mubr.bf16.mxu0 %v499
    %1521 = vmatmul.mubr.bf16.gmra.mrb[0].mxu0 %v498
    %v1522 = vpop.f32.mrb[0].mxu0
    %v1523 = vadd.f32 %v1362, %v1522
    %v1524 = vpop.f32.mrb[0].mxu0
    %v1525 = vpop.f32.mrb[0].mxu0
    %v1526 = vadd.f32 %v1365, %v1525
    %v1527 = vpop.f32.mrb[0].mxu0
    %1528 = vmatprep.mubr.bf16.mxu0 %v507
    %1529 = vmatmul.mubr.bf16.gmra.mrb[0].mxu0 %v506
    %v1530 = vpop.f32.mrb[0].mxu0
    %v1531 = vadd.f32 %v1370, %v1530
    %v1532 = vpop.f32.mrb[0].mxu0
    %v1533 = vpop.f32.mrb[0].mxu0
    %v1534 = vadd.f32 %v1373, %v1533
    %v1535 = vpop.f32.mrb[0].mxu0
    %1536 = vmatprep.mubr.bf16.mxu0 %v515
    %1537 = vmatmul.mubr.bf16.gmra.mrb[0].mxu0 %v514
    %v1538 = vpop.f32.mrb[0].mxu0
    %v1539 = vadd.f32 %v1378, %v1538
    %v1540 = vpop.f32.mrb[0].mxu0
    %v1541 = vpop.f32.mrb[0].mxu0
    %v1542 = vadd.f32 %v1381, %v1541
    %v1543 = vpop.f32.mrb[0].mxu0
    %1544 = vmatprep.mubr.bf16.mxu0 %v523
    %1545 = vmatmul.mubr.bf16.gmra.mrb[0].mxu0 %v522
    %v1546 = vpop.f32.mrb[0].mxu0
    %v1547 = vadd.f32 %v1386, %v1546
    %v1548 = vpop.f32.mrb[0].mxu0
    %v1549 = vpop.f32.mrb[0].mxu0
    %v1550 = vadd.f32 %v1389, %v1549
    %v1551 = vpop.f32.mrb[0].mxu0
    %1552 = vmatprep.mubr.bf16.mxu0 %v531
    %1553 = vmatmul.mubr.bf16.gmra.mrb[0].mxu0 %v530
    %v1554 = vpop.f32.mrb[0].mxu0
    %v1555 = vadd.f32 %v1394, %v1554
    %v1556 = vpop.f32.mrb[0].mxu0
    %v1557 = vpop.f32.mrb[0].mxu0
    %v1558 = vadd.f32 %v1397, %v1557
    %v1559 = vpop.f32.mrb[0].mxu0
    %1560 = vmatprep.mubr.bf16.mxu0 %v539
    %1561 = vmatmul.mubr.bf16.gmra.mrb[0].mxu0 %v538
    %v1562 = vpop.f32.mrb[0].mxu0
    %v1563 = vadd.f32 %v1402, %v1562
    %v1564 = vpop.f32.mrb[0].mxu0
    %v1565 = vpop.f32.mrb[0].mxu0
    %v1566 = vadd.f32 %v1405, %v1565
    %v1567 = vpop.f32.mrb[0].mxu0
    %1568 = vmatprep.mubr.bf16.mxu0 %v547
    %1569 = vmatmul.mubr.bf16.gmra.mrb[0].mxu0 %v546
    %v1570 = vpop.f32.mrb[0].mxu0
    %v1571 = vadd.f32 %v1410, %v1570
    %v1572 = vpop.f32.mrb[0].mxu0
    %v1573 = vpop.f32.mrb[0].mxu0
    %v1574 = vadd.f32 %v1413, %v1573
    %v1575 = vpop.f32.mrb[0].mxu0
    %1576 = vmatprep.mubr.bf16.mxu0 %v555
    %1577 = vmatmul.mubr.bf16.gmra.mrb[0].mxu0 %v554
    %v1578 = vpop.f32.mrb[0].mxu0
    %v1579 = vadd.f32 %v1418, %v1578
    %v1580 = vpop.f32.mrb[0].mxu0
    %v1581 = vpop.f32.mrb[0].mxu0
    %v1582 = vadd.f32 %v1421, %v1581
    %v1583 = vpop.f32.mrb[0].mxu0
    %1584 = vmatprep.mubr.bf16.mxu0 %v563
    %1585 = vmatmul.mubr.bf16.gmra.mrb[0].mxu0 %v562
    %v1586 = vpop.f32.mrb[0].mxu0
    %v1587 = vadd.f32 %v1426, %v1586
    %v1588 = vpop.f32.mrb[0].mxu0
    %v1589 = vpop.f32.mrb[0].mxu0
    %v1590 = vadd.f32 %v1429, %v1589
    %v1591 = vpop.f32.mrb[0].mxu0
    %1592 = vmatprep.mubr.bf16.mxu0 %v571
    %1593 = vmatmul.mubr.bf16.gmra.mrb[0].mxu0 %v570
    %v1594 = vpop.f32.mrb[0].mxu0
    %v1595 = vadd.f32 %v1434, %v1594
    %v1596 = vpop.f32.mrb[0].mxu0
    %v1597 = vpop.f32.mrb[0].mxu0
    %v1598 = vadd.f32 %v1437, %v1597
    %v1599 = vpop.f32.mrb[0].mxu0
    %1600 = vmatprep.mubr.bf16.mxu0 %v579
    %1601 = vmatmul.mubr.bf16.gmra.mrb[0].mxu0 %v578
    %v1602 = vpop.f32.mrb[0].mxu0
    %v1603 = vadd.f32 %v1442, %v1602
    %v1604 = vpop.f32.mrb[0].mxu0
    %v1605 = vpop.f32.mrb[0].mxu0
    %v1606 = vadd.f32 %v1445, %v1605
    %v1607 = vpop.f32.mrb[0].mxu0
    %1608 = vmatprep.mubr.bf16.mxu0 %v587
    %1609 = vmatmul.mubr.bf16.gmra.mrb[0].mxu0 %v586
    %v1610 = vpop.f32.mrb[0].mxu0
    %v1611 = vadd.f32 %v1450, %v1610
    %v1612 = vpop.f32.mrb[0].mxu0
    %v1613 = vpop.f32.mrb[0].mxu0
    %v1614 = vadd.f32 %v1453, %v1613
    %v1615 = vpop.f32.mrb[0].mxu0
    %1616 = vmatprep.mubr.bf16.mxu0 %v595
    %1617 = vmatmul.mubr.bf16.gmra.mrb[0].mxu0 %v594
    %v1618 = vpop.f32.mrb[0].mxu0
    %v1619 = vadd.f32 %v1458, %v1618
    %v1620 = vpop.f32.mrb[0].mxu0
    %v1621 = vpop.f32.mrb[0].mxu0
    %v1622 = vadd.f32 %v1461, %v1621
    %v1623 = vpop.f32.mrb[0].mxu0
    %1624 = vmatprep.mubr.bf16.mxu0 %v603
    %1625 = vmatmul.mubr.bf16.gmra.mrb[0].mxu0 %v602
    %v1626 = vpop.f32.mrb[0].mxu0
    %v1627 = vadd.f32 %v1466, %v1626
    %v1628 = vpop.f32.mrb[0].mxu0
    %v1629 = vpop.f32.mrb[0].mxu0
    %v1630 = vadd.f32 %v1469, %v1629
    %v1631 = vpop.f32.mrb[0].mxu0
    %1632 = vdwg.mxu0
    %v1633 = vmax.f32 %v1507, 0.0
    %v1634 = vmax.f32 %v1510, 0.0
    %v1635 = vmax.f32 %v1515, 0.0
    %v1636 = vmax.f32 %v1518, 0.0
    %v1637 = vmax.f32 %v1523, 0.0
    %v1638 = vmax.f32 %v1526, 0.0
    %v1639 = vmax.f32 %v1531, 0.0
    %v1640 = vmax.f32 %v1534, 0.0
    %v1641 = vmax.f32 %v1539, 0.0
    %v1642 = vmax.f32 %v1542, 0.0
    %v1643 = vmax.f32 %v1547, 0.0
    %v1644 = vmax.f32 %v1550, 0.0
    %v1645 = vmax.f32 %v1555, 0.0
    %v1646 = vmax.f32 %v1558, 0.0
    %v1647 = vmax.f32 %v1563, 0.0
    %v1648 = vmax.f32 %v1566, 0.0
    %v1649 = vmax.f32 %v1571, 0.0
    %v1650 = vmax.f32 %v1574, 0.0
    %v1651 = vmax.f32 %v1579, 0.0
    %v1652 = vmax.f32 %v1582, 0.0
    %v1653 = vmax.f32 %v1587, 0.0
    %v1654 = vmax.f32 %v1590, 0.0
    %v1655 = vmax.f32 %v1595, 0.0
    %v1656 = vmax.f32 %v1598, 0.0
    %v1657 = vmax.f32 %v1603, 0.0
    %v1658 = vmax.f32 %v1606, 0.0
    %v1659 = vmax.f32 %v1611, 0.0
    %v1660 = vmax.f32 %v1614, 0.0
    %v1661 = vmax.f32 %v1619, 0.0
    %v1662 = vmax.f32 %v1622, 0.0
    %v1663 = vmax.f32 %v1627, 0.0
    %v1664 = vmax.f32 %v1630, 0.0
    %v1665 = vld [vmem:[%s3] sm:$0xf]
    %v1666 = vld [vmem:[%s3 + $0x4] sm:$0xf]
    %v1667 = vld [vmem:[%s3 + $0x8] sm:$0xf]
    %v1668 = vld [vmem:[%s3 + $0xc] sm:$0xf]
    %v1669 = vld [vmem:[%s3 + $0x10] sm:$0xf]
    %v1670 = vld [vmem:[%s3 + $0x14] sm:$0xf]
    %v1671 = vld [vmem:[%s3 + $0x18] sm:$0xf]
    %v1672 = vld [vmem:[%s3 + $0x1c] sm:$0xf]
    %v1673 = vld [vmem:[%s3 + $0x20] sm:$0xf]
    %v1674 = vld [vmem:[%s3 + $0x24] sm:$0xf]
    %v1675 = vld [vmem:[%s3 + $0x28] sm:$0xf]
    %v1676 = vld [vmem:[%s3 + $0x2c] sm:$0xf]
    %v1677 = vld [vmem:[%s3 + $0x30] sm:$0xf]
    %v1678 = vld [vmem:[%s3 + $0x34] sm:$0xf]
    %v1679 = vld [vmem:[%s3 + $0x38] sm:$0xf]
    %v1680 = vld [vmem:[%s3 + $0x3c] sm:$0xf]
    %v1681 = vpack.c.bf16 %v1634, %v1633
    %v1682 = vpack.c.bf16 %v1636, %v1635
    %v1683 = vpack.c.bf16 %v1638, %v1637
    %v1684 = vpack.c.bf16 %v1640, %v1639
    %v1685 = vpack.c.bf16 %v1642, %v1641
    %v1686 = vpack.c.bf16 %v1644, %v1643
    %v1687 = vpack.c.bf16 %v1646, %v1645
    %v1688 = vpack.c.bf16 %v1648, %v1647
    %v1689 = vpack.c.bf16 %v1650, %v1649
    %v1690 = vpack.c.bf16 %v1652, %v1651
    %v1691 = vpack.c.bf16 %v1654, %v1653
    %v1692 = vpack.c.bf16 %v1656, %v1655
    %v1693 = vpack.c.bf16 %v1658, %v1657
    %v1694 = vpack.c.bf16 %v1660, %v1659
    %v1695 = vpack.c.bf16 %v1662, %v1661
    %v1696 = vpack.c.bf16 %v1664, %v1663
    %v1697 = vld [vmem:[%s8 + $0x1] ss:$0 sm:$0xff]
    %v1714 = vunpack.c.l.b16 %v1665
    %v1715 = vunpack.c.l.b16 %v1666
    %v1716 = vunpack.c.l.b16 %v1667
    %v1717 = vunpack.c.l.b16 %v1668
    %v1718 = vunpack.c.l.b16 %v1669
    %v1719 = vunpack.c.l.b16 %v1670
    %v1720 = vunpack.c.l.b16 %v1671
    %v1721 = vunpack.c.l.b16 %v1672
    %v1722 = vunpack.c.l.b16 %v1673
    %v1723 = vunpack.c.l.b16 %v1674
    %v1724 = vunpack.c.l.b16 %v1675
    %v1725 = vunpack.c.l.b16 %v1676
    %v1726 = vunpack.c.l.b16 %v1677
    %v1727 = vunpack.c.l.b16 %v1678
    %v1728 = vunpack.c.l.b16 %v1679
    %v1729 = vunpack.c.l.b16 %v1680
    %v1730 = vpack.c.b16 %v1715, %v1714
    %v1731 = vpack.c.b16 %v1717, %v1716
    %v1732 = vpack.c.b16 %v1719, %v1718
    %v1733 = vpack.c.b16 %v1721, %v1720
    %v1734 = vpack.c.b16 %v1723, %v1722
    %v1735 = vpack.c.b16 %v1725, %v1724
    %v1736 = vpack.c.b16 %v1727, %v1726
    %v1737 = vpack.c.b16 %v1729, %v1728
    %1746 = vmatprep.subr.bf16.mxu0 0
    %1747 = vmatpush1.bf16.msra.mxu0 %v1730
    %1748 = vmatprep.subr.bf16.mxu0 0
    %1749 = vmatpush1.bf16.msra.mxu0 %v1731
    %1750 = vmatprep.subr.bf16.mxu0 0
    %1751 = vmatpush1.bf16.msra.mxu0 %v1732
    %1752 = vmatprep.subr.bf16.mxu0 0
    %1753 = vmatpush1.bf16.msra.mxu0 %v1733
    %1754 = vmatprep.subr.bf16.mxu0 0
    %1755 = vmatpush1.bf16.msra.mxu0 %v1734
    %1756 = vmatprep.subr.bf16.mxu0 0
    %1757 = vmatpush1.bf16.msra.mxu0 %v1735
    %1758 = vmatprep.subr.bf16.mxu0 0
    %1759 = vmatpush1.bf16.msra.mxu0 %v1736
    %1760 = vmatprep.subr.bf16.mxu0 0
    %1761 = vmatpush1.bf16.msra.mxu0 %v1737
    %1762 = vmatprep.subr.bf16.mxu0 0
    %1763 = vmatpush1.bf16.msra.mxu0 0
    %1764 = vmatprep.subr.bf16.mxu0 0
    %1765 = vmatpush1.bf16.msra.mxu0 0
    %1766 = vmatprep.subr.bf16.mxu0 0
    %1767 = vmatpush1.bf16.msra.mxu0 0
    %1768 = vmatprep.subr.bf16.mxu0 0
    %1769 = vmatpush1.bf16.msra.mxu0 0
    %1770 = vmatprep.subr.bf16.mxu0 0
    %1771 = vmatpush1.bf16.msra.mxu0 0
    %1772 = vmatprep.subr.bf16.mxu0 0
    %1773 = vmatpush1.bf16.msra.mxu0 0
    %1774 = vmatprep.subr.bf16.mxu0 0
    %1775 = vmatpush1.bf16.msra.mxu0 0
    %1776 = vmatprep.subr.bf16.mxu0 0
    %1777 = vmatpush1.bf16.msra.mxu0 0
    %1778 = vmatprep.mubr.bf16.mxu0 0
    %1779 = vmatmul.mubr.bf16.gmra.mrb[0].mxu0 %v1681
    %v1780 = vpop.f32.mrb[0].mxu0
    %v1781 = vadd.f32 %v1697, %v1780
    %v1782 = vpop.f32.mrb[0].mxu0
    %v1783 = vpop.f32.mrb[0].mxu0
    %v1784 = vadd.f32 %v1697, %v1783
    %v1785 = vpop.f32.mrb[0].mxu0
    %1786 = vmatprep.mubr.bf16.mxu0 0
    %1787 = vmatmul.mubr.bf16.gmra.mrb[0].mxu0 %v1682
    %v1788 = vpop.f32.mrb[0].mxu0
    %v1789 = vadd.f32 %v1697, %v1788
    %v1790 = vpop.f32.mrb[0].mxu0
    %v1791 = vpop.f32.mrb[0].mxu0
    %v1792 = vadd.f32 %v1697, %v1791
    %v1793 = vpop.f32.mrb[0].mxu0
    %1794 = vmatprep.mubr.bf16.mxu0 0
    %1795 = vmatmul.mubr.bf16.gmra.mrb[0].mxu0 %v1683
    %v1796 = vpop.f32.mrb[0].mxu0
    %v1797 = vadd.f32 %v1697, %v1796
    %v1798 = vpop.f32.mrb[0].mxu0
    %v1799 = vpop.f32.mrb[0].mxu0
    %v1800 = vadd.f32 %v1697, %v1799
    %v1801 = vpop.f32.mrb[0].mxu0
    %1802 = vmatprep.mubr.bf16.mxu0 0
    %1803 = vmatmul.mubr.bf16.gmra.mrb[0].mxu0 %v1684
    %v1804 = vpop.f32.mrb[0].mxu0
    %v1805 = vadd.f32 %v1697, %v1804
    %v1806 = vpop.f32.mrb[0].mxu0
    %v1807 = vpop.f32.mrb[0].mxu0
    %v1808 = vadd.f32 %v1697, %v1807
    %v1809 = vpop.f32.mrb[0].mxu0
    %1810 = vmatprep.mubr.bf16.mxu0 0
    %1811 = vmatmul.mubr.bf16.gmra.mrb[0].mxu0 %v1685
    %v1812 = vpop.f32.mrb[0].mxu0
    %v1813 = vadd.f32 %v1697, %v1812
    %v1814 = vpop.f32.mrb[0].mxu0
    %v1815 = vpop.f32.mrb[0].mxu0
    %v1816 = vadd.f32 %v1697, %v1815
    %v1817 = vpop.f32.mrb[0].mxu0
    %1818 = vmatprep.mubr.bf16.mxu0 0
    %1819 = vmatmul.mubr.bf16.gmra.mrb[0].mxu0 %v1686
    %v1820 = vpop.f32.mrb[0].mxu0
    %v1821 = vadd.f32 %v1697, %v1820
    %v1822 = vpop.f32.mrb[0].mxu0
    %v1823 = vpop.f32.mrb[0].mxu0
    %v1824 = vadd.f32 %v1697, %v1823
    %v1825 = vpop.f32.mrb[0].mxu0
    %1826 = vmatprep.mubr.bf16.mxu0 0
    %1827 = vmatmul.mubr.bf16.gmra.mrb[0].mxu0 %v1687
    %v1828 = vpop.f32.mrb[0].mxu0
    %v1829 = vadd.f32 %v1697, %v1828
    %v1830 = vpop.f32.mrb[0].mxu0
    %v1831 = vpop.f32.mrb[0].mxu0
    %v1832 = vadd.f32 %v1697, %v1831
    %v1833 = vpop.f32.mrb[0].mxu0
    %1834 = vmatprep.mubr.bf16.mxu0 0
    %1835 = vmatmul.mubr.bf16.gmra.mrb[0].mxu0 %v1688
    %v1836 = vpop.f32.mrb[0].mxu0
    %v1837 = vadd.f32 %v1697, %v1836
    %v1838 = vpop.f32.mrb[0].mxu0
    %v1839 = vpop.f32.mrb[0].mxu0
    %v1840 = vadd.f32 %v1697, %v1839
    %v1841 = vpop.f32.mrb[0].mxu0
    %1842 = vmatprep.mubr.bf16.mxu0 0
    %1843 = vmatmul.mubr.bf16.gmra.mrb[0].mxu0 %v1689
    %v1844 = vpop.f32.mrb[0].mxu0
    %v1845 = vadd.f32 %v1697, %v1844
    %v1846 = vpop.f32.mrb[0].mxu0
    %v1847 = vpop.f32.mrb[0].mxu0
    %v1848 = vadd.f32 %v1697, %v1847
    %v1849 = vpop.f32.mrb[0].mxu0
    %1850 = vmatprep.mubr.bf16.mxu0 0
    %1851 = vmatmul.mubr.bf16.gmra.mrb[0].mxu0 %v1690
    %v1852 = vpop.f32.mrb[0].mxu0
    %v1853 = vadd.f32 %v1697, %v1852
    %v1854 = vpop.f32.mrb[0].mxu0
    %v1855 = vpop.f32.mrb[0].mxu0
    %v1856 = vadd.f32 %v1697, %v1855
    %v1857 = vpop.f32.mrb[0].mxu0
    %1858 = vmatprep.mubr.bf16.mxu0 0
    %1859 = vmatmul.mubr.bf16.gmra.mrb[0].mxu0 %v1691
    %v1860 = vpop.f32.mrb[0].mxu0
    %v1861 = vadd.f32 %v1697, %v1860
    %v1862 = vpop.f32.mrb[0].mxu0
    %v1863 = vpop.f32.mrb[0].mxu0
    %v1864 = vadd.f32 %v1697, %v1863
    %v1865 = vpop.f32.mrb[0].mxu0
    %1866 = vmatprep.mubr.bf16.mxu0 0
    %1867 = vmatmul.mubr.bf16.gmra.mrb[0].mxu0 %v1692
    %v1868 = vpop.f32.mrb[0].mxu0
    %v1869 = vadd.f32 %v1697, %v1868
    %v1870 = vpop.f32.mrb[0].mxu0
    %v1871 = vpop.f32.mrb[0].mxu0
    %v1872 = vadd.f32 %v1697, %v1871
    %v1873 = vpop.f32.mrb[0].mxu0
    %1874 = vmatprep.mubr.bf16.mxu0 0
    %1875 = vmatmul.mubr.bf16.gmra.mrb[0].mxu0 %v1693
    %v1876 = vpop.f32.mrb[0].mxu0
    %v1877 = vadd.f32 %v1697, %v1876
    %v1878 = vpop.f32.mrb[0].mxu0
    %v1879 = vpop.f32.mrb[0].mxu0
    %v1880 = vadd.f32 %v1697, %v1879
    %v1881 = vpop.f32.mrb[0].mxu0
    %1882 = vmatprep.mubr.bf16.mxu0 0
    %1883 = vmatmul.mubr.bf16.gmra.mrb[0].mxu0 %v1694
    %v1884 = vpop.f32.mrb[0].mxu0
    %v1885 = vadd.f32 %v1697, %v1884
    %v1886 = vpop.f32.mrb[0].mxu0
    %v1887 = vpop.f32.mrb[0].mxu0
    %v1888 = vadd.f32 %v1697, %v1887
    %v1889 = vpop.f32.mrb[0].mxu0
    %1890 = vmatprep.mubr.bf16.mxu0 0
    %1891 = vmatmul.mubr.bf16.gmra.mrb[0].mxu0 %v1695
    %v1892 = vpop.f32.mrb[0].mxu0
    %v1893 = vadd.f32 %v1697, %v1892
    %v1894 = vpop.f32.mrb[0].mxu0
    %v1895 = vpop.f32.mrb[0].mxu0
    %v1896 = vadd.f32 %v1697, %v1895
    %v1897 = vpop.f32.mrb[0].mxu0
    %1898 = vmatprep.mubr.bf16.mxu0 0
    %1899 = vmatmul.mubr.bf16.gmra.mrb[0].mxu0 %v1696
    %v1900 = vpop.f32.mrb[0].mxu0
    %v1901 = vadd.f32 %v1697, %v1900
    %v1902 = vpop.f32.mrb[0].mxu0
    %v1903 = vpop.f32.mrb[0].mxu0
    %v1904 = vadd.f32 %v1697, %v1903
    %v1905 = vpop.f32.mrb[0].mxu0
    %1906 = vdwg.mxu0
    %v1907 = vld [vmem:[%s4] sm:$0xff]
    %v1908 = vld [vmem:[%s4 + $0x8] sm:$0xff]
    %v1909 = vld [vmem:[%s4 + $0x10] sm:$0xff]
    %v1910 = vld [vmem:[%s4 + $0x18] sm:$0xff]
    %v1911 = vpack.c.bf16 %v1784, %v1781
    %v1912 = vpack.c.bf16 %v1792, %v1789
    %v1913 = vpack.c.bf16 %v1800, %v1797
    %v1914 = vpack.c.bf16 %v1808, %v1805
    %v1915 = vpack.c.bf16 %v1816, %v1813
    %v1916 = vpack.c.bf16 %v1824, %v1821
    %v1917 = vpack.c.bf16 %v1832, %v1829
    %v1918 = vpack.c.bf16 %v1840, %v1837
    %v1919 = vpack.c.bf16 %v1848, %v1845
    %v1920 = vpack.c.bf16 %v1856, %v1853
    %v1921 = vpack.c.bf16 %v1864, %v1861
    %v1922 = vpack.c.bf16 %v1872, %v1869
    %v1923 = vpack.c.bf16 %v1880, %v1877
    %v1924 = vpack.c.bf16 %v1888, %v1885
    %v1925 = vpack.c.bf16 %v1896, %v1893
    %v1926 = vpack.c.bf16 %v1904, %v1901
    %s1927 = scalar_lea.vmem %s8, 2
    %v1928 = vld [vmem:[%s1927] ss:$8 sm:$0x3]
    %v1930 = vlaneseq
    %v1931 = vshrl.u32 %v1930, 7
    %v1932 = vsub.s32 0, %v1931
    %v1933 = vrot.slane %v1928, %v1932
    %v1934 = vlaneseq
    %v1935 = vshrl.u32 %v1934, 7
    %v1936 = vsub.s32 1, %v1935
    %v1937 = vrot.slane %v1928, %v1936
    %v1944 = vunpack.c.l.b16 %v1907
    %v1945 = vunpack.c.h.b16 %v1907
    %v1946 = vunpack.c.l.b16 %v1908
    %v1947 = vunpack.c.h.b16 %v1908
    %v1948 = vunpack.c.l.b16 %v1909
    %v1949 = vunpack.c.h.b16 %v1909
    %v1950 = vunpack.c.l.b16 %v1910
    %v1951 = vunpack.c.h.b16 %v1910
    %v1952 = vpack.c.b16 %v1946, %v1944
    %v1953 = vpack.c.b16 %v1947, %v1945
    %v1954 = vpack.c.b16 %v1950, %v1948
    %v1955 = vpack.c.b16 %v1951, %v1949
    %vm1960 = vcmask 261120
    %v1962 = vsel %vm1960, %v1911, 0
    %v1965 = vsel %vm1960, %v1912, 0
    %v1968 = vsel %vm1960, %v1913, 0
    %v1971 = vsel %vm1960, %v1914, 0
    %v1974 = vsel %vm1960, %v1915, 0
    %v1977 = vsel %vm1960, %v1916, 0
    %v1980 = vsel %vm1960, %v1917, 0
    %v1983 = vsel %vm1960, %v1918, 0
    %v1986 = vsel %vm1960, %v1919, 0
    %v1989 = vsel %vm1960, %v1920, 0
    %v1992 = vsel %vm1960, %v1921, 0
    %v1995 = vsel %vm1960, %v1922, 0
    %v1998 = vsel %vm1960, %v1923, 0
    %v2001 = vsel %vm1960, %v1924, 0
    %v2004 = vsel %vm1960, %v1925, 0
    %v2007 = vsel %vm1960, %v1926, 0
    %2009 = vmatprep.subr.bf16.mxu0 %v1953
    %2010 = vmatpush1.bf16.msra.mxu0 %v1952
    %2011 = vmatprep.subr.bf16.mxu0 %v1955
    %2012 = vmatpush1.bf16.msra.mxu0 %v1954
    %2013 = vmatprep.subr.bf16.mxu0 0
    %2014 = vmatpush1.bf16.msra.mxu0 0
    %2015 = vmatprep.subr.bf16.mxu0 0
    %2016 = vmatpush1.bf16.msra.mxu0 0
    %2017 = vmatprep.subr.bf16.mxu0 0
    %2018 = vmatpush1.bf16.msra.mxu0 0
    %2019 = vmatprep.subr.bf16.mxu0 0
    %2020 = vmatpush1.bf16.msra.mxu0 0
    %2021 = vmatprep.subr.bf16.mxu0 0
    %2022 = vmatpush1.bf16.msra.mxu0 0
    %2023 = vmatprep.subr.bf16.mxu0 0
    %2024 = vmatpush1.bf16.msra.mxu0 0
    %2025 = vmatprep.subr.bf16.mxu0 0
    %2026 = vmatpush1.bf16.msra.mxu0 0
    %2027 = vmatprep.subr.bf16.mxu0 0
    %2028 = vmatpush1.bf16.msra.mxu0 0
    %2029 = vmatprep.subr.bf16.mxu0 0
    %2030 = vmatpush1.bf16.msra.mxu0 0
    %2031 = vmatprep.subr.bf16.mxu0 0
    %2032 = vmatpush1.bf16.msra.mxu0 0
    %2033 = vmatprep.subr.bf16.mxu0 0
    %2034 = vmatpush1.bf16.msra.mxu0 0
    %2035 = vmatprep.subr.bf16.mxu0 0
    %2036 = vmatpush1.bf16.msra.mxu0 0
    %2037 = vmatprep.subr.bf16.mxu0 0
    %2038 = vmatpush1.bf16.msra.mxu0 0
    %2039 = vmatprep.subr.bf16.mxu0 0
    %2040 = vmatpush1.bf16.msra.mxu0 0
    %2041 = vmatprep.mubr.bf16.mxu0 0
    %2042 = vmatmul.mubr.bf16.gmra.mrb[0].mxu0 %v1962
    %v2043 = vpop.f32.mrb[0].mxu0
    %v2044 = vadd.f32 %v1933, %v2043
    %v2045 = vpop.f32.mrb[0].mxu0
    %v2046 = vadd.f32 %v1937, %v2045
    %v2047 = vpop.f32.mrb[0].mxu0
    %v2048 = vadd.f32 %v1933, %v2047
    %v2049 = vpop.f32.mrb[0].mxu0
    %v2050 = vadd.f32 %v1937, %v2049
    %2051 = vmatprep.mubr.bf16.mxu0 0
    %2052 = vmatmul.mubr.bf16.gmra.mrb[0].mxu0 %v1965
    %v2053 = vpop.f32.mrb[0].mxu0
    %v2054 = vadd.f32 %v1933, %v2053
    %v2055 = vpop.f32.mrb[0].mxu0
    %v2056 = vadd.f32 %v1937, %v2055
    %v2057 = vpop.f32.mrb[0].mxu0
    %v2058 = vadd.f32 %v1933, %v2057
    %v2059 = vpop.f32.mrb[0].mxu0
    %v2060 = vadd.f32 %v1937, %v2059
    %2061 = vmatprep.mubr.bf16.mxu0 0
    %2062 = vmatmul.mubr.bf16.gmra.mrb[0].mxu0 %v1968
    %v2063 = vpop.f32.mrb[0].mxu0
    %v2064 = vadd.f32 %v1933, %v2063
    %v2065 = vpop.f32.mrb[0].mxu0
    %v2066 = vadd.f32 %v1937, %v2065
    %v2067 = vpop.f32.mrb[0].mxu0
    %v2068 = vadd.f32 %v1933, %v2067
    %v2069 = vpop.f32.mrb[0].mxu0
    %v2070 = vadd.f32 %v1937, %v2069
    %2071 = vmatprep.mubr.bf16.mxu0 0
    %2072 = vmatmul.mubr.bf16.gmra.mrb[0].mxu0 %v1971
    %v2073 = vpop.f32.mrb[0].mxu0
    %v2074 = vadd.f32 %v1933, %v2073
    %v2075 = vpop.f32.mrb[0].mxu0
    %v2076 = vadd.f32 %v1937, %v2075
    %v2077 = vpop.f32.mrb[0].mxu0
    %v2078 = vadd.f32 %v1933, %v2077
    %v2079 = vpop.f32.mrb[0].mxu0
    %v2080 = vadd.f32 %v1937, %v2079
    %2081 = vmatprep.mubr.bf16.mxu0 0
    %2082 = vmatmul.mubr.bf16.gmra.mrb[0].mxu0 %v1974
    %v2083 = vpop.f32.mrb[0].mxu0
    %v2084 = vadd.f32 %v1933, %v2083
    %v2085 = vpop.f32.mrb[0].mxu0
    %v2086 = vadd.f32 %v1937, %v2085
    %v2087 = vpop.f32.mrb[0].mxu0
    %v2088 = vadd.f32 %v1933, %v2087
    %v2089 = vpop.f32.mrb[0].mxu0
    %v2090 = vadd.f32 %v1937, %v2089
    %2091 = vmatprep.mubr.bf16.mxu0 0
    %2092 = vmatmul.mubr.bf16.gmra.mrb[0].mxu0 %v1977
    %v2093 = vpop.f32.mrb[0].mxu0
    %v2094 = vadd.f32 %v1933, %v2093
    %v2095 = vpop.f32.mrb[0].mxu0
    %v2096 = vadd.f32 %v1937, %v2095
    %v2097 = vpop.f32.mrb[0].mxu0
    %v2098 = vadd.f32 %v1933, %v2097
    %v2099 = vpop.f32.mrb[0].mxu0
    %v2100 = vadd.f32 %v1937, %v2099
    %2101 = vmatprep.mubr.bf16.mxu0 0
    %2102 = vmatmul.mubr.bf16.gmra.mrb[0].mxu0 %v1980
    %v2103 = vpop.f32.mrb[0].mxu0
    %v2104 = vadd.f32 %v1933, %v2103
    %v2105 = vpop.f32.mrb[0].mxu0
    %v2106 = vadd.f32 %v1937, %v2105
    %v2107 = vpop.f32.mrb[0].mxu0
    %v2108 = vadd.f32 %v1933, %v2107
    %v2109 = vpop.f32.mrb[0].mxu0
    %v2110 = vadd.f32 %v1937, %v2109
    %2111 = vmatprep.mubr.bf16.mxu0 0
    %2112 = vmatmul.mubr.bf16.gmra.mrb[0].mxu0 %v1983
    %v2113 = vpop.f32.mrb[0].mxu0
    %v2114 = vadd.f32 %v1933, %v2113
    %v2115 = vpop.f32.mrb[0].mxu0
    %v2116 = vadd.f32 %v1937, %v2115
    %v2117 = vpop.f32.mrb[0].mxu0
    %v2118 = vadd.f32 %v1933, %v2117
    %v2119 = vpop.f32.mrb[0].mxu0
    %v2120 = vadd.f32 %v1937, %v2119
    %2121 = vmatprep.mubr.bf16.mxu0 0
    %2122 = vmatmul.mubr.bf16.gmra.mrb[0].mxu0 %v1986
    %v2123 = vpop.f32.mrb[0].mxu0
    %v2124 = vadd.f32 %v1933, %v2123
    %v2125 = vpop.f32.mrb[0].mxu0
    %v2126 = vadd.f32 %v1937, %v2125
    %v2127 = vpop.f32.mrb[0].mxu0
    %v2128 = vadd.f32 %v1933, %v2127
    %v2129 = vpop.f32.mrb[0].mxu0
    %v2130 = vadd.f32 %v1937, %v2129
    %2131 = vmatprep.mubr.bf16.mxu0 0
    %2132 = vmatmul.mubr.bf16.gmra.mrb[0].mxu0 %v1989
    %v2133 = vpop.f32.mrb[0].mxu0
    %v2134 = vadd.f32 %v1933, %v2133
    %v2135 = vpop.f32.mrb[0].mxu0
    %v2136 = vadd.f32 %v1937, %v2135
    %v2137 = vpop.f32.mrb[0].mxu0
    %v2138 = vadd.f32 %v1933, %v2137
    %v2139 = vpop.f32.mrb[0].mxu0
    %v2140 = vadd.f32 %v1937, %v2139
    %2141 = vmatprep.mubr.bf16.mxu0 0
    %2142 = vmatmul.mubr.bf16.gmra.mrb[0].mxu0 %v1992
    %v2143 = vpop.f32.mrb[0].mxu0
    %v2144 = vadd.f32 %v1933, %v2143
    %v2145 = vpop.f32.mrb[0].mxu0
    %v2146 = vadd.f32 %v1937, %v2145
    %v2147 = vpop.f32.mrb[0].mxu0
    %v2148 = vadd.f32 %v1933, %v2147
    %v2149 = vpop.f32.mrb[0].mxu0
    %v2150 = vadd.f32 %v1937, %v2149
    %2151 = vmatprep.mubr.bf16.mxu0 0
    %2152 = vmatmul.mubr.bf16.gmra.mrb[0].mxu0 %v1995
    %v2153 = vpop.f32.mrb[0].mxu0
    %v2154 = vadd.f32 %v1933, %v2153
    %v2155 = vpop.f32.mrb[0].mxu0
    %v2156 = vadd.f32 %v1937, %v2155
    %v2157 = vpop.f32.mrb[0].mxu0
    %v2158 = vadd.f32 %v1933, %v2157
    %v2159 = vpop.f32.mrb[0].mxu0
    %v2160 = vadd.f32 %v1937, %v2159
    %2161 = vmatprep.mubr.bf16.mxu0 0
    %2162 = vmatmul.mubr.bf16.gmra.mrb[0].mxu0 %v1998
    %v2163 = vpop.f32.mrb[0].mxu0
    %v2164 = vadd.f32 %v1933, %v2163
    %v2165 = vpop.f32.mrb[0].mxu0
    %v2166 = vadd.f32 %v1937, %v2165
    %v2167 = vpop.f32.mrb[0].mxu0
    %v2168 = vadd.f32 %v1933, %v2167
    %v2169 = vpop.f32.mrb[0].mxu0
    %v2170 = vadd.f32 %v1937, %v2169
    %2171 = vmatprep.mubr.bf16.mxu0 0
    %2172 = vmatmul.mubr.bf16.gmra.mrb[0].mxu0 %v2001
    %v2173 = vpop.f32.mrb[0].mxu0
    %v2174 = vadd.f32 %v1933, %v2173
    %v2175 = vpop.f32.mrb[0].mxu0
    %v2176 = vadd.f32 %v1937, %v2175
    %v2177 = vpop.f32.mrb[0].mxu0
    %v2178 = vadd.f32 %v1933, %v2177
    %v2179 = vpop.f32.mrb[0].mxu0
    %v2180 = vadd.f32 %v1937, %v2179
    %2181 = vmatprep.mubr.bf16.mxu0 0
    %2182 = vmatmul.mubr.bf16.gmra.mrb[0].mxu0 %v2004
    %v2183 = vpop.f32.mrb[0].mxu0
    %v2184 = vadd.f32 %v1933, %v2183
    %v2185 = vpop.f32.mrb[0].mxu0
    %v2186 = vadd.f32 %v1937, %v2185
    %v2187 = vpop.f32.mrb[0].mxu0
    %v2188 = vadd.f32 %v1933, %v2187
    %v2189 = vpop.f32.mrb[0].mxu0
    %v2190 = vadd.f32 %v1937, %v2189
    %2191 = vmatprep.mubr.bf16.mxu0 0
    %2192 = vmatmul.mubr.bf16.gmra.mrb[0].mxu0 %v2007
    %v2193 = vpop.f32.mrb[0].mxu0
    %v2194 = vadd.f32 %v1933, %v2193
    %v2195 = vpop.f32.mrb[0].mxu0
    %v2196 = vadd.f32 %v1937, %v2195
    %v2197 = vpop.f32.mrb[0].mxu0
    %v2198 = vadd.f32 %v1933, %v2197
    %v2199 = vpop.f32.mrb[0].mxu0
    %v2200 = vadd.f32 %v1937, %v2199
    %2201 = vdwg.mxu0
    %2202 = vst [vmem:[#allocation10] sm:$0xff] %v2044
    %2203 = vst [vmem:[#allocation10 + $0x8] sm:$0xff] %v2046
    %2204 = vst [vmem:[#allocation10 + $0x10] sm:$0xff] %v2048
    %2205 = vst [vmem:[#allocation10 + $0x18] sm:$0xff] %v2050
    %2206 = vst [vmem:[#allocation10 + $0x20] sm:$0xff] %v2054
    %2207 = vst [vmem:[#allocation10 + $0x28] sm:$0xff] %v2056
    %2208 = vst [vmem:[#allocation10 + $0x30] sm:$0xff] %v2058
    %2209 = vst [vmem:[#allocation10 + $0x38] sm:$0xff] %v2060
    %2210 = vst [vmem:[#allocation10 + $0x40] sm:$0xff] %v2064
    %2211 = vst [vmem:[#allocation10 + $0x48] sm:$0xff] %v2066
    %2212 = vst [vmem:[#allocation10 + $0x50] sm:$0xff] %v2068
    %2213 = vst [vmem:[#allocation10 + $0x58] sm:$0xff] %v2070
    %2214 = vst [vmem:[#allocation10 + $0x60] sm:$0xff] %v2074
    %2215 = vst [vmem:[#allocation10 + $0x68] sm:$0xff] %v2076
    %2216 = vst [vmem:[#allocation10 + $0x70] sm:$0xff] %v2078
    %2217 = vst [vmem:[#allocation10 + $0x78] sm:$0xff] %v2080
    %2218 = vst [vmem:[#allocation10 + $0x80] sm:$0xff] %v2084
    %2219 = vst [vmem:[#allocation10 + $0x88] sm:$0xff] %v2086
    %2220 = vst [vmem:[#allocation10 + $0x90] sm:$0xff] %v2088
    %2221 = vst [vmem:[#allocation10 + $0x98] sm:$0xff] %v2090
    %2222 = vst [vmem:[#allocation10 + $0xa0] sm:$0xff] %v2094
    %2223 = vst [vmem:[#allocation10 + $0xa8] sm:$0xff] %v2096
    %2224 = vst [vmem:[#allocation10 + $0xb0] sm:$0xff] %v2098
    %2225 = vst [vmem:[#allocation10 + $0xb8] sm:$0xff] %v2100
    %2226 = vst [vmem:[#allocation10 + $0xc0] sm:$0xff] %v2104
    %2227 = vst [vmem:[#allocation10 + $0xc8] sm:$0xff] %v2106
    %2228 = vst [vmem:[#allocation10 + $0xd0] sm:$0xff] %v2108
    %2229 = vst [vmem:[#allocation10 + $0xd8] sm:$0xff] %v2110
    %2230 = vst [vmem:[#allocation10 + $0xe0] sm:$0xff] %v2114
    %2231 = vst [vmem:[#allocation10 + $0xe8] sm:$0xff] %v2116
    %2232 = vst [vmem:[#allocation10 + $0xf0] sm:$0xff] %v2118
    %2233 = vst [vmem:[#allocation10 + $0xf8] sm:$0xff] %v2120
    %2234 = vst [vmem:[#allocation10 + $0x100] sm:$0xff] %v2124
    %2235 = vst [vmem:[#allocation10 + $0x108] sm:$0xff] %v2126
    %2236 = vst [vmem:[#allocation10 + $0x110] sm:$0xff] %v2128
    %2237 = vst [vmem:[#allocation10 + $0x118] sm:$0xff] %v2130
    %2238 = vst [vmem:[#allocation10 + $0x120] sm:$0xff] %v2134
    %2239 = vst [vmem:[#allocation10 + $0x128] sm:$0xff] %v2136
    %2240 = vst [vmem:[#allocation10 + $0x130] sm:$0xff] %v2138
    %2241 = vst [vmem:[#allocation10 + $0x138] sm:$0xff] %v2140
    %2242 = vst [vmem:[#allocation10 + $0x140] sm:$0xff] %v2144
    %2243 = vst [vmem:[#allocation10 + $0x148] sm:$0xff] %v2146
    %2244 = vst [vmem:[#allocation10 + $0x150] sm:$0xff] %v2148
    %2245 = vst [vmem:[#allocation10 + $0x158] sm:$0xff] %v2150
    %2246 = vst [vmem:[#allocation10 + $0x160] sm:$0xff] %v2154
    %2247 = vst [vmem:[#allocation10 + $0x168] sm:$0xff] %v2156
    %2248 = vst [vmem:[#allocation10 + $0x170] sm:$0xff] %v2158
    %2249 = vst [vmem:[#allocation10 + $0x178] sm:$0xff] %v2160
    %2250 = vst [vmem:[#allocation10 + $0x180] sm:$0xff] %v2164
    %2251 = vst [vmem:[#allocation10 + $0x188] sm:$0xff] %v2166
    %2252 = vst [vmem:[#allocation10 + $0x190] sm:$0xff] %v2168
    %2253 = vst [vmem:[#allocation10 + $0x198] sm:$0xff] %v2170
    %2254 = vst [vmem:[#allocation10 + $0x1a0] sm:$0xff] %v2174
    %2255 = vst [vmem:[#allocation10 + $0x1a8] sm:$0xff] %v2176
    %2256 = vst [vmem:[#allocation10 + $0x1b0] sm:$0xff] %v2178
    %2257 = vst [vmem:[#allocation10 + $0x1b8] sm:$0xff] %v2180
    %2258 = vst [vmem:[#allocation10 + $0x1c0] sm:$0xff] %v2184
    %2259 = vst [vmem:[#allocation10 + $0x1c8] sm:$0xff] %v2186
    %2260 = vst [vmem:[#allocation10 + $0x1d0] sm:$0xff] %v2188
    %2261 = vst [vmem:[#allocation10 + $0x1d8] sm:$0xff] %v2190
    %2262 = vst [vmem:[#allocation10 + $0x1e0] sm:$0xff] %v2194
    %2263 = vst [vmem:[#allocation10 + $0x1e8] sm:$0xff] %v2196
    %2264 = vst [vmem:[#allocation10 + $0x1f0] sm:$0xff] %v2198
    %2265 = vst [vmem:[#allocation10 + $0x1f8] sm:$0xff] %v2200
    %v2266 = vmul.f32 %v2046, 1.442695
    %v2267 = vpow.pop %v2266
    %v2268 = vmul.f32 %v2050, 1.442695
    %v2269 = vpow.pop %v2268
    %v2270 = vmul.f32 %v2056, 1.442695
    %v2271 = vpow.pop %v2270
    %v2272 = vmul.f32 %v2060, 1.442695
    %v2273 = vpow.pop %v2272
    %v2274 = vmul.f32 %v2066, 1.442695
    %v2275 = vpow.pop %v2274
    %v2276 = vmul.f32 %v2070, 1.442695
    %v2277 = vpow.pop %v2276
    %v2278 = vmul.f32 %v2076, 1.442695
    %v2279 = vpow.pop %v2278
    %v2280 = vmul.f32 %v2080, 1.442695
    %v2281 = vpow.pop %v2280
    %v2282 = vmul.f32 %v2086, 1.442695
    %v2283 = vpow.pop %v2282
    %v2284 = vmul.f32 %v2090, 1.442695
    %v2285 = vpow.pop %v2284
    %v2286 = vmul.f32 %v2096, 1.442695
    %v2287 = vpow.pop %v2286
    %v2288 = vmul.f32 %v2100, 1.442695
    %v2289 = vpow.pop %v2288
    %v2290 = vmul.f32 %v2106, 1.442695
    %v2291 = vpow.pop %v2290
    %v2292 = vmul.f32 %v2110, 1.442695
    %v2293 = vpow.pop %v2292
    %v2294 = vmul.f32 %v2116, 1.442695
    %v2295 = vpow.pop %v2294
    %v2296 = vmul.f32 %v2120, 1.442695
    %v2297 = vpow.pop %v2296
    %v2298 = vmul.f32 %v2126, 1.442695
    %v2299 = vpow.pop %v2298
    %v2300 = vmul.f32 %v2130, 1.442695
    %v2301 = vpow.pop %v2300
    %v2302 = vmul.f32 %v2136, 1.442695
    %v2303 = vpow.pop %v2302
    %v2304 = vmul.f32 %v2140, 1.442695
    %v2305 = vpow.pop %v2304
    %v2306 = vmul.f32 %v2146, 1.442695
    %v2307 = vpow.pop %v2306
    %v2308 = vmul.f32 %v2150, 1.442695
    %v2309 = vpow.pop %v2308
    %v2310 = vmul.f32 %v2156, 1.442695
    %v2311 = vpow.pop %v2310
    %v2312 = vmul.f32 %v2160, 1.442695
    %v2313 = vpow.pop %v2312
    %v2314 = vmul.f32 %v2166, 1.442695
    %v2315 = vpow.pop %v2314
    %v2316 = vmul.f32 %v2170, 1.442695
    %v2317 = vpow.pop %v2316
    %v2318 = vmul.f32 %v2176, 1.442695
    %v2319 = vpow.pop %v2318
    %v2320 = vmul.f32 %v2180, 1.442695
    %v2321 = vpow.pop %v2320
    %v2322 = vmul.f32 %v2186, 1.442695
    %v2323 = vpow.pop %v2322
    %v2324 = vmul.f32 %v2190, 1.442695
    %v2325 = vpow.pop %v2324
    %v2326 = vmul.f32 %v2196, 1.442695
    %v2327 = vpow.pop %v2326
    %v2328 = vmul.f32 %v2200, 1.442695
    %v2329 = vpow.pop %v2328
    %v2330 = vld [vmem:[#allocation5] sm:$0xff]
    %v2331 = vld [vmem:[#allocation5 + $0x8] sm:$0xff]
    %v2332 = vld [vmem:[#allocation5 + $0x10] sm:$0xff]
    %v2333 = vld [vmem:[#allocation5 + $0x18] sm:$0xff]
    %v2334 = vld [vmem:[#allocation5 + $0x20] sm:$0xff]
    %v2335 = vld [vmem:[#allocation5 + $0x28] sm:$0xff]
    %v2336 = vld [vmem:[#allocation5 + $0x30] sm:$0xff]
    %v2337 = vld [vmem:[#allocation5 + $0x38] sm:$0xff]
    %v2338 = vld [vmem:[#allocation5 + $0x40] sm:$0xff]
    %v2339 = vld [vmem:[#allocation5 + $0x48] sm:$0xff]
    %v2340 = vld [vmem:[#allocation5 + $0x50] sm:$0xff]
    %v2341 = vld [vmem:[#allocation5 + $0x58] sm:$0xff]
    %v2342 = vld [vmem:[#allocation5 + $0x60] sm:$0xff]
    %v2343 = vld [vmem:[#allocation5 + $0x68] sm:$0xff]
    %v2344 = vld [vmem:[#allocation5 + $0x70] sm:$0xff]
    %v2345 = vld [vmem:[#allocation5 + $0x78] sm:$0xff]
    %v2346 = vld [vmem:[#allocation5 + $0x80] sm:$0xff]
    %v2347 = vld [vmem:[#allocation5 + $0x88] sm:$0xff]
    %v2348 = vld [vmem:[#allocation5 + $0x90] sm:$0xff]
    %v2349 = vld [vmem:[#allocation5 + $0x98] sm:$0xff]
    %v2350 = vld [vmem:[#allocation5 + $0xa0] sm:$0xff]
    %v2351 = vld [vmem:[#allocation5 + $0xa8] sm:$0xff]
    %v2352 = vld [vmem:[#allocation5 + $0xb0] sm:$0xff]
    %v2353 = vld [vmem:[#allocation5 + $0xb8] sm:$0xff]
    %v2354 = vld [vmem:[#allocation5 + $0xc0] sm:$0xff]
    %v2355 = vld [vmem:[#allocation5 + $0xc8] sm:$0xff]
    %v2356 = vld [vmem:[#allocation5 + $0xd0] sm:$0xff]
    %v2357 = vld [vmem:[#allocation5 + $0xd8] sm:$0xff]
    %v2358 = vld [vmem:[#allocation5 + $0xe0] sm:$0xff]
    %v2359 = vld [vmem:[#allocation5 + $0xe8] sm:$0xff]
    %v2360 = vld [vmem:[#allocation5 + $0xf0] sm:$0xff]
    %v2361 = vld [vmem:[#allocation5 + $0xf8] sm:$0xff]
    %v2362 = vmul.f32 %v2267, %v2330
    %v2363 = vmul.f32 %v2269, %v2331
    %v2364 = vmul.f32 %v2271, %v2332
    %v2365 = vmul.f32 %v2273, %v2333
    %v2366 = vmul.f32 %v2275, %v2334
    %v2367 = vmul.f32 %v2277, %v2335
    %v2368 = vmul.f32 %v2279, %v2336
    %v2369 = vmul.f32 %v2281, %v2337
    %v2370 = vmul.f32 %v2283, %v2338
    %v2371 = vmul.f32 %v2285, %v2339
    %v2372 = vmul.f32 %v2287, %v2340
    %v2373 = vmul.f32 %v2289, %v2341
    %v2374 = vmul.f32 %v2291, %v2342
    %v2375 = vmul.f32 %v2293, %v2343
    %v2376 = vmul.f32 %v2295, %v2344
    %v2377 = vmul.f32 %v2297, %v2345
    %v2378 = vmul.f32 %v2299, %v2346
    %v2379 = vmul.f32 %v2301, %v2347
    %v2380 = vmul.f32 %v2303, %v2348
    %v2381 = vmul.f32 %v2305, %v2349
    %v2382 = vmul.f32 %v2307, %v2350
    %v2383 = vmul.f32 %v2309, %v2351
    %v2384 = vmul.f32 %v2311, %v2352
    %v2385 = vmul.f32 %v2313, %v2353
    %v2386 = vmul.f32 %v2315, %v2354
    %v2387 = vmul.f32 %v2317, %v2355
    %v2388 = vmul.f32 %v2319, %v2356
    %v2389 = vmul.f32 %v2321, %v2357
    %v2390 = vmul.f32 %v2323, %v2358
    %v2391 = vmul.f32 %v2325, %v2359
    %v2392 = vmul.f32 %v2327, %v2360
    %v2393 = vmul.f32 %v2329, %v2361
    %v2394 = vadd.f32 %v2362, %v2044
    %v2395 = vadd.f32 %v2363, %v2048
    %v2396 = vadd.f32 %v2364, %v2054
    %v2397 = vadd.f32 %v2365, %v2058
    %v2398 = vadd.f32 %v2366, %v2064
    %v2399 = vadd.f32 %v2367, %v2068
    %v2400 = vadd.f32 %v2368, %v2074
    %v2401 = vadd.f32 %v2369, %v2078
    %v2402 = vadd.f32 %v2370, %v2084
    %v2403 = vadd.f32 %v2371, %v2088
    %v2404 = vadd.f32 %v2372, %v2094
    %v2405 = vadd.f32 %v2373, %v2098
    %v2406 = vadd.f32 %v2374, %v2104
    %v2407 = vadd.f32 %v2375, %v2108
    %v2408 = vadd.f32 %v2376, %v2114
    %v2409 = vadd.f32 %v2377, %v2118
    %v2410 = vadd.f32 %v2378, %v2124
    %v2411 = vadd.f32 %v2379, %v2128
    %v2412 = vadd.f32 %v2380, %v2134
    %v2413 = vadd.f32 %v2381, %v2138
    %v2414 = vadd.f32 %v2382, %v2144
    %v2415 = vadd.f32 %v2383, %v2148
    %v2416 = vadd.f32 %v2384, %v2154
    %v2417 = vadd.f32 %v2385, %v2158
    %v2418 = vadd.f32 %v2386, %v2164
    %v2419 = vadd.f32 %v2387, %v2168
    %v2420 = vadd.f32 %v2388, %v2174
    %v2421 = vadd.f32 %v2389, %v2178
    %v2422 = vadd.f32 %v2390, %v2184
    %v2423 = vadd.f32 %v2391, %v2188
    %v2424 = vadd.f32 %v2392, %v2194
    %v2425 = vadd.f32 %v2393, %v2198
    %v2426 = vld [vmem:[%s5] sm:$0xf]
    %v2427 = vld [vmem:[%s5 + $0x4] sm:$0xf]
    %v2428 = vld [vmem:[%s5 + $0x8] sm:$0xf]
    %v2429 = vld [vmem:[%s5 + $0xc] sm:$0xf]
    %v2430 = vld [vmem:[%s5 + $0x10] sm:$0xf]
    %v2431 = vld [vmem:[%s5 + $0x14] sm:$0xf]
    %v2432 = vld [vmem:[%s5 + $0x18] sm:$0xf]
    %v2433 = vld [vmem:[%s5 + $0x1c] sm:$0xf]
    %v2434 = vld [vmem:[%s5 + $0x20] sm:$0xf]
    %v2435 = vld [vmem:[%s5 + $0x24] sm:$0xf]
    %v2436 = vld [vmem:[%s5 + $0x28] sm:$0xf]
    %v2437 = vld [vmem:[%s5 + $0x2c] sm:$0xf]
    %v2438 = vld [vmem:[%s5 + $0x30] sm:$0xf]
    %v2439 = vld [vmem:[%s5 + $0x34] sm:$0xf]
    %v2440 = vld [vmem:[%s5 + $0x38] sm:$0xf]
    %v2441 = vld [vmem:[%s5 + $0x3c] sm:$0xf]
    %v2442 = vpack.c.bf16 %v2395, %v2394
    %v2443 = vpack.c.bf16 %v2397, %v2396
    %v2444 = vpack.c.bf16 %v2399, %v2398
    %v2445 = vpack.c.bf16 %v2401, %v2400
    %v2446 = vpack.c.bf16 %v2403, %v2402
    %v2447 = vpack.c.bf16 %v2405, %v2404
    %v2448 = vpack.c.bf16 %v2407, %v2406
    %v2449 = vpack.c.bf16 %v2409, %v2408
    %v2450 = vpack.c.bf16 %v2411, %v2410
    %v2451 = vpack.c.bf16 %v2413, %v2412
    %v2452 = vpack.c.bf16 %v2415, %v2414
    %v2453 = vpack.c.bf16 %v2417, %v2416
    %v2454 = vpack.c.bf16 %v2419, %v2418
    %v2455 = vpack.c.bf16 %v2421, %v2420
    %v2456 = vpack.c.bf16 %v2423, %v2422
    %v2457 = vpack.c.bf16 %v2425, %v2424
    %v2458 = vld [vmem:[%s8 + $0x3] ss:$0 sm:$0xff]
    %v2475 = vunpack.c.l.b16 %v2426
    %v2476 = vunpack.c.l.b16 %v2427
    %v2477 = vunpack.c.l.b16 %v2428
    %v2478 = vunpack.c.l.b16 %v2429
    %v2479 = vunpack.c.l.b16 %v2430
    %v2480 = vunpack.c.l.b16 %v2431
    %v2481 = vunpack.c.l.b16 %v2432
    %v2482 = vunpack.c.l.b16 %v2433
    %v2483 = vunpack.c.l.b16 %v2434
    %v2484 = vunpack.c.l.b16 %v2435
    %v2485 = vunpack.c.l.b16 %v2436
    %v2486 = vunpack.c.l.b16 %v2437
    %v2487 = vunpack.c.l.b16 %v2438
    %v2488 = vunpack.c.l.b16 %v2439
    %v2489 = vunpack.c.l.b16 %v2440
    %v2490 = vunpack.c.l.b16 %v2441
    %v2491 = vpack.c.b16 %v2476, %v2475
    %v2492 = vpack.c.b16 %v2478, %v2477
    %v2493 = vpack.c.b16 %v2480, %v2479
    %v2494 = vpack.c.b16 %v2482, %v2481
    %v2495 = vpack.c.b16 %v2484, %v2483
    %v2496 = vpack.c.b16 %v2486, %v2485
    %v2497 = vpack.c.b16 %v2488, %v2487
    %v2498 = vpack.c.b16 %v2490, %v2489
    %2507 = vmatprep.subr.bf16.mxu0 0
    %2508 = vmatpush1.bf16.msra.mxu0 %v2491
    %2509 = vmatprep.subr.bf16.mxu0 0
    %2510 = vmatpush1.bf16.msra.mxu0 %v2492
    %2511 = vmatprep.subr.bf16.mxu0 0
    %2512 = vmatpush1.bf16.msra.mxu0 %v2493
    %2513 = vmatprep.subr.bf16.mxu0 0
    %2514 = vmatpush1.bf16.msra.mxu0 %v2494
    %2515 = vmatprep.subr.bf16.mxu0 0
    %2516 = vmatpush1.bf16.msra.mxu0 %v2495
    %2517 = vmatprep.subr.bf16.mxu0 0
    %2518 = vmatpush1.bf16.msra.mxu0 %v2496
    %2519 = vmatprep.subr.bf16.mxu0 0
    %2520 = vmatpush1.bf16.msra.mxu0 %v2497
    %2521 = vmatprep.subr.bf16.mxu0 0
    %2522 = vmatpush1.bf16.msra.mxu0 %v2498
    %2523 = vmatprep.subr.bf16.mxu0 0
    %2524 = vmatpush1.bf16.msra.mxu0 0
    %2525 = vmatprep.subr.bf16.mxu0 0
    %2526 = vmatpush1.bf16.msra.mxu0 0
    %2527 = vmatprep.subr.bf16.mxu0 0
    %2528 = vmatpush1.bf16.msra.mxu0 0
    %2529 = vmatprep.subr.bf16.mxu0 0
    %2530 = vmatpush1.bf16.msra.mxu0 0
    %2531 = vmatprep.subr.bf16.mxu0 0
    %2532 = vmatpush1.bf16.msra.mxu0 0
    %2533 = vmatprep.subr.bf16.mxu0 0
    %2534 = vmatpush1.bf16.msra.mxu0 0
    %2535 = vmatprep.subr.bf16.mxu0 0
    %2536 = vmatpush1.bf16.msra.mxu0 0
    %2537 = vmatprep.subr.bf16.mxu0 0
    %2538 = vmatpush1.bf16.msra.mxu0 0
    %2539 = vmatprep.mubr.bf16.mxu0 0
    %2540 = vmatmul.mubr.bf16.gmra.mrb[0].mxu0 %v2442
    %v2541 = vpop.f32.mrb[0].mxu0
    %v2542 = vadd.f32 %v2458, %v2541
    %v2543 = vpop.f32.mrb[0].mxu0
    %v2544 = vpop.f32.mrb[0].mxu0
    %v2545 = vadd.f32 %v2458, %v2544
    %v2546 = vpop.f32.mrb[0].mxu0
    %2547 = vmatprep.mubr.bf16.mxu0 0
    %2548 = vmatmul.mubr.bf16.gmra.mrb[0].mxu0 %v2443
    %v2549 = vpop.f32.mrb[0].mxu0
    %v2550 = vadd.f32 %v2458, %v2549
    %v2551 = vpop.f32.mrb[0].mxu0
    %v2552 = vpop.f32.mrb[0].mxu0
    %v2553 = vadd.f32 %v2458, %v2552
    %v2554 = vpop.f32.mrb[0].mxu0
    %2555 = vmatprep.mubr.bf16.mxu0 0
    %2556 = vmatmul.mubr.bf16.gmra.mrb[0].mxu0 %v2444
    %v2557 = vpop.f32.mrb[0].mxu0
    %v2558 = vadd.f32 %v2458, %v2557
    %v2559 = vpop.f32.mrb[0].mxu0
    %v2560 = vpop.f32.mrb[0].mxu0
    %v2561 = vadd.f32 %v2458, %v2560
    %v2562 = vpop.f32.mrb[0].mxu0
    %2563 = vmatprep.mubr.bf16.mxu0 0
    %2564 = vmatmul.mubr.bf16.gmra.mrb[0].mxu0 %v2445
    %v2565 = vpop.f32.mrb[0].mxu0
    %v2566 = vadd.f32 %v2458, %v2565
    %v2567 = vpop.f32.mrb[0].mxu0
    %v2568 = vpop.f32.mrb[0].mxu0
    %v2569 = vadd.f32 %v2458, %v2568
    %v2570 = vpop.f32.mrb[0].mxu0
    %2571 = vmatprep.mubr.bf16.mxu0 0
    %2572 = vmatmul.mubr.bf16.gmra.mrb[0].mxu0 %v2446
    %v2573 = vpop.f32.mrb[0].mxu0
    %v2574 = vadd.f32 %v2458, %v2573
    %v2575 = vpop.f32.mrb[0].mxu0
    %v2576 = vpop.f32.mrb[0].mxu0
    %v2577 = vadd.f32 %v2458, %v2576
    %v2578 = vpop.f32.mrb[0].mxu0
    %2579 = vmatprep.mubr.bf16.mxu0 0
    %2580 = vmatmul.mubr.bf16.gmra.mrb[0].mxu0 %v2447
    %v2581 = vpop.f32.mrb[0].mxu0
    %v2582 = vadd.f32 %v2458, %v2581
    %v2583 = vpop.f32.mrb[0].mxu0
    %v2584 = vpop.f32.mrb[0].mxu0
    %v2585 = vadd.f32 %v2458, %v2584
    %v2586 = vpop.f32.mrb[0].mxu0
    %2587 = vmatprep.mubr.bf16.mxu0 0
    %2588 = vmatmul.mubr.bf16.gmra.mrb[0].mxu0 %v2448
    %v2589 = vpop.f32.mrb[0].mxu0
    %v2590 = vadd.f32 %v2458, %v2589
    %v2591 = vpop.f32.mrb[0].mxu0
    %v2592 = vpop.f32.mrb[0].mxu0
    %v2593 = vadd.f32 %v2458, %v2592
    %v2594 = vpop.f32.mrb[0].mxu0
    %2595 = vmatprep.mubr.bf16.mxu0 0
    %2596 = vmatmul.mubr.bf16.gmra.mrb[0].mxu0 %v2449
    %v2597 = vpop.f32.mrb[0].mxu0
    %v2598 = vadd.f32 %v2458, %v2597
    %v2599 = vpop.f32.mrb[0].mxu0
    %v2600 = vpop.f32.mrb[0].mxu0
    %v2601 = vadd.f32 %v2458, %v2600
    %v2602 = vpop.f32.mrb[0].mxu0
    %2603 = vmatprep.mubr.bf16.mxu0 0
    %2604 = vmatmul.mubr.bf16.gmra.mrb[0].mxu0 %v2450
    %v2605 = vpop.f32.mrb[0].mxu0
    %v2606 = vadd.f32 %v2458, %v2605
    %v2607 = vpop.f32.mrb[0].mxu0
    %v2608 = vpop.f32.mrb[0].mxu0
    %v2609 = vadd.f32 %v2458, %v2608
    %v2610 = vpop.f32.mrb[0].mxu0
    %2611 = vmatprep.mubr.bf16.mxu0 0
    %2612 = vmatmul.mubr.bf16.gmra.mrb[0].mxu0 %v2451
    %v2613 = vpop.f32.mrb[0].mxu0
    %v2614 = vadd.f32 %v2458, %v2613
    %v2615 = vpop.f32.mrb[0].mxu0
    %v2616 = vpop.f32.mrb[0].mxu0
    %v2617 = vadd.f32 %v2458, %v2616
    %v2618 = vpop.f32.mrb[0].mxu0
    %2619 = vmatprep.mubr.bf16.mxu0 0
    %2620 = vmatmul.mubr.bf16.gmra.mrb[0].mxu0 %v2452
    %v2621 = vpop.f32.mrb[0].mxu0
    %v2622 = vadd.f32 %v2458, %v2621
    %v2623 = vpop.f32.mrb[0].mxu0
    %v2624 = vpop.f32.mrb[0].mxu0
    %v2625 = vadd.f32 %v2458, %v2624
    %v2626 = vpop.f32.mrb[0].mxu0
    %2627 = vmatprep.mubr.bf16.mxu0 0
    %2628 = vmatmul.mubr.bf16.gmra.mrb[0].mxu0 %v2453
    %v2629 = vpop.f32.mrb[0].mxu0
    %v2630 = vadd.f32 %v2458, %v2629
    %v2631 = vpop.f32.mrb[0].mxu0
    %v2632 = vpop.f32.mrb[0].mxu0
    %v2633 = vadd.f32 %v2458, %v2632
    %v2634 = vpop.f32.mrb[0].mxu0
    %2635 = vmatprep.mubr.bf16.mxu0 0
    %2636 = vmatmul.mubr.bf16.gmra.mrb[0].mxu0 %v2454
    %v2637 = vpop.f32.mrb[0].mxu0
    %v2638 = vadd.f32 %v2458, %v2637
    %v2639 = vpop.f32.mrb[0].mxu0
    %v2640 = vpop.f32.mrb[0].mxu0
    %v2641 = vadd.f32 %v2458, %v2640
    %v2642 = vpop.f32.mrb[0].mxu0
    %2643 = vmatprep.mubr.bf16.mxu0 0
    %2644 = vmatmul.mubr.bf16.gmra.mrb[0].mxu0 %v2455
    %v2645 = vpop.f32.mrb[0].mxu0
    %v2646 = vadd.f32 %v2458, %v2645
    %v2647 = vpop.f32.mrb[0].mxu0
    %v2648 = vpop.f32.mrb[0].mxu0
    %v2649 = vadd.f32 %v2458, %v2648
    %v2650 = vpop.f32.mrb[0].mxu0
    %2651 = vmatprep.mubr.bf16.mxu0 0
    %2652 = vmatmul.mubr.bf16.gmra.mrb[0].mxu0 %v2456
    %v2653 = vpop.f32.mrb[0].mxu0
    %v2654 = vadd.f32 %v2458, %v2653
    %v2655 = vpop.f32.mrb[0].mxu0
    %v2656 = vpop.f32.mrb[0].mxu0
    %v2657 = vadd.f32 %v2458, %v2656
    %v2658 = vpop.f32.mrb[0].mxu0
    %2659 = vmatprep.mubr.bf16.mxu0 0
    %2660 = vmatmul.mubr.bf16.gmra.mrb[0].mxu0 %v2457
    %v2661 = vpop.f32.mrb[0].mxu0
    %v2662 = vadd.f32 %v2458, %v2661
    %v2663 = vpop.f32.mrb[0].mxu0
    %v2664 = vpop.f32.mrb[0].mxu0
    %v2665 = vadd.f32 %v2458, %v2664
    %v2666 = vpop.f32.mrb[0].mxu0
    %2667 = vdwg.mxu0
    %v2668 = vld [vmem:[%s6] sm:$0xf]
    %v2669 = vld [vmem:[%s6 + $0x4] sm:$0xf]
    %v2670 = vld [vmem:[%s6 + $0x8] sm:$0xf]
    %v2671 = vld [vmem:[%s6 + $0xc] sm:$0xf]
    %v2672 = vpack.c.bf16 %v2545, %v2542
    %v2673 = vpack.c.bf16 %v2553, %v2550
    %v2674 = vpack.c.bf16 %v2561, %v2558
    %v2675 = vpack.c.bf16 %v2569, %v2566
    %v2676 = vpack.c.bf16 %v2577, %v2574
    %v2677 = vpack.c.bf16 %v2585, %v2582
    %v2678 = vpack.c.bf16 %v2593, %v2590
    %v2679 = vpack.c.bf16 %v2601, %v2598
    %v2680 = vpack.c.bf16 %v2609, %v2606
    %v2681 = vpack.c.bf16 %v2617, %v2614
    %v2682 = vpack.c.bf16 %v2625, %v2622
    %v2683 = vpack.c.bf16 %v2633, %v2630
    %v2684 = vpack.c.bf16 %v2641, %v2638
    %v2685 = vpack.c.bf16 %v2649, %v2646
    %v2686 = vpack.c.bf16 %v2657, %v2654
    %v2687 = vpack.c.bf16 %v2665, %v2662
    %v2688 = vld [vmem:[%s8 + $0x4] ss:$0 sm:$0xff]
    %v2693 = vunpack.c.l.b16 %v2668
    %v2694 = vunpack.c.l.b16 %v2669
    %v2695 = vunpack.c.l.b16 %v2670
    %v2696 = vunpack.c.l.b16 %v2671
    %v2697 = vpack.c.b16 %v2694, %v2693
    %v2698 = vpack.c.b16 %v2696, %v2695
    %v2702 = vsel %vm1960, %v2672, 0
    %v2705 = vsel %vm1960, %v2673, 0
    %v2708 = vsel %vm1960, %v2674, 0
    %v2711 = vsel %vm1960, %v2675, 0
    %v2714 = vsel %vm1960, %v2676, 0
    %v2717 = vsel %vm1960, %v2677, 0
    %v2720 = vsel %vm1960, %v2678, 0
    %v2723 = vsel %vm1960, %v2679, 0
    %v2726 = vsel %vm1960, %v2680, 0
    %v2729 = vsel %vm1960, %v2681, 0
    %v2732 = vsel %vm1960, %v2682, 0
    %v2735 = vsel %vm1960, %v2683, 0
    %v2738 = vsel %vm1960, %v2684, 0
    %v2741 = vsel %vm1960, %v2685, 0
    %v2744 = vsel %vm1960, %v2686, 0
    %v2747 = vsel %vm1960, %v2687, 0
    %2749 = vmatprep.subr.bf16.mxu0 0
    %2750 = vmatpush1.bf16.msra.mxu0 %v2697
    %2751 = vmatprep.subr.bf16.mxu0 0
    %2752 = vmatpush1.bf16.msra.mxu0 %v2698
    %2753 = vmatprep.subr.bf16.mxu0 0
    %2754 = vmatpush1.bf16.msra.mxu0 0
    %2755 = vmatprep.subr.bf16.mxu0 0
    %2756 = vmatpush1.bf16.msra.mxu0 0
    %2757 = vmatprep.subr.bf16.mxu0 0
    %2758 = vmatpush1.bf16.msra.mxu0 0
    %2759 = vmatprep.subr.bf16.mxu0 0
    %2760 = vmatpush1.bf16.msra.mxu0 0
    %2761 = vmatprep.subr.bf16.mxu0 0
    %2762 = vmatpush1.bf16.msra.mxu0 0
    %2763 = vmatprep.subr.bf16.mxu0 0
    %2764 = vmatpush1.bf16.msra.mxu0 0
    %2765 = vmatprep.subr.bf16.mxu0 0
    %2766 = vmatpush1.bf16.msra.mxu0 0
    %2767 = vmatprep.subr.bf16.mxu0 0
    %2768 = vmatpush1.bf16.msra.mxu0 0
    %2769 = vmatprep.subr.bf16.mxu0 0
    %2770 = vmatpush1.bf16.msra.mxu0 0
    %2771 = vmatprep.subr.bf16.mxu0 0
    %2772 = vmatpush1.bf16.msra.mxu0 0
    %2773 = vmatprep.subr.bf16.mxu0 0
    %2774 = vmatpush1.bf16.msra.mxu0 0
    %2775 = vmatprep.subr.bf16.mxu0 0
    %2776 = vmatpush1.bf16.msra.mxu0 0
    %2777 = vmatprep.subr.bf16.mxu0 0
    %2778 = vmatpush1.bf16.msra.mxu0 0
    %2779 = vmatprep.subr.bf16.mxu0 0
    %2780 = vmatpush1.bf16.msra.mxu0 0
    %2781 = vmatprep.mubr.bf16.mxu0 0
    %2782 = vmatmul.mubr.bf16.gmra.mrb[0].mxu0 %v2702
    %v2783 = vpop.f32.mrb[0].mxu0
    %v2784 = vadd.f32 %v2688, %v2783
    %v2785 = vpop.f32.mrb[0].mxu0
    %v2786 = vpop.f32.mrb[0].mxu0
    %v2787 = vadd.f32 %v2688, %v2786
    %v2788 = vpop.f32.mrb[0].mxu0
    %2789 = vmatprep.mubr.bf16.mxu0 0
    %2790 = vmatmul.mubr.bf16.gmra.mrb[0].mxu0 %v2705
    %v2791 = vpop.f32.mrb[0].mxu0
    %v2792 = vadd.f32 %v2688, %v2791
    %v2793 = vpop.f32.mrb[0].mxu0
    %v2794 = vpop.f32.mrb[0].mxu0
    %v2795 = vadd.f32 %v2688, %v2794
    %v2796 = vpop.f32.mrb[0].mxu0
    %2797 = vmatprep.mubr.bf16.mxu0 0
    %2798 = vmatmul.mubr.bf16.gmra.mrb[0].mxu0 %v2708
    %v2799 = vpop.f32.mrb[0].mxu0
    %v2800 = vadd.f32 %v2688, %v2799
    %v2801 = vpop.f32.mrb[0].mxu0
    %v2802 = vpop.f32.mrb[0].mxu0
    %v2803 = vadd.f32 %v2688, %v2802
    %v2804 = vpop.f32.mrb[0].mxu0
    %2805 = vmatprep.mubr.bf16.mxu0 0
    %2806 = vmatmul.mubr.bf16.gmra.mrb[0].mxu0 %v2711
    %v2807 = vpop.f32.mrb[0].mxu0
    %v2808 = vadd.f32 %v2688, %v2807
    %v2809 = vpop.f32.mrb[0].mxu0
    %v2810 = vpop.f32.mrb[0].mxu0
    %v2811 = vadd.f32 %v2688, %v2810
    %v2812 = vpop.f32.mrb[0].mxu0
    %2813 = vmatprep.mubr.bf16.mxu0 0
    %2814 = vmatmul.mubr.bf16.gmra.mrb[0].mxu0 %v2714
    %v2815 = vpop.f32.mrb[0].mxu0
    %v2816 = vadd.f32 %v2688, %v2815
    %v2817 = vpop.f32.mrb[0].mxu0
    %v2818 = vpop.f32.mrb[0].mxu0
    %v2819 = vadd.f32 %v2688, %v2818
    %v2820 = vpop.f32.mrb[0].mxu0
    %2821 = vmatprep.mubr.bf16.mxu0 0
    %2822 = vmatmul.mubr.bf16.gmra.mrb[0].mxu0 %v2717
    %v2823 = vpop.f32.mrb[0].mxu0
    %v2824 = vadd.f32 %v2688, %v2823
    %v2825 = vpop.f32.mrb[0].mxu0
    %v2826 = vpop.f32.mrb[0].mxu0
    %v2827 = vadd.f32 %v2688, %v2826
    %v2828 = vpop.f32.mrb[0].mxu0
    %2829 = vmatprep.mubr.bf16.mxu0 0
    %2830 = vmatmul.mubr.bf16.gmra.mrb[0].mxu0 %v2720
    %v2831 = vpop.f32.mrb[0].mxu0
    %v2832 = vadd.f32 %v2688, %v2831
    %v2833 = vpop.f32.mrb[0].mxu0
    %v2834 = vpop.f32.mrb[0].mxu0
    %v2835 = vadd.f32 %v2688, %v2834
    %v2836 = vpop.f32.mrb[0].mxu0
    %2837 = vmatprep.mubr.bf16.mxu0 0
    %2838 = vmatmul.mubr.bf16.gmra.mrb[0].mxu0 %v2723
    %v2839 = vpop.f32.mrb[0].mxu0
    %v2840 = vadd.f32 %v2688, %v2839
    %v2841 = vpop.f32.mrb[0].mxu0
    %v2842 = vpop.f32.mrb[0].mxu0
    %v2843 = vadd.f32 %v2688, %v2842
    %v2844 = vpop.f32.mrb[0].mxu0
    %2845 = vmatprep.mubr.bf16.mxu0 0
    %2846 = vmatmul.mubr.bf16.gmra.mrb[0].mxu0 %v2726
    %v2847 = vpop.f32.mrb[0].mxu0
    %v2848 = vadd.f32 %v2688, %v2847
    %v2849 = vpop.f32.mrb[0].mxu0
    %v2850 = vpop.f32.mrb[0].mxu0
    %v2851 = vadd.f32 %v2688, %v2850
    %v2852 = vpop.f32.mrb[0].mxu0
    %2853 = vmatprep.mubr.bf16.mxu0 0
    %2854 = vmatmul.mubr.bf16.gmra.mrb[0].mxu0 %v2729
    %v2855 = vpop.f32.mrb[0].mxu0
    %v2856 = vadd.f32 %v2688, %v2855
    %v2857 = vpop.f32.mrb[0].mxu0
    %v2858 = vpop.f32.mrb[0].mxu0
    %v2859 = vadd.f32 %v2688, %v2858
    %v2860 = vpop.f32.mrb[0].mxu0
    %2861 = vmatprep.mubr.bf16.mxu0 0
    %2862 = vmatmul.mubr.bf16.gmra.mrb[0].mxu0 %v2732
    %v2863 = vpop.f32.mrb[0].mxu0
    %v2864 = vadd.f32 %v2688, %v2863
    %v2865 = vpop.f32.mrb[0].mxu0
    %v2866 = vpop.f32.mrb[0].mxu0
    %v2867 = vadd.f32 %v2688, %v2866
    %v2868 = vpop.f32.mrb[0].mxu0
    %2869 = vmatprep.mubr.bf16.mxu0 0
    %2870 = vmatmul.mubr.bf16.gmra.mrb[0].mxu0 %v2735
    %v2871 = vpop.f32.mrb[0].mxu0
    %v2872 = vadd.f32 %v2688, %v2871
    %v2873 = vpop.f32.mrb[0].mxu0
    %v2874 = vpop.f32.mrb[0].mxu0
    %v2875 = vadd.f32 %v2688, %v2874
    %v2876 = vpop.f32.mrb[0].mxu0
    %2877 = vmatprep.mubr.bf16.mxu0 0
    %2878 = vmatmul.mubr.bf16.gmra.mrb[0].mxu0 %v2738
    %v2879 = vpop.f32.mrb[0].mxu0
    %v2880 = vadd.f32 %v2688, %v2879
    %v2881 = vpop.f32.mrb[0].mxu0
    %v2882 = vpop.f32.mrb[0].mxu0
    %v2883 = vadd.f32 %v2688, %v2882
    %v2884 = vpop.f32.mrb[0].mxu0
    %2885 = vmatprep.mubr.bf16.mxu0 0
    %2886 = vmatmul.mubr.bf16.gmra.mrb[0].mxu0 %v2741
    %v2887 = vpop.f32.mrb[0].mxu0
    %v2888 = vadd.f32 %v2688, %v2887
    %v2889 = vpop.f32.mrb[0].mxu0
    %v2890 = vpop.f32.mrb[0].mxu0
    %v2891 = vadd.f32 %v2688, %v2890
    %v2892 = vpop.f32.mrb[0].mxu0
    %2893 = vmatprep.mubr.bf16.mxu0 0
    %2894 = vmatmul.mubr.bf16.gmra.mrb[0].mxu0 %v2744
    %v2895 = vpop.f32.mrb[0].mxu0
    %v2896 = vadd.f32 %v2688, %v2895
    %v2897 = vpop.f32.mrb[0].mxu0
    %v2898 = vpop.f32.mrb[0].mxu0
    %v2899 = vadd.f32 %v2688, %v2898
    %v2900 = vpop.f32.mrb[0].mxu0
    %2901 = vmatprep.mubr.bf16.mxu0 0
    %2902 = vmatmul.mubr.bf16.gmra.mrb[0].mxu0 %v2747
    %v2903 = vpop.f32.mrb[0].mxu0
    %v2904 = vadd.f32 %v2688, %v2903
    %v2905 = vpop.f32.mrb[0].mxu0
    %v2906 = vpop.f32.mrb[0].mxu0
    %v2907 = vadd.f32 %v2688, %v2906
    %v2908 = vpop.f32.mrb[0].mxu0
    %2909 = vdwg.mxu0
    %v2910 = vmax.f32 %v2784, 0.0
    %v2911 = vmax.f32 %v2787, 0.0
    %v2912 = vmax.f32 %v2792, 0.0
    %v2913 = vmax.f32 %v2795, 0.0
    %v2914 = vmax.f32 %v2800, 0.0
    %v2915 = vmax.f32 %v2803, 0.0
    %v2916 = vmax.f32 %v2808, 0.0
    %v2917 = vmax.f32 %v2811, 0.0
    %v2918 = vmax.f32 %v2816, 0.0
    %v2919 = vmax.f32 %v2819, 0.0
    %v2920 = vmax.f32 %v2824, 0.0
    %v2921 = vmax.f32 %v2827, 0.0
    %v2922 = vmax.f32 %v2832, 0.0
    %v2923 = vmax.f32 %v2835, 0.0
    %v2924 = vmax.f32 %v2840, 0.0
    %v2925 = vmax.f32 %v2843, 0.0
    %v2926 = vmax.f32 %v2848, 0.0
    %v2927 = vmax.f32 %v2851, 0.0
    %v2928 = vmax.f32 %v2856, 0.0
    %v2929 = vmax.f32 %v2859, 0.0
    %v2930 = vmax.f32 %v2864, 0.0
    %v2931 = vmax.f32 %v2867, 0.0
    %v2932 = vmax.f32 %v2872, 0.0
    %v2933 = vmax.f32 %v2875, 0.0
    %v2934 = vmax.f32 %v2880, 0.0
    %v2935 = vmax.f32 %v2883, 0.0
    %v2936 = vmax.f32 %v2888, 0.0
    %v2937 = vmax.f32 %v2891, 0.0
    %v2938 = vmax.f32 %v2896, 0.0
    %v2939 = vmax.f32 %v2899, 0.0
    %v2940 = vmax.f32 %v2904, 0.0
    %v2941 = vmax.f32 %v2907, 0.0
    %v2942 = vld [vmem:[#allocation8] sm:$0xff]
    %v2943 = vld [vmem:[#allocation8 + $0x8] sm:$0xff]
    %v2944 = vld [vmem:[#allocation8 + $0x10] sm:$0xff]
    %v2945 = vld [vmem:[#allocation8 + $0x18] sm:$0xff]
    %v2946 = vld [vmem:[#allocation8 + $0x20] sm:$0xff]
    %v2947 = vld [vmem:[#allocation8 + $0x28] sm:$0xff]
    %v2948 = vld [vmem:[#allocation8 + $0x30] sm:$0xff]
    %v2949 = vld [vmem:[#allocation8 + $0x38] sm:$0xff]
    %v2950 = vld [vmem:[#allocation8 + $0x40] sm:$0xff]
    %v2951 = vld [vmem:[#allocation8 + $0x48] sm:$0xff]
    %v2952 = vld [vmem:[#allocation8 + $0x50] sm:$0xff]
    %v2953 = vld [vmem:[#allocation8 + $0x58] sm:$0xff]
    %v2954 = vld [vmem:[#allocation8 + $0x60] sm:$0xff]
    %v2955 = vld [vmem:[#allocation8 + $0x68] sm:$0xff]
    %v2956 = vld [vmem:[#allocation8 + $0x70] sm:$0xff]
    %v2957 = vld [vmem:[#allocation8 + $0x78] sm:$0xff]
    %v2958 = vld [vmem:[#allocation8 + $0x80] sm:$0xff]
    %v2959 = vld [vmem:[#allocation8 + $0x88] sm:$0xff]
    %v2960 = vld [vmem:[#allocation8 + $0x90] sm:$0xff]
    %v2961 = vld [vmem:[#allocation8 + $0x98] sm:$0xff]
    %v2962 = vld [vmem:[#allocation8 + $0xa0] sm:$0xff]
    %v2963 = vld [vmem:[#allocation8 + $0xa8] sm:$0xff]
    %v2964 = vld [vmem:[#allocation8 + $0xb0] sm:$0xff]
    %v2965 = vld [vmem:[#allocation8 + $0xb8] sm:$0xff]
    %v2966 = vld [vmem:[#allocation8 + $0xc0] sm:$0xff]
    %v2967 = vld [vmem:[#allocation8 + $0xc8] sm:$0xff]
    %v2968 = vld [vmem:[#allocation8 + $0xd0] sm:$0xff]
    %v2969 = vld [vmem:[#allocation8 + $0xd8] sm:$0xff]
    %v2970 = vld [vmem:[#allocation8 + $0xe0] sm:$0xff]
    %v2971 = vld [vmem:[#allocation8 + $0xe8] sm:$0xff]
    %v2972 = vld [vmem:[#allocation8 + $0xf0] sm:$0xff]
    %v2973 = vld [vmem:[#allocation8 + $0xf8] sm:$0xff]
    %v2974 = vld [vmem:[#allocation8 + $0x100] sm:$0xff]
    %v2975 = vld [vmem:[#allocation8 + $0x108] sm:$0xff]
    %v2976 = vld [vmem:[#allocation8 + $0x110] sm:$0xff]
    %v2977 = vld [vmem:[#allocation8 + $0x118] sm:$0xff]
    %v2978 = vld [vmem:[#allocation8 + $0x120] sm:$0xff]
    %v2979 = vld [vmem:[#allocation8 + $0x128] sm:$0xff]
    %v2980 = vld [vmem:[#allocation8 + $0x130] sm:$0xff]
    %v2981 = vld [vmem:[#allocation8 + $0x138] sm:$0xff]
    %v2982 = vld [vmem:[#allocation8 + $0x140] sm:$0xff]
    %v2983 = vld [vmem:[#allocation8 + $0x148] sm:$0xff]
    %v2984 = vld [vmem:[#allocation8 + $0x150] sm:$0xff]
    %v2985 = vld [vmem:[#allocation8 + $0x158] sm:$0xff]
    %v2986 = vld [vmem:[#allocation8 + $0x160] sm:$0xff]
    %v2987 = vld [vmem:[#allocation8 + $0x168] sm:$0xff]
    %v2988 = vld [vmem:[#allocation8 + $0x170] sm:$0xff]
    %v2989 = vld [vmem:[#allocation8 + $0x178] sm:$0xff]
    %v2990 = vld [vmem:[#allocation8 + $0x180] sm:$0xff]
    %v2991 = vld [vmem:[#allocation8 + $0x188] sm:$0xff]
    %v2992 = vld [vmem:[#allocation8 + $0x190] sm:$0xff]
    %v2993 = vld [vmem:[#allocation8 + $0x198] sm:$0xff]
    %v2994 = vld [vmem:[#allocation8 + $0x1a0] sm:$0xff]
    %v2995 = vld [vmem:[#allocation8 + $0x1a8] sm:$0xff]
    %v2996 = vld [vmem:[#allocation8 + $0x1b0] sm:$0xff]
    %v2997 = vld [vmem:[#allocation8 + $0x1b8] sm:$0xff]
    %v2998 = vld [vmem:[#allocation8 + $0x1c0] sm:$0xff]
    %v2999 = vld [vmem:[#allocation8 + $0x1c8] sm:$0xff]
    %v3000 = vld [vmem:[#allocation8 + $0x1d0] sm:$0xff]
    %v3001 = vld [vmem:[#allocation8 + $0x1d8] sm:$0xff]
    %v3002 = vld [vmem:[#allocation8 + $0x1e0] sm:$0xff]
    %v3003 = vld [vmem:[#allocation8 + $0x1e8] sm:$0xff]
    %v3004 = vld [vmem:[#allocation8 + $0x1f0] sm:$0xff]
    %v3005 = vld [vmem:[#allocation8 + $0x1f8] sm:$0xff]
    %v3006 = vpack.c.bf16 %v2911, %v2910
    %v3007 = vpack.c.bf16 %v2913, %v2912
    %v3008 = vpack.c.bf16 %v2915, %v2914
    %v3009 = vpack.c.bf16 %v2917, %v2916
    %v3010 = vpack.c.bf16 %v2919, %v2918
    %v3011 = vpack.c.bf16 %v2921, %v2920
    %v3012 = vpack.c.bf16 %v2923, %v2922
    %v3013 = vpack.c.bf16 %v2925, %v2924
    %v3014 = vpack.c.bf16 %v2927, %v2926
    %v3015 = vpack.c.bf16 %v2929, %v2928
    %v3016 = vpack.c.bf16 %v2931, %v2930
    %v3017 = vpack.c.bf16 %v2933, %v2932
    %v3018 = vpack.c.bf16 %v2935, %v2934
    %v3019 = vpack.c.bf16 %v2937, %v2936
    %v3020 = vpack.c.bf16 %v2939, %v2938
    %v3021 = vpack.c.bf16 %v2941, %v2940
    %s3022 = scalar_lea.vmem %s8, 5
    %v3023 = vld [vmem:[%s3022] ss:$8 sm:$0xf]
    %v3024 = vld [vmem:[%s3022] ss:$8 sm:$0xf0]
    %v3025 = vor.u32 %v3023, %v3024
    %v3027 = vlaneseq
    %v3028 = vshrl.u32 %v3027, 7
    %v3029 = vsub.s32 0, %v3028
    %v3030 = vrot.slane %v3025, %v3029
    %v3031 = vlaneseq
    %v3032 = vshrl.u32 %v3031, 7
    %v3033 = vsub.s32 1, %v3032
    %v3034 = vrot.slane %v3025, %v3033
    %v3035 = vlaneseq
    %v3036 = vshrl.u32 %v3035, 7
    %v3037 = vsub.s32 2, %v3036
    %v3038 = vrot.slane %v3025, %v3037
    %v3039 = vlaneseq
    %v3040 = vshrl.u32 %v3039, 7
    %v3041 = vsub.s32 3, %v3040
    %v3042 = vrot.slane %v3025, %v3041
    %v3043 = vlaneseq
    %v3044 = vshrl.u32 %v3043, 7
    %v3045 = vsub.s32 4, %v3044
    %v3046 = vrot.slane %v3025, %v3045
    %v3047 = vlaneseq
    %v3048 = vshrl.u32 %v3047, 7
    %v3049 = vsub.s32 5, %v3048
    %v3050 = vrot.slane %v3025, %v3049
    %v3051 = vlaneseq
    %v3052 = vshrl.u32 %v3051, 7
    %v3053 = vsub.s32 6, %v3052
    %v3054 = vrot.slane %v3025, %v3053
    %v3055 = vlaneseq
    %v3056 = vshrl.u32 %v3055, 7
    %v3057 = vsub.s32 7, %v3056
    %v3058 = vrot.slane %v3025, %v3057
    %v3131 = vunpack.c.l.b16 %v2942
    %v3132 = vunpack.c.h.b16 %v2942
    %v3133 = vunpack.c.l.b16 %v2943
    %v3134 = vunpack.c.h.b16 %v2943
    %v3135 = vunpack.c.l.b16 %v2944
    %v3136 = vunpack.c.h.b16 %v2944
    %v3137 = vunpack.c.l.b16 %v2945
    %v3138 = vunpack.c.h.b16 %v2945
    %v3139 = vunpack.c.l.b16 %v2946
    %v3140 = vunpack.c.h.b16 %v2946
    %v3141 = vunpack.c.l.b16 %v2947
    %v3142 = vunpack.c.h.b16 %v2947
    %v3143 = vunpack.c.l.b16 %v2948
    %v3144 = vunpack.c.h.b16 %v2948
    %v3145 = vunpack.c.l.b16 %v2949
    %v3146 = vunpack.c.h.b16 %v2949
    %v3147 = vunpack.c.l.b16 %v2950
    %v3148 = vunpack.c.h.b16 %v2950
    %v3149 = vunpack.c.l.b16 %v2951
    %v3150 = vunpack.c.h.b16 %v2951
    %v3151 = vunpack.c.l.b16 %v2952
    %v3152 = vunpack.c.h.b16 %v2952
    %v3153 = vunpack.c.l.b16 %v2953
    %v3154 = vunpack.c.h.b16 %v2953
    %v3155 = vunpack.c.l.b16 %v2954
    %v3156 = vunpack.c.h.b16 %v2954
    %v3157 = vunpack.c.l.b16 %v2955
    %v3158 = vunpack.c.h.b16 %v2955
    %v3159 = vunpack.c.l.b16 %v2956
    %v3160 = vunpack.c.h.b16 %v2956
    %v3161 = vunpack.c.l.b16 %v2957
    %v3162 = vunpack.c.h.b16 %v2957
    %v3163 = vunpack.c.l.b16 %v2958
    %v3164 = vunpack.c.h.b16 %v2958
    %v3165 = vunpack.c.l.b16 %v2959
    %v3166 = vunpack.c.h.b16 %v2959
    %v3167 = vunpack.c.l.b16 %v2960
    %v3168 = vunpack.c.h.b16 %v2960
    %v3169 = vunpack.c.l.b16 %v2961
    %v3170 = vunpack.c.h.b16 %v2961
    %v3171 = vunpack.c.l.b16 %v2962
    %v3172 = vunpack.c.h.b16 %v2962
    %v3173 = vunpack.c.l.b16 %v2963
    %v3174 = vunpack.c.h.b16 %v2963
    %v3175 = vunpack.c.l.b16 %v2964
    %v3176 = vunpack.c.h.b16 %v2964
    %v3177 = vunpack.c.l.b16 %v2965
    %v3178 = vunpack.c.h.b16 %v2965
    %v3179 = vunpack.c.l.b16 %v2966
    %v3180 = vunpack.c.h.b16 %v2966
    %v3181 = vunpack.c.l.b16 %v2967
    %v3182 = vunpack.c.h.b16 %v2967
    %v3183 = vunpack.c.l.b16 %v2968
    %v3184 = vunpack.c.h.b16 %v2968
    %v3185 = vunpack.c.l.b16 %v2969
    %v3186 = vunpack.c.h.b16 %v2969
    %v3187 = vunpack.c.l.b16 %v2970
    %v3188 = vunpack.c.h.b16 %v2970
    %v3189 = vunpack.c.l.b16 %v2971
    %v3190 = vunpack.c.h.b16 %v2971
    %v3191 = vunpack.c.l.b16 %v2972
    %v3192 = vunpack.c.h.b16 %v2972
    %v3193 = vunpack.c.l.b16 %v2973
    %v3194 = vunpack.c.h.b16 %v2973
    %v3195 = vunpack.c.l.b16 %v2974
    %v3196 = vunpack.c.h.b16 %v2974
    %v3197 = vunpack.c.l.b16 %v2975
    %v3198 = vunpack.c.h.b16 %v2975
    %v3199 = vunpack.c.l.b16 %v2976
    %v3200 = vunpack.c.h.b16 %v2976
    %v3201 = vunpack.c.l.b16 %v2977
    %v3202 = vunpack.c.h.b16 %v2977
    %v3203 = vunpack.c.l.b16 %v2978
    %v3204 = vunpack.c.h.b16 %v2978
    %v3205 = vunpack.c.l.b16 %v2979
    %v3206 = vunpack.c.h.b16 %v2979
    %v3207 = vunpack.c.l.b16 %v2980
    %v3208 = vunpack.c.h.b16 %v2980
    %v3209 = vunpack.c.l.b16 %v2981
    %v3210 = vunpack.c.h.b16 %v2981
    %v3211 = vunpack.c.l.b16 %v2982
    %v3212 = vunpack.c.h.b16 %v2982
    %v3213 = vunpack.c.l.b16 %v2983
    %v3214 = vunpack.c.h.b16 %v2983
    %v3215 = vunpack.c.l.b16 %v2984
    %v3216 = vunpack.c.h.b16 %v2984
    %v3217 = vunpack.c.l.b16 %v2985
    %v3218 = vunpack.c.h.b16 %v2985
    %v3219 = vunpack.c.l.b16 %v2986
    %v3220 = vunpack.c.h.b16 %v2986
    %v3221 = vunpack.c.l.b16 %v2987
    %v3222 = vunpack.c.h.b16 %v2987
    %v3223 = vunpack.c.l.b16 %v2988
    %v3224 = vunpack.c.h.b16 %v2988
    %v3225 = vunpack.c.l.b16 %v2989
    %v3226 = vunpack.c.h.b16 %v2989
    %v3227 = vunpack.c.l.b16 %v2990
    %v3228 = vunpack.c.h.b16 %v2990
    %v3229 = vunpack.c.l.b16 %v2991
    %v3230 = vunpack.c.h.b16 %v2991
    %v3231 = vunpack.c.l.b16 %v2992
    %v3232 = vunpack.c.h.b16 %v2992
    %v3233 = vunpack.c.l.b16 %v2993
    %v3234 = vunpack.c.h.b16 %v2993
    %v3235 = vunpack.c.l.b16 %v2994
    %v3236 = vunpack.c.h.b16 %v2994
    %v3237 = vunpack.c.l.b16 %v2995
    %v3238 = vunpack.c.h.b16 %v2995
    %v3239 = vunpack.c.l.b16 %v2996
    %v3240 = vunpack.c.h.b16 %v2996
    %v3241 = vunpack.c.l.b16 %v2997
    %v3242 = vunpack.c.h.b16 %v2997
    %v3243 = vunpack.c.l.b16 %v2998
    %v3244 = vunpack.c.h.b16 %v2998
    %v3245 = vunpack.c.l.b16 %v2999
    %v3246 = vunpack.c.h.b16 %v2999
    %v3247 = vunpack.c.l.b16 %v3000
    %v3248 = vunpack.c.h.b16 %v3000
    %v3249 = vunpack.c.l.b16 %v3001
    %v3250 = vunpack.c.h.b16 %v3001
    %v3251 = vunpack.c.l.b16 %v3002
    %v3252 = vunpack.c.h.b16 %v3002
    %v3253 = vunpack.c.l.b16 %v3003
    %v3254 = vunpack.c.h.b16 %v3003
    %v3255 = vunpack.c.l.b16 %v3004
    %v3256 = vunpack.c.h.b16 %v3004
    %v3257 = vunpack.c.l.b16 %v3005
    %v3258 = vunpack.c.h.b16 %v3005
    %v3259 = vpack.c.b16 %v3139, %v3131
    %v3260 = vpack.c.b16 %v3140, %v3132
    %v3261 = vpack.c.b16 %v3141, %v3133
    %v3262 = vpack.c.b16 %v3142, %v3134
    %v3263 = vpack.c.b16 %v3143, %v3135
    %v3264 = vpack.c.b16 %v3144, %v3136
    %v3265 = vpack.c.b16 %v3145, %v3137
    %v3266 = vpack.c.b16 %v3146, %v3138
    %v3267 = vpack.c.b16 %v3155, %v3147
    %v3268 = vpack.c.b16 %v3156, %v3148
    %v3269 = vpack.c.b16 %v3157, %v3149
    %v3270 = vpack.c.b16 %v3158, %v3150
    %v3271 = vpack.c.b16 %v3159, %v3151
    %v3272 = vpack.c.b16 %v3160, %v3152
    %v3273 = vpack.c.b16 %v3161, %v3153
    %v3274 = vpack.c.b16 %v3162, %v3154
    %v3275 = vpack.c.b16 %v3171, %v3163
    %v3276 = vpack.c.b16 %v3172, %v3164
    %v3277 = vpack.c.b16 %v3173, %v3165
    %v3278 = vpack.c.b16 %v3174, %v3166
    %v3279 = vpack.c.b16 %v3175, %v3167
    %v3280 = vpack.c.b16 %v3176, %v3168
    %v3281 = vpack.c.b16 %v3177, %v3169
    %v3282 = vpack.c.b16 %v3178, %v3170
    %v3283 = vpack.c.b16 %v3187, %v3179
    %v3284 = vpack.c.b16 %v3188, %v3180
    %v3285 = vpack.c.b16 %v3189, %v3181
    %v3286 = vpack.c.b16 %v3190, %v3182
    %v3287 = vpack.c.b16 %v3191, %v3183
    %v3288 = vpack.c.b16 %v3192, %v3184
    %v3289 = vpack.c.b16 %v3193, %v3185
    %v3290 = vpack.c.b16 %v3194, %v3186
    %v3291 = vpack.c.b16 %v3203, %v3195
    %v3292 = vpack.c.b16 %v3204, %v3196
    %v3293 = vpack.c.b16 %v3205, %v3197
    %v3294 = vpack.c.b16 %v3206, %v3198
    %v3295 = vpack.c.b16 %v3207, %v3199
    %v3296 = vpack.c.b16 %v3208, %v3200
    %v3297 = vpack.c.b16 %v3209, %v3201
    %v3298 = vpack.c.b16 %v3210, %v3202
    %v3299 = vpack.c.b16 %v3219, %v3211
    %v3300 = vpack.c.b16 %v3220, %v3212
    %v3301 = vpack.c.b16 %v3221, %v3213
    %v3302 = vpack.c.b16 %v3222, %v3214
    %v3303 = vpack.c.b16 %v3223, %v3215
    %v3304 = vpack.c.b16 %v3224, %v3216
    %v3305 = vpack.c.b16 %v3225, %v3217
    %v3306 = vpack.c.b16 %v3226, %v3218
    %v3307 = vpack.c.b16 %v3235, %v3227
    %v3308 = vpack.c.b16 %v3236, %v3228
    %v3309 = vpack.c.b16 %v3237, %v3229
    %v3310 = vpack.c.b16 %v3238, %v3230
    %v3311 = vpack.c.b16 %v3239, %v3231
    %v3312 = vpack.c.b16 %v3240, %v3232
    %v3313 = vpack.c.b16 %v3241, %v3233
    %v3314 = vpack.c.b16 %v3242, %v3234
    %v3315 = vpack.c.b16 %v3251, %v3243
    %v3316 = vpack.c.b16 %v3252, %v3244
    %v3317 = vpack.c.b16 %v3253, %v3245
    %v3318 = vpack.c.b16 %v3254, %v3246
    %v3319 = vpack.c.b16 %v3255, %v3247
    %v3320 = vpack.c.b16 %v3256, %v3248
    %v3321 = vpack.c.b16 %v3257, %v3249
    %v3322 = vpack.c.b16 %v3258, %v3250
    %3387 = vmatprep.subr.bf16.mxu0 %v3260
    %3388 = vmatpush1.bf16.msra.mxu0 %v3259
    %3389 = vmatprep.subr.bf16.mxu0 %v3268
    %3390 = vmatpush1.bf16.msra.mxu0 %v3267
    %3391 = vmatprep.subr.bf16.mxu0 %v3276
    %3392 = vmatpush1.bf16.msra.mxu0 %v3275
    %3393 = vmatprep.subr.bf16.mxu0 %v3284
    %3394 = vmatpush1.bf16.msra.mxu0 %v3283
    %3395 = vmatprep.subr.bf16.mxu0 %v3292
    %3396 = vmatpush1.bf16.msra.mxu0 %v3291
    %3397 = vmatprep.subr.bf16.mxu0 %v3300
    %3398 = vmatpush1.bf16.msra.mxu0 %v3299
    %3399 = vmatprep.subr.bf16.mxu0 %v3308
    %3400 = vmatpush1.bf16.msra.mxu0 %v3307
    %3401 = vmatprep.subr.bf16.mxu0 %v3316
    %3402 = vmatpush1.bf16.msra.mxu0 %v3315
    %3403 = vmatprep.subr.bf16.mxu0 0
    %3404 = vmatpush1.bf16.msra.mxu0 0
    %3405 = vmatprep.subr.bf16.mxu0 0
    %3406 = vmatpush1.bf16.msra.mxu0 0
    %3407 = vmatprep.subr.bf16.mxu0 0
    %3408 = vmatpush1.bf16.msra.mxu0 0
    %3409 = vmatprep.subr.bf16.mxu0 0
    %3410 = vmatpush1.bf16.msra.mxu0 0
    %3411 = vmatprep.subr.bf16.mxu0 0
    %3412 = vmatpush1.bf16.msra.mxu0 0
    %3413 = vmatprep.subr.bf16.mxu0 0
    %3414 = vmatpush1.bf16.msra.mxu0 0
    %3415 = vmatprep.subr.bf16.mxu0 0
    %3416 = vmatpush1.bf16.msra.mxu0 0
    %3417 = vmatprep.subr.bf16.mxu0 0
    %3418 = vmatpush1.bf16.msra.mxu0 0
    %3419 = vmatprep.mubr.bf16.mxu0 0
    %3420 = vmatmul.mubr.bf16.gmra.mrb[0].mxu0 %v3006
    %v3421 = vpop.f32.mrb[0].mxu0
    %v3422 = vadd.f32 %v3030, %v3421
    %v3423 = vpop.f32.mrb[0].mxu0
    %v3424 = vadd.f32 %v3034, %v3423
    %v3425 = vpop.f32.mrb[0].mxu0
    %v3426 = vadd.f32 %v3030, %v3425
    %v3427 = vpop.f32.mrb[0].mxu0
    %v3428 = vadd.f32 %v3034, %v3427
    %3429 = vmatprep.mubr.bf16.mxu0 0
    %3430 = vmatmul.mubr.bf16.gmra.mrb[0].mxu0 %v3007
    %v3431 = vpop.f32.mrb[0].mxu0
    %v3432 = vadd.f32 %v3030, %v3431
    %v3433 = vpop.f32.mrb[0].mxu0
    %v3434 = vadd.f32 %v3034, %v3433
    %v3435 = vpop.f32.mrb[0].mxu0
    %v3436 = vadd.f32 %v3030, %v3435
    %v3437 = vpop.f32.mrb[0].mxu0
    %v3438 = vadd.f32 %v3034, %v3437
    %3439 = vmatprep.mubr.bf16.mxu0 0
    %3440 = vmatmul.mubr.bf16.gmra.mrb[0].mxu0 %v3008
    %v3441 = vpop.f32.mrb[0].mxu0
    %v3442 = vadd.f32 %v3030, %v3441
    %v3443 = vpop.f32.mrb[0].mxu0
    %v3444 = vadd.f32 %v3034, %v3443
    %v3445 = vpop.f32.mrb[0].mxu0
    %v3446 = vadd.f32 %v3030, %v3445
    %v3447 = vpop.f32.mrb[0].mxu0
    %v3448 = vadd.f32 %v3034, %v3447
    %3449 = vmatprep.mubr.bf16.mxu0 0
    %3450 = vmatmul.mubr.bf16.gmra.mrb[0].mxu0 %v3009
    %v3451 = vpop.f32.mrb[0].mxu0
    %v3452 = vadd.f32 %v3030, %v3451
    %v3453 = vpop.f32.mrb[0].mxu0
    %v3454 = vadd.f32 %v3034, %v3453
    %v3455 = vpop.f32.mrb[0].mxu0
    %v3456 = vadd.f32 %v3030, %v3455
    %v3457 = vpop.f32.mrb[0].mxu0
    %v3458 = vadd.f32 %v3034, %v3457
    %3459 = vmatprep.mubr.bf16.mxu0 0
    %3460 = vmatmul.mubr.bf16.gmra.mrb[0].mxu0 %v3010
    %v3461 = vpop.f32.mrb[0].mxu0
    %v3462 = vadd.f32 %v3030, %v3461
    %v3463 = vpop.f32.mrb[0].mxu0
    %v3464 = vadd.f32 %v3034, %v3463
    %v3465 = vpop.f32.mrb[0].mxu0
    %v3466 = vadd.f32 %v3030, %v3465
    %v3467 = vpop.f32.mrb[0].mxu0
    %v3468 = vadd.f32 %v3034, %v3467
    %3469 = vmatprep.mubr.bf16.mxu0 0
    %3470 = vmatmul.mubr.bf16.gmra.mrb[0].mxu0 %v3011
    %v3471 = vpop.f32.mrb[0].mxu0
    %v3472 = vadd.f32 %v3030, %v3471
    %v3473 = vpop.f32.mrb[0].mxu0
    %v3474 = vadd.f32 %v3034, %v3473
    %v3475 = vpop.f32.mrb[0].mxu0
    %v3476 = vadd.f32 %v3030, %v3475
    %v3477 = vpop.f32.mrb[0].mxu0
    %v3478 = vadd.f32 %v3034, %v3477
    %3479 = vmatprep.mubr.bf16.mxu0 0
    %3480 = vmatmul.mubr.bf16.gmra.mrb[0].mxu0 %v3012
    %v3481 = vpop.f32.mrb[0].mxu0
    %v3482 = vadd.f32 %v3030, %v3481
    %v3483 = vpop.f32.mrb[0].mxu0
    %v3484 = vadd.f32 %v3034, %v3483
    %v3485 = vpop.f32.mrb[0].mxu0
    %v3486 = vadd.f32 %v3030, %v3485
    %v3487 = vpop.f32.mrb[0].mxu0
    %v3488 = vadd.f32 %v3034, %v3487
    %3489 = vmatprep.mubr.bf16.mxu0 0
    %3490 = vmatmul.mubr.bf16.gmra.mrb[0].mxu0 %v3013
    %v3491 = vpop.f32.mrb[0].mxu0
    %v3492 = vadd.f32 %v3030, %v3491
    %v3493 = vpop.f32.mrb[0].mxu0
    %v3494 = vadd.f32 %v3034, %v3493
    %v3495 = vpop.f32.mrb[0].mxu0
    %v3496 = vadd.f32 %v3030, %v3495
    %v3497 = vpop.f32.mrb[0].mxu0
    %v3498 = vadd.f32 %v3034, %v3497
    %3499 = vmatprep.mubr.bf16.mxu0 0
    %3500 = vmatmul.mubr.bf16.gmra.mrb[0].mxu0 %v3014
    %v3501 = vpop.f32.mrb[0].mxu0
    %v3502 = vadd.f32 %v3030, %v3501
    %v3503 = vpop.f32.mrb[0].mxu0
    %v3504 = vadd.f32 %v3034, %v3503
    %v3505 = vpop.f32.mrb[0].mxu0
    %v3506 = vadd.f32 %v3030, %v3505
    %v3507 = vpop.f32.mrb[0].mxu0
    %v3508 = vadd.f32 %v3034, %v3507
    %3509 = vmatprep.mubr.bf16.mxu0 0
    %3510 = vmatmul.mubr.bf16.gmra.mrb[0].mxu0 %v3015
    %v3511 = vpop.f32.mrb[0].mxu0
    %v3512 = vadd.f32 %v3030, %v3511
    %v3513 = vpop.f32.mrb[0].mxu0
    %v3514 = vadd.f32 %v3034, %v3513
    %v3515 = vpop.f32.mrb[0].mxu0
    %v3516 = vadd.f32 %v3030, %v3515
    %v3517 = vpop.f32.mrb[0].mxu0
    %v3518 = vadd.f32 %v3034, %v3517
    %3519 = vmatprep.mubr.bf16.mxu0 0
    %3520 = vmatmul.mubr.bf16.gmra.mrb[0].mxu0 %v3016
    %v3521 = vpop.f32.mrb[0].mxu0
    %v3522 = vadd.f32 %v3030, %v3521
    %v3523 = vpop.f32.mrb[0].mxu0
    %v3524 = vadd.f32 %v3034, %v3523
    %v3525 = vpop.f32.mrb[0].mxu0
    %v3526 = vadd.f32 %v3030, %v3525
    %v3527 = vpop.f32.mrb[0].mxu0
    %v3528 = vadd.f32 %v3034, %v3527
    %3529 = vmatprep.mubr.bf16.mxu0 0
    %3530 = vmatmul.mubr.bf16.gmra.mrb[0].mxu0 %v3017
    %v3531 = vpop.f32.mrb[0].mxu0
    %v3532 = vadd.f32 %v3030, %v3531
    %v3533 = vpop.f32.mrb[0].mxu0
    %v3534 = vadd.f32 %v3034, %v3533
    %v3535 = vpop.f32.mrb[0].mxu0
    %v3536 = vadd.f32 %v3030, %v3535
    %v3537 = vpop.f32.mrb[0].mxu0
    %v3538 = vadd.f32 %v3034, %v3537
    %3539 = vmatprep.mubr.bf16.mxu0 0
    %3540 = vmatmul.mubr.bf16.gmra.mrb[0].mxu0 %v3018
    %v3541 = vpop.f32.mrb[0].mxu0
    %v3542 = vadd.f32 %v3030, %v3541
    %v3543 = vpop.f32.mrb[0].mxu0
    %v3544 = vadd.f32 %v3034, %v3543
    %v3545 = vpop.f32.mrb[0].mxu0
    %v3546 = vadd.f32 %v3030, %v3545
    %v3547 = vpop.f32.mrb[0].mxu0
    %v3548 = vadd.f32 %v3034, %v3547
    %3549 = vmatprep.mubr.bf16.mxu0 0
    %3550 = vmatmul.mubr.bf16.gmra.mrb[0].mxu0 %v3019
    %v3551 = vpop.f32.mrb[0].mxu0
    %v3552 = vadd.f32 %v3030, %v3551
    %v3553 = vpop.f32.mrb[0].mxu0
    %v3554 = vadd.f32 %v3034, %v3553
    %v3555 = vpop.f32.mrb[0].mxu0
    %v3556 = vadd.f32 %v3030, %v3555
    %v3557 = vpop.f32.mrb[0].mxu0
    %v3558 = vadd.f32 %v3034, %v3557
    %3559 = vmatprep.mubr.bf16.mxu0 0
    %3560 = vmatmul.mubr.bf16.gmra.mrb[0].mxu0 %v3020
    %v3561 = vpop.f32.mrb[0].mxu0
    %v3562 = vadd.f32 %v3030, %v3561
    %v3563 = vpop.f32.mrb[0].mxu0
    %v3564 = vadd.f32 %v3034, %v3563
    %v3565 = vpop.f32.mrb[0].mxu0
    %v3566 = vadd.f32 %v3030, %v3565
    %v3567 = vpop.f32.mrb[0].mxu0
    %v3568 = vadd.f32 %v3034, %v3567
    %3569 = vmatprep.mubr.bf16.mxu0 0
    %3570 = vmatmul.mubr.bf16.gmra.mrb[0].mxu0 %v3021
    %v3571 = vpop.f32.mrb[0].mxu0
    %v3572 = vadd.f32 %v3030, %v3571
    %v3573 = vpop.f32.mrb[0].mxu0
    %v3574 = vadd.f32 %v3034, %v3573
    %v3575 = vpop.f32.mrb[0].mxu0
    %v3576 = vadd.f32 %v3030, %v3575
    %v3577 = vpop.f32.mrb[0].mxu0
    %v3578 = vadd.f32 %v3034, %v3577
    %3579 = vdwg.mxu0
    %3580 = vmatprep.subr.bf16.mxu0 %v3262
    %3581 = vmatpush1.bf16.msra.mxu0 %v3261
    %3582 = vmatprep.subr.bf16.mxu0 %v3270
    %3583 = vmatpush1.bf16.msra.mxu0 %v3269
    %3584 = vmatprep.subr.bf16.mxu0 %v3278
    %3585 = vmatpush1.bf16.msra.mxu0 %v3277
    %3586 = vmatprep.subr.bf16.mxu0 %v3286
    %3587 = vmatpush1.bf16.msra.mxu0 %v3285
    %3588 = vmatprep.subr.bf16.mxu0 %v3294
    %3589 = vmatpush1.bf16.msra.mxu0 %v3293
    %3590 = vmatprep.subr.bf16.mxu0 %v3302
    %3591 = vmatpush1.bf16.msra.mxu0 %v3301
    %3592 = vmatprep.subr.bf16.mxu0 %v3310
    %3593 = vmatpush1.bf16.msra.mxu0 %v3309
    %3594 = vmatprep.subr.bf16.mxu0 %v3318
    %3595 = vmatpush1.bf16.msra.mxu0 %v3317
    %3596 = vmatprep.subr.bf16.mxu0 0
    %3597 = vmatpush1.bf16.msra.mxu0 0
    %3598 = vmatprep.subr.bf16.mxu0 0
    %3599 = vmatpush1.bf16.msra.mxu0 0
    %3600 = vmatprep.subr.bf16.mxu0 0
    %3601 = vmatpush1.bf16.msra.mxu0 0
    %3602 = vmatprep.subr.bf16.mxu0 0
    %3603 = vmatpush1.bf16.msra.mxu0 0
    %3604 = vmatprep.subr.bf16.mxu0 0
    %3605 = vmatpush1.bf16.msra.mxu0 0
    %3606 = vmatprep.subr.bf16.mxu0 0
    %3607 = vmatpush1.bf16.msra.mxu0 0
    %3608 = vmatprep.subr.bf16.mxu0 0
    %3609 = vmatpush1.bf16.msra.mxu0 0
    %3610 = vmatprep.subr.bf16.mxu0 0
    %3611 = vmatpush1.bf16.msra.mxu0 0
    %3612 = vmatprep.mubr.bf16.mxu0 0
    %3613 = vmatmul.mubr.bf16.gmra.mrb[0].mxu0 %v3006
    %v3614 = vpop.f32.mrb[0].mxu0
    %v3615 = vadd.f32 %v3038, %v3614
    %v3616 = vpop.f32.mrb[0].mxu0
    %v3617 = vadd.f32 %v3042, %v3616
    %v3618 = vpop.f32.mrb[0].mxu0
    %v3619 = vadd.f32 %v3038, %v3618
    %v3620 = vpop.f32.mrb[0].mxu0
    %v3621 = vadd.f32 %v3042, %v3620
    %3622 = vmatprep.mubr.bf16.mxu0 0
    %3623 = vmatmul.mubr.bf16.gmra.mrb[0].mxu0 %v3007
    %v3624 = vpop.f32.mrb[0].mxu0
    %v3625 = vadd.f32 %v3038, %v3624
    %v3626 = vpop.f32.mrb[0].mxu0
    %v3627 = vadd.f32 %v3042, %v3626
    %v3628 = vpop.f32.mrb[0].mxu0
    %v3629 = vadd.f32 %v3038, %v3628
    %v3630 = vpop.f32.mrb[0].mxu0
    %v3631 = vadd.f32 %v3042, %v3630
    %3632 = vmatprep.mubr.bf16.mxu0 0
    %3633 = vmatmul.mubr.bf16.gmra.mrb[0].mxu0 %v3008
    %v3634 = vpop.f32.mrb[0].mxu0
    %v3635 = vadd.f32 %v3038, %v3634
    %v3636 = vpop.f32.mrb[0].mxu0
    %v3637 = vadd.f32 %v3042, %v3636
    %v3638 = vpop.f32.mrb[0].mxu0
    %v3639 = vadd.f32 %v3038, %v3638
    %v3640 = vpop.f32.mrb[0].mxu0
    %v3641 = vadd.f32 %v3042, %v3640
    %3642 = vmatprep.mubr.bf16.mxu0 0
    %3643 = vmatmul.mubr.bf16.gmra.mrb[0].mxu0 %v3009
    %v3644 = vpop.f32.mrb[0].mxu0
    %v3645 = vadd.f32 %v3038, %v3644
    %v3646 = vpop.f32.mrb[0].mxu0
    %v3647 = vadd.f32 %v3042, %v3646
    %v3648 = vpop.f32.mrb[0].mxu0
    %v3649 = vadd.f32 %v3038, %v3648
    %v3650 = vpop.f32.mrb[0].mxu0
    %v3651 = vadd.f32 %v3042, %v3650
    %3652 = vmatprep.mubr.bf16.mxu0 0
    %3653 = vmatmul.mubr.bf16.gmra.mrb[0].mxu0 %v3010
    %v3654 = vpop.f32.mrb[0].mxu0
    %v3655 = vadd.f32 %v3038, %v3654
    %v3656 = vpop.f32.mrb[0].mxu0
    %v3657 = vadd.f32 %v3042, %v3656
    %v3658 = vpop.f32.mrb[0].mxu0
    %v3659 = vadd.f32 %v3038, %v3658
    %v3660 = vpop.f32.mrb[0].mxu0
    %v3661 = vadd.f32 %v3042, %v3660
    %3662 = vmatprep.mubr.bf16.mxu0 0
    %3663 = vmatmul.mubr.bf16.gmra.mrb[0].mxu0 %v3011
    %v3664 = vpop.f32.mrb[0].mxu0
    %v3665 = vadd.f32 %v3038, %v3664
    %v3666 = vpop.f32.mrb[0].mxu0
    %v3667 = vadd.f32 %v3042, %v3666
    %v3668 = vpop.f32.mrb[0].mxu0
    %v3669 = vadd.f32 %v3038, %v3668
    %v3670 = vpop.f32.mrb[0].mxu0
    %v3671 = vadd.f32 %v3042, %v3670
    %3672 = vmatprep.mubr.bf16.mxu0 0
    %3673 = vmatmul.mubr.bf16.gmra.mrb[0].mxu0 %v3012
    %v3674 = vpop.f32.mrb[0].mxu0
    %v3675 = vadd.f32 %v3038, %v3674
    %v3676 = vpop.f32.mrb[0].mxu0
    %v3677 = vadd.f32 %v3042, %v3676
    %v3678 = vpop.f32.mrb[0].mxu0
    %v3679 = vadd.f32 %v3038, %v3678
    %v3680 = vpop.f32.mrb[0].mxu0
    %v3681 = vadd.f32 %v3042, %v3680
    %3682 = vmatprep.mubr.bf16.mxu0 0
    %3683 = vmatmul.mubr.bf16.gmra.mrb[0].mxu0 %v3013
    %v3684 = vpop.f32.mrb[0].mxu0
    %v3685 = vadd.f32 %v3038, %v3684
    %v3686 = vpop.f32.mrb[0].mxu0
    %v3687 = vadd.f32 %v3042, %v3686
    %v3688 = vpop.f32.mrb[0].mxu0
    %v3689 = vadd.f32 %v3038, %v3688
    %v3690 = vpop.f32.mrb[0].mxu0
    %v3691 = vadd.f32 %v3042, %v3690
    %3692 = vmatprep.mubr.bf16.mxu0 0
    %3693 = vmatmul.mubr.bf16.gmra.mrb[0].mxu0 %v3014
    %v3694 = vpop.f32.mrb[0].mxu0
    %v3695 = vadd.f32 %v3038, %v3694
    %v3696 = vpop.f32.mrb[0].mxu0
    %v3697 = vadd.f32 %v3042, %v3696
    %v3698 = vpop.f32.mrb[0].mxu0
    %v3699 = vadd.f32 %v3038, %v3698
    %v3700 = vpop.f32.mrb[0].mxu0
    %v3701 = vadd.f32 %v3042, %v3700
    %3702 = vmatprep.mubr.bf16.mxu0 0
    %3703 = vmatmul.mubr.bf16.gmra.mrb[0].mxu0 %v3015
    %v3704 = vpop.f32.mrb[0].mxu0
    %v3705 = vadd.f32 %v3038, %v3704
    %v3706 = vpop.f32.mrb[0].mxu0
    %v3707 = vadd.f32 %v3042, %v3706
    %v3708 = vpop.f32.mrb[0].mxu0
    %v3709 = vadd.f32 %v3038, %v3708
    %v3710 = vpop.f32.mrb[0].mxu0
    %v3711 = vadd.f32 %v3042, %v3710
    %3712 = vmatprep.mubr.bf16.mxu0 0
    %3713 = vmatmul.mubr.bf16.gmra.mrb[0].mxu0 %v3016
    %v3714 = vpop.f32.mrb[0].mxu0
    %v3715 = vadd.f32 %v3038, %v3714
    %v3716 = vpop.f32.mrb[0].mxu0
    %v3717 = vadd.f32 %v3042, %v3716
    %v3718 = vpop.f32.mrb[0].mxu0
    %v3719 = vadd.f32 %v3038, %v3718
    %v3720 = vpop.f32.mrb[0].mxu0
    %v3721 = vadd.f32 %v3042, %v3720
    %3722 = vmatprep.mubr.bf16.mxu0 0
    %3723 = vmatmul.mubr.bf16.gmra.mrb[0].mxu0 %v3017
    %v3724 = vpop.f32.mrb[0].mxu0
    %v3725 = vadd.f32 %v3038, %v3724
    %v3726 = vpop.f32.mrb[0].mxu0
    %v3727 = vadd.f32 %v3042, %v3726
    %v3728 = vpop.f32.mrb[0].mxu0
    %v3729 = vadd.f32 %v3038, %v3728
    %v3730 = vpop.f32.mrb[0].mxu0
    %v3731 = vadd.f32 %v3042, %v3730
    %3732 = vmatprep.mubr.bf16.mxu0 0
    %3733 = vmatmul.mubr.bf16.gmra.mrb[0].mxu0 %v3018
    %v3734 = vpop.f32.mrb[0].mxu0
    %v3735 = vadd.f32 %v3038, %v3734
    %v3736 = vpop.f32.mrb[0].mxu0
    %v3737 = vadd.f32 %v3042, %v3736
    %v3738 = vpop.f32.mrb[0].mxu0
    %v3739 = vadd.f32 %v3038, %v3738
    %v3740 = vpop.f32.mrb[0].mxu0
    %v3741 = vadd.f32 %v3042, %v3740
    %3742 = vmatprep.mubr.bf16.mxu0 0
    %3743 = vmatmul.mubr.bf16.gmra.mrb[0].mxu0 %v3019
    %v3744 = vpop.f32.mrb[0].mxu0
    %v3745 = vadd.f32 %v3038, %v3744
    %v3746 = vpop.f32.mrb[0].mxu0
    %v3747 = vadd.f32 %v3042, %v3746
    %v3748 = vpop.f32.mrb[0].mxu0
    %v3749 = vadd.f32 %v3038, %v3748
    %v3750 = vpop.f32.mrb[0].mxu0
    %v3751 = vadd.f32 %v3042, %v3750
    %3752 = vmatprep.mubr.bf16.mxu0 0
    %3753 = vmatmul.mubr.bf16.gmra.mrb[0].mxu0 %v3020
    %v3754 = vpop.f32.mrb[0].mxu0
    %v3755 = vadd.f32 %v3038, %v3754
    %v3756 = vpop.f32.mrb[0].mxu0
    %v3757 = vadd.f32 %v3042, %v3756
    %v3758 = vpop.f32.mrb[0].mxu0
    %v3759 = vadd.f32 %v3038, %v3758
    %v3760 = vpop.f32.mrb[0].mxu0
    %v3761 = vadd.f32 %v3042, %v3760
    %3762 = vmatprep.mubr.bf16.mxu0 0
    %3763 = vmatmul.mubr.bf16.gmra.mrb[0].mxu0 %v3021
    %v3764 = vpop.f32.mrb[0].mxu0
    %v3765 = vadd.f32 %v3038, %v3764
    %v3766 = vpop.f32.mrb[0].mxu0
    %v3767 = vadd.f32 %v3042, %v3766
    %v3768 = vpop.f32.mrb[0].mxu0
    %v3769 = vadd.f32 %v3038, %v3768
    %v3770 = vpop.f32.mrb[0].mxu0
    %v3771 = vadd.f32 %v3042, %v3770
    %3772 = vdwg.mxu0
    %3773 = vmatprep.subr.bf16.mxu0 %v3264
    %3774 = vmatpush1.bf16.msra.mxu0 %v3263
    %3775 = vmatprep.subr.bf16.mxu0 %v3272
    %3776 = vmatpush1.bf16.msra.mxu0 %v3271
    %3777 = vmatprep.subr.bf16.mxu0 %v3280
    %3778 = vmatpush1.bf16.msra.mxu0 %v3279
    %3779 = vmatprep.subr.bf16.mxu0 %v3288
    %3780 = vmatpush1.bf16.msra.mxu0 %v3287
    %3781 = vmatprep.subr.bf16.mxu0 %v3296
    %3782 = vmatpush1.bf16.msra.mxu0 %v3295
    %3783 = vmatprep.subr.bf16.mxu0 %v3304
    %3784 = vmatpush1.bf16.msra.mxu0 %v3303
    %3785 = vmatprep.subr.bf16.mxu0 %v3312
    %3786 = vmatpush1.bf16.msra.mxu0 %v3311
    %3787 = vmatprep.subr.bf16.mxu0 %v3320
    %3788 = vmatpush1.bf16.msra.mxu0 %v3319
    %3789 = vmatprep.subr.bf16.mxu0 0
    %3790 = vmatpush1.bf16.msra.mxu0 0
    %3791 = vmatprep.subr.bf16.mxu0 0
    %3792 = vmatpush1.bf16.msra.mxu0 0
    %3793 = vmatprep.subr.bf16.mxu0 0
    %3794 = vmatpush1.bf16.msra.mxu0 0
    %3795 = vmatprep.subr.bf16.mxu0 0
    %3796 = vmatpush1.bf16.msra.mxu0 0
    %3797 = vmatprep.subr.bf16.mxu0 0
    %3798 = vmatpush1.bf16.msra.mxu0 0
    %3799 = vmatprep.subr.bf16.mxu0 0
    %3800 = vmatpush1.bf16.msra.mxu0 0
    %3801 = vmatprep.subr.bf16.mxu0 0
    %3802 = vmatpush1.bf16.msra.mxu0 0
    %3803 = vmatprep.subr.bf16.mxu0 0
    %3804 = vmatpush1.bf16.msra.mxu0 0
    %3805 = vmatprep.mubr.bf16.mxu0 0
    %3806 = vmatmul.mubr.bf16.gmra.mrb[0].mxu0 %v3006
    %v3807 = vpop.f32.mrb[0].mxu0
    %v3808 = vadd.f32 %v3046, %v3807
    %v3809 = vpop.f32.mrb[0].mxu0
    %v3810 = vadd.f32 %v3050, %v3809
    %v3811 = vpop.f32.mrb[0].mxu0
    %v3812 = vadd.f32 %v3046, %v3811
    %v3813 = vpop.f32.mrb[0].mxu0
    %v3814 = vadd.f32 %v3050, %v3813
    %3815 = vmatprep.mubr.bf16.mxu0 0
    %3816 = vmatmul.mubr.bf16.gmra.mrb[0].mxu0 %v3007
    %v3817 = vpop.f32.mrb[0].mxu0
    %v3818 = vadd.f32 %v3046, %v3817
    %v3819 = vpop.f32.mrb[0].mxu0
    %v3820 = vadd.f32 %v3050, %v3819
    %v3821 = vpop.f32.mrb[0].mxu0
    %v3822 = vadd.f32 %v3046, %v3821
    %v3823 = vpop.f32.mrb[0].mxu0
    %v3824 = vadd.f32 %v3050, %v3823
    %3825 = vmatprep.mubr.bf16.mxu0 0
    %3826 = vmatmul.mubr.bf16.gmra.mrb[0].mxu0 %v3008
    %v3827 = vpop.f32.mrb[0].mxu0
    %v3828 = vadd.f32 %v3046, %v3827
    %v3829 = vpop.f32.mrb[0].mxu0
    %v3830 = vadd.f32 %v3050, %v3829
    %v3831 = vpop.f32.mrb[0].mxu0
    %v3832 = vadd.f32 %v3046, %v3831
    %v3833 = vpop.f32.mrb[0].mxu0
    %v3834 = vadd.f32 %v3050, %v3833
    %3835 = vmatprep.mubr.bf16.mxu0 0
    %3836 = vmatmul.mubr.bf16.gmra.mrb[0].mxu0 %v3009
    %v3837 = vpop.f32.mrb[0].mxu0
    %v3838 = vadd.f32 %v3046, %v3837
    %v3839 = vpop.f32.mrb[0].mxu0
    %v3840 = vadd.f32 %v3050, %v3839
    %v3841 = vpop.f32.mrb[0].mxu0
    %v3842 = vadd.f32 %v3046, %v3841
    %v3843 = vpop.f32.mrb[0].mxu0
    %v3844 = vadd.f32 %v3050, %v3843
    %3845 = vmatprep.mubr.bf16.mxu0 0
    %3846 = vmatmul.mubr.bf16.gmra.mrb[0].mxu0 %v3010
    %v3847 = vpop.f32.mrb[0].mxu0
    %v3848 = vadd.f32 %v3046, %v3847
    %v3849 = vpop.f32.mrb[0].mxu0
    %v3850 = vadd.f32 %v3050, %v3849
    %v3851 = vpop.f32.mrb[0].mxu0
    %v3852 = vadd.f32 %v3046, %v3851
    %v3853 = vpop.f32.mrb[0].mxu0
    %v3854 = vadd.f32 %v3050, %v3853
    %3855 = vmatprep.mubr.bf16.mxu0 0
    %3856 = vmatmul.mubr.bf16.gmra.mrb[0].mxu0 %v3011
    %v3857 = vpop.f32.mrb[0].mxu0
    %v3858 = vadd.f32 %v3046, %v3857
    %v3859 = vpop.f32.mrb[0].mxu0
    %v3860 = vadd.f32 %v3050, %v3859
    %v3861 = vpop.f32.mrb[0].mxu0
    %v3862 = vadd.f32 %v3046, %v3861
    %v3863 = vpop.f32.mrb[0].mxu0
    %v3864 = vadd.f32 %v3050, %v3863
    %3865 = vmatprep.mubr.bf16.mxu0 0
    %3866 = vmatmul.mubr.bf16.gmra.mrb[0].mxu0 %v3012
    %v3867 = vpop.f32.mrb[0].mxu0
    %v3868 = vadd.f32 %v3046, %v3867
    %v3869 = vpop.f32.mrb[0].mxu0
    %v3870 = vadd.f32 %v3050, %v3869
    %v3871 = vpop.f32.mrb[0].mxu0
    %v3872 = vadd.f32 %v3046, %v3871
    %v3873 = vpop.f32.mrb[0].mxu0
    %v3874 = vadd.f32 %v3050, %v3873
    %3875 = vmatprep.mubr.bf16.mxu0 0
    %3876 = vmatmul.mubr.bf16.gmra.mrb[0].mxu0 %v3013
    %v3877 = vpop.f32.mrb[0].mxu0
    %v3878 = vadd.f32 %v3046, %v3877
    %v3879 = vpop.f32.mrb[0].mxu0
    %v3880 = vadd.f32 %v3050, %v3879
    %v3881 = vpop.f32.mrb[0].mxu0
    %v3882 = vadd.f32 %v3046, %v3881
    %v3883 = vpop.f32.mrb[0].mxu0
    %v3884 = vadd.f32 %v3050, %v3883
    %3885 = vmatprep.mubr.bf16.mxu0 0
    %3886 = vmatmul.mubr.bf16.gmra.mrb[0].mxu0 %v3014
    %v3887 = vpop.f32.mrb[0].mxu0
    %v3888 = vadd.f32 %v3046, %v3887
    %v3889 = vpop.f32.mrb[0].mxu0
    %v3890 = vadd.f32 %v3050, %v3889
    %v3891 = vpop.f32.mrb[0].mxu0
    %v3892 = vadd.f32 %v3046, %v3891
    %v3893 = vpop.f32.mrb[0].mxu0
    %v3894 = vadd.f32 %v3050, %v3893
    %3895 = vmatprep.mubr.bf16.mxu0 0
    %3896 = vmatmul.mubr.bf16.gmra.mrb[0].mxu0 %v3015
    %v3897 = vpop.f32.mrb[0].mxu0
    %v3898 = vadd.f32 %v3046, %v3897
    %v3899 = vpop.f32.mrb[0].mxu0
    %v3900 = vadd.f32 %v3050, %v3899
    %v3901 = vpop.f32.mrb[0].mxu0
    %v3902 = vadd.f32 %v3046, %v3901
    %v3903 = vpop.f32.mrb[0].mxu0
    %v3904 = vadd.f32 %v3050, %v3903
    %3905 = vmatprep.mubr.bf16.mxu0 0
    %3906 = vmatmul.mubr.bf16.gmra.mrb[0].mxu0 %v3016
    %v3907 = vpop.f32.mrb[0].mxu0
    %v3908 = vadd.f32 %v3046, %v3907
    %v3909 = vpop.f32.mrb[0].mxu0
    %v3910 = vadd.f32 %v3050, %v3909
    %v3911 = vpop.f32.mrb[0].mxu0
    %v3912 = vadd.f32 %v3046, %v3911
    %v3913 = vpop.f32.mrb[0].mxu0
    %v3914 = vadd.f32 %v3050, %v3913
    %3915 = vmatprep.mubr.bf16.mxu0 0
    %3916 = vmatmul.mubr.bf16.gmra.mrb[0].mxu0 %v3017
    %v3917 = vpop.f32.mrb[0].mxu0
    %v3918 = vadd.f32 %v3046, %v3917
    %v3919 = vpop.f32.mrb[0].mxu0
    %v3920 = vadd.f32 %v3050, %v3919
    %v3921 = vpop.f32.mrb[0].mxu0
    %v3922 = vadd.f32 %v3046, %v3921
    %v3923 = vpop.f32.mrb[0].mxu0
    %v3924 = vadd.f32 %v3050, %v3923
    %3925 = vmatprep.mubr.bf16.mxu0 0
    %3926 = vmatmul.mubr.bf16.gmra.mrb[0].mxu0 %v3018
    %v3927 = vpop.f32.mrb[0].mxu0
    %v3928 = vadd.f32 %v3046, %v3927
    %v3929 = vpop.f32.mrb[0].mxu0
    %v3930 = vadd.f32 %v3050, %v3929
    %v3931 = vpop.f32.mrb[0].mxu0
    %v3932 = vadd.f32 %v3046, %v3931
    %v3933 = vpop.f32.mrb[0].mxu0
    %v3934 = vadd.f32 %v3050, %v3933
    %3935 = vmatprep.mubr.bf16.mxu0 0
    %3936 = vmatmul.mubr.bf16.gmra.mrb[0].mxu0 %v3019
    %v3937 = vpop.f32.mrb[0].mxu0
    %v3938 = vadd.f32 %v3046, %v3937
    %v3939 = vpop.f32.mrb[0].mxu0
    %v3940 = vadd.f32 %v3050, %v3939
    %v3941 = vpop.f32.mrb[0].mxu0
    %v3942 = vadd.f32 %v3046, %v3941
    %v3943 = vpop.f32.mrb[0].mxu0
    %v3944 = vadd.f32 %v3050, %v3943
    %3945 = vmatprep.mubr.bf16.mxu0 0
    %3946 = vmatmul.mubr.bf16.gmra.mrb[0].mxu0 %v3020
    %v3947 = vpop.f32.mrb[0].mxu0
    %v3948 = vadd.f32 %v3046, %v3947
    %v3949 = vpop.f32.mrb[0].mxu0
    %v3950 = vadd.f32 %v3050, %v3949
    %v3951 = vpop.f32.mrb[0].mxu0
    %v3952 = vadd.f32 %v3046, %v3951
    %v3953 = vpop.f32.mrb[0].mxu0
    %v3954 = vadd.f32 %v3050, %v3953
    %3955 = vmatprep.mubr.bf16.mxu0 0
    %3956 = vmatmul.mubr.bf16.gmra.mrb[0].mxu0 %v3021
    %v3957 = vpop.f32.mrb[0].mxu0
    %v3958 = vadd.f32 %v3046, %v3957
    %v3959 = vpop.f32.mrb[0].mxu0
    %v3960 = vadd.f32 %v3050, %v3959
    %v3961 = vpop.f32.mrb[0].mxu0
    %v3962 = vadd.f32 %v3046, %v3961
    %v3963 = vpop.f32.mrb[0].mxu0
    %v3964 = vadd.f32 %v3050, %v3963
    %3965 = vdwg.mxu0
    %3966 = vmatprep.subr.bf16.mxu0 %v3266
    %3967 = vmatpush1.bf16.msra.mxu0 %v3265
    %3968 = vmatprep.subr.bf16.mxu0 %v3274
    %3969 = vmatpush1.bf16.msra.mxu0 %v3273
    %3970 = vmatprep.subr.bf16.mxu0 %v3282
    %3971 = vmatpush1.bf16.msra.mxu0 %v3281
    %3972 = vmatprep.subr.bf16.mxu0 %v3290
    %3973 = vmatpush1.bf16.msra.mxu0 %v3289
    %3974 = vmatprep.subr.bf16.mxu0 %v3298
    %3975 = vmatpush1.bf16.msra.mxu0 %v3297
    %3976 = vmatprep.subr.bf16.mxu0 %v3306
    %3977 = vmatpush1.bf16.msra.mxu0 %v3305
    %3978 = vmatprep.subr.bf16.mxu0 %v3314
    %3979 = vmatpush1.bf16.msra.mxu0 %v3313
    %3980 = vmatprep.subr.bf16.mxu0 %v3322
    %3981 = vmatpush1.bf16.msra.mxu0 %v3321
    %3982 = vmatprep.subr.bf16.mxu0 0
    %3983 = vmatpush1.bf16.msra.mxu0 0
    %3984 = vmatprep.subr.bf16.mxu0 0
    %3985 = vmatpush1.bf16.msra.mxu0 0
    %3986 = vmatprep.subr.bf16.mxu0 0
    %3987 = vmatpush1.bf16.msra.mxu0 0
    %3988 = vmatprep.subr.bf16.mxu0 0
    %3989 = vmatpush1.bf16.msra.mxu0 0
    %3990 = vmatprep.subr.bf16.mxu0 0
    %3991 = vmatpush1.bf16.msra.mxu0 0
    %3992 = vmatprep.subr.bf16.mxu0 0
    %3993 = vmatpush1.bf16.msra.mxu0 0
    %3994 = vmatprep.subr.bf16.mxu0 0
    %3995 = vmatpush1.bf16.msra.mxu0 0
    %3996 = vmatprep.subr.bf16.mxu0 0
    %3997 = vmatpush1.bf16.msra.mxu0 0
    %3998 = vmatprep.mubr.bf16.mxu0 0
    %3999 = vmatmul.mubr.bf16.gmra.mrb[0].mxu0 %v3006
    %v4000 = vpop.f32.mrb[0].mxu0
    %v4001 = vadd.f32 %v3054, %v4000
    %v4002 = vpop.f32.mrb[0].mxu0
    %v4003 = vadd.f32 %v3058, %v4002
    %v4004 = vpop.f32.mrb[0].mxu0
    %v4005 = vadd.f32 %v3054, %v4004
    %v4006 = vpop.f32.mrb[0].mxu0
    %v4007 = vadd.f32 %v3058, %v4006
    %4008 = vmatprep.mubr.bf16.mxu0 0
    %4009 = vmatmul.mubr.bf16.gmra.mrb[0].mxu0 %v3007
    %v4010 = vpop.f32.mrb[0].mxu0
    %v4011 = vadd.f32 %v3054, %v4010
    %v4012 = vpop.f32.mrb[0].mxu0
    %v4013 = vadd.f32 %v3058, %v4012
    %v4014 = vpop.f32.mrb[0].mxu0
    %v4015 = vadd.f32 %v3054, %v4014
    %v4016 = vpop.f32.mrb[0].mxu0
    %v4017 = vadd.f32 %v3058, %v4016
    %4018 = vmatprep.mubr.bf16.mxu0 0
    %4019 = vmatmul.mubr.bf16.gmra.mrb[0].mxu0 %v3008
    %v4020 = vpop.f32.mrb[0].mxu0
    %v4021 = vadd.f32 %v3054, %v4020
    %v4022 = vpop.f32.mrb[0].mxu0
    %v4023 = vadd.f32 %v3058, %v4022
    %v4024 = vpop.f32.mrb[0].mxu0
    %v4025 = vadd.f32 %v3054, %v4024
    %v4026 = vpop.f32.mrb[0].mxu0
    %v4027 = vadd.f32 %v3058, %v4026
    %4028 = vmatprep.mubr.bf16.mxu0 0
    %4029 = vmatmul.mubr.bf16.gmra.mrb[0].mxu0 %v3009
    %v4030 = vpop.f32.mrb[0].mxu0
    %v4031 = vadd.f32 %v3054, %v4030
    %v4032 = vpop.f32.mrb[0].mxu0
    %v4033 = vadd.f32 %v3058, %v4032
    %v4034 = vpop.f32.mrb[0].mxu0
    %v4035 = vadd.f32 %v3054, %v4034
    %v4036 = vpop.f32.mrb[0].mxu0
    %v4037 = vadd.f32 %v3058, %v4036
    %4038 = vmatprep.mubr.bf16.mxu0 0
    %4039 = vmatmul.mubr.bf16.gmra.mrb[0].mxu0 %v3010
    %v4040 = vpop.f32.mrb[0].mxu0
    %v4041 = vadd.f32 %v3054, %v4040
    %v4042 = vpop.f32.mrb[0].mxu0
    %v4043 = vadd.f32 %v3058, %v4042
    %v4044 = vpop.f32.mrb[0].mxu0
    %v4045 = vadd.f32 %v3054, %v4044
    %v4046 = vpop.f32.mrb[0].mxu0
    %v4047 = vadd.f32 %v3058, %v4046
    %4048 = vmatprep.mubr.bf16.mxu0 0
    %4049 = vmatmul.mubr.bf16.gmra.mrb[0].mxu0 %v3011
    %v4050 = vpop.f32.mrb[0].mxu0
    %v4051 = vadd.f32 %v3054, %v4050
    %v4052 = vpop.f32.mrb[0].mxu0
    %v4053 = vadd.f32 %v3058, %v4052
    %v4054 = vpop.f32.mrb[0].mxu0
    %v4055 = vadd.f32 %v3054, %v4054
    %v4056 = vpop.f32.mrb[0].mxu0
    %v4057 = vadd.f32 %v3058, %v4056
    %4058 = vmatprep.mubr.bf16.mxu0 0
    %4059 = vmatmul.mubr.bf16.gmra.mrb[0].mxu0 %v3012
    %v4060 = vpop.f32.mrb[0].mxu0
    %v4061 = vadd.f32 %v3054, %v4060
    %v4062 = vpop.f32.mrb[0].mxu0
    %v4063 = vadd.f32 %v3058, %v4062
    %v4064 = vpop.f32.mrb[0].mxu0
    %v4065 = vadd.f32 %v3054, %v4064
    %v4066 = vpop.f32.mrb[0].mxu0
    %v4067 = vadd.f32 %v3058, %v4066
    %4068 = vmatprep.mubr.bf16.mxu0 0
    %4069 = vmatmul.mubr.bf16.gmra.mrb[0].mxu0 %v3013
    %v4070 = vpop.f32.mrb[0].mxu0
    %v4071 = vadd.f32 %v3054, %v4070
    %v4072 = vpop.f32.mrb[0].mxu0
    %v4073 = vadd.f32 %v3058, %v4072
    %v4074 = vpop.f32.mrb[0].mxu0
    %v4075 = vadd.f32 %v3054, %v4074
    %v4076 = vpop.f32.mrb[0].mxu0
    %v4077 = vadd.f32 %v3058, %v4076
    %4078 = vmatprep.mubr.bf16.mxu0 0
    %4079 = vmatmul.mubr.bf16.gmra.mrb[0].mxu0 %v3014
    %v4080 = vpop.f32.mrb[0].mxu0
    %v4081 = vadd.f32 %v3054, %v4080
    %v4082 = vpop.f32.mrb[0].mxu0
    %v4083 = vadd.f32 %v3058, %v4082
    %v4084 = vpop.f32.mrb[0].mxu0
    %v4085 = vadd.f32 %v3054, %v4084
    %v4086 = vpop.f32.mrb[0].mxu0
    %v4087 = vadd.f32 %v3058, %v4086
    %4088 = vmatprep.mubr.bf16.mxu0 0
    %4089 = vmatmul.mubr.bf16.gmra.mrb[0].mxu0 %v3015
    %v4090 = vpop.f32.mrb[0].mxu0
    %v4091 = vadd.f32 %v3054, %v4090
    %v4092 = vpop.f32.mrb[0].mxu0
    %v4093 = vadd.f32 %v3058, %v4092
    %v4094 = vpop.f32.mrb[0].mxu0
    %v4095 = vadd.f32 %v3054, %v4094
    %v4096 = vpop.f32.mrb[0].mxu0
    %v4097 = vadd.f32 %v3058, %v4096
    %4098 = vmatprep.mubr.bf16.mxu0 0
    %4099 = vmatmul.mubr.bf16.gmra.mrb[0].mxu0 %v3016
    %v4100 = vpop.f32.mrb[0].mxu0
    %v4101 = vadd.f32 %v3054, %v4100
    %v4102 = vpop.f32.mrb[0].mxu0
    %v4103 = vadd.f32 %v3058, %v4102
    %v4104 = vpop.f32.mrb[0].mxu0
    %v4105 = vadd.f32 %v3054, %v4104
    %v4106 = vpop.f32.mrb[0].mxu0
    %v4107 = vadd.f32 %v3058, %v4106
    %4108 = vmatprep.mubr.bf16.mxu0 0
    %4109 = vmatmul.mubr.bf16.gmra.mrb[0].mxu0 %v3017
    %v4110 = vpop.f32.mrb[0].mxu0
    %v4111 = vadd.f32 %v3054, %v4110
    %v4112 = vpop.f32.mrb[0].mxu0
    %v4113 = vadd.f32 %v3058, %v4112
    %v4114 = vpop.f32.mrb[0].mxu0
    %v4115 = vadd.f32 %v3054, %v4114
    %v4116 = vpop.f32.mrb[0].mxu0
    %v4117 = vadd.f32 %v3058, %v4116
    %4118 = vmatprep.mubr.bf16.mxu0 0
    %4119 = vmatmul.mubr.bf16.gmra.mrb[0].mxu0 %v3018
    %v4120 = vpop.f32.mrb[0].mxu0
    %v4121 = vadd.f32 %v3054, %v4120
    %v4122 = vpop.f32.mrb[0].mxu0
    %v4123 = vadd.f32 %v3058, %v4122
    %v4124 = vpop.f32.mrb[0].mxu0
    %v4125 = vadd.f32 %v3054, %v4124
    %v4126 = vpop.f32.mrb[0].mxu0
    %v4127 = vadd.f32 %v3058, %v4126
    %4128 = vmatprep.mubr.bf16.mxu0 0
    %4129 = vmatmul.mubr.bf16.gmra.mrb[0].mxu0 %v3019
    %v4130 = vpop.f32.mrb[0].mxu0
    %v4131 = vadd.f32 %v3054, %v4130
    %v4132 = vpop.f32.mrb[0].mxu0
    %v4133 = vadd.f32 %v3058, %v4132
    %v4134 = vpop.f32.mrb[0].mxu0
    %v4135 = vadd.f32 %v3054, %v4134
    %v4136 = vpop.f32.mrb[0].mxu0
    %v4137 = vadd.f32 %v3058, %v4136
    %4138 = vmatprep.mubr.bf16.mxu0 0
    %4139 = vmatmul.mubr.bf16.gmra.mrb[0].mxu0 %v3020
    %v4140 = vpop.f32.mrb[0].mxu0
    %v4141 = vadd.f32 %v3054, %v4140
    %v4142 = vpop.f32.mrb[0].mxu0
    %v4143 = vadd.f32 %v3058, %v4142
    %v4144 = vpop.f32.mrb[0].mxu0
    %v4145 = vadd.f32 %v3054, %v4144
    %v4146 = vpop.f32.mrb[0].mxu0
    %v4147 = vadd.f32 %v3058, %v4146
    %4148 = vmatprep.mubr.bf16.mxu0 0
    %4149 = vmatmul.mubr.bf16.gmra.mrb[0].mxu0 %v3021
    %v4150 = vpop.f32.mrb[0].mxu0
    %v4151 = vadd.f32 %v3054, %v4150
    %v4152 = vpop.f32.mrb[0].mxu0
    %v4153 = vadd.f32 %v3058, %v4152
    %v4154 = vpop.f32.mrb[0].mxu0
    %v4155 = vadd.f32 %v3054, %v4154
    %v4156 = vpop.f32.mrb[0].mxu0
    %v4157 = vadd.f32 %v3058, %v4156
    %4158 = vdwg.mxu0
    %v4159 = vxor.u32 %v3422, 2147483648
    %v4160 = vxor.u32 %v3424, 2147483648
    %v4161 = vxor.u32 %v3615, 2147483648
    %v4162 = vxor.u32 %v3617, 2147483648
    %v4163 = vxor.u32 %v3808, 2147483648
    %v4164 = vxor.u32 %v3810, 2147483648
    %v4165 = vxor.u32 %v4001, 2147483648
    %v4166 = vxor.u32 %v4003, 2147483648
    %v4167 = vxor.u32 %v3426, 2147483648
    %v4168 = vxor.u32 %v3428, 2147483648
    %v4169 = vxor.u32 %v3619, 2147483648
    %v4170 = vxor.u32 %v3621, 2147483648
    %v4171 = vxor.u32 %v3812, 2147483648
    %v4172 = vxor.u32 %v3814, 2147483648
    %v4173 = vxor.u32 %v4005, 2147483648
    %v4174 = vxor.u32 %v4007, 2147483648
    %v4175 = vxor.u32 %v3432, 2147483648
    %v4176 = vxor.u32 %v3434, 2147483648
    %v4177 = vxor.u32 %v3625, 2147483648
    %v4178 = vxor.u32 %v3627, 2147483648
    %v4179 = vxor.u32 %v3818, 2147483648
    %v4180 = vxor.u32 %v3820, 2147483648
    %v4181 = vxor.u32 %v4011, 2147483648
    %v4182 = vxor.u32 %v4013, 2147483648
    %v4183 = vxor.u32 %v3436, 2147483648
    %v4184 = vxor.u32 %v3438, 2147483648
    %v4185 = vxor.u32 %v3629, 2147483648
    %v4186 = vxor.u32 %v3631, 2147483648
    %v4187 = vxor.u32 %v3822, 2147483648
    %v4188 = vxor.u32 %v3824, 2147483648
    %v4189 = vxor.u32 %v4015, 2147483648
    %v4190 = vxor.u32 %v4017, 2147483648
    %v4191 = vxor.u32 %v3442, 2147483648
    %v4192 = vxor.u32 %v3444, 2147483648
    %v4193 = vxor.u32 %v3635, 2147483648
    %v4194 = vxor.u32 %v3637, 2147483648
    %v4195 = vxor.u32 %v3828, 2147483648
    %v4196 = vxor.u32 %v3830, 2147483648
    %v4197 = vxor.u32 %v4021, 2147483648
    %v4198 = vxor.u32 %v4023, 2147483648
    %v4199 = vxor.u32 %v3446, 2147483648
    %v4200 = vxor.u32 %v3448, 2147483648
    %v4201 = vxor.u32 %v3639, 2147483648
    %v4202 = vxor.u32 %v3641, 2147483648
    %v4203 = vxor.u32 %v3832, 2147483648
    %v4204 = vxor.u32 %v3834, 2147483648
    %v4205 = vxor.u32 %v4025, 2147483648
    %v4206 = vxor.u32 %v4027, 2147483648
    %v4207 = vxor.u32 %v3452, 2147483648
    %v4208 = vxor.u32 %v3454, 2147483648
    %v4209 = vxor.u32 %v3645, 2147483648
    %v4210 = vxor.u32 %v3647, 2147483648
    %v4211 = vxor.u32 %v3838, 2147483648
    %v4212 = vxor.u32 %v3840, 2147483648
    %v4213 = vxor.u32 %v4031, 2147483648
    %v4214 = vxor.u32 %v4033, 2147483648
    %v4215 = vxor.u32 %v3456, 2147483648
    %v4216 = vxor.u32 %v3458, 2147483648
    %v4217 = vxor.u32 %v3649, 2147483648
    %v4218 = vxor.u32 %v3651, 2147483648
    %v4219 = vxor.u32 %v3842, 2147483648
    %v4220 = vxor.u32 %v3844, 2147483648
    %v4221 = vxor.u32 %v4035, 2147483648
    %v4222 = vxor.u32 %v4037, 2147483648
    %v4223 = vxor.u32 %v3462, 2147483648
    %v4224 = vxor.u32 %v3464, 2147483648
    %v4225 = vxor.u32 %v3655, 2147483648
    %v4226 = vxor.u32 %v3657, 2147483648
    %v4227 = vxor.u32 %v3848, 2147483648
    %v4228 = vxor.u32 %v3850, 2147483648
    %v4229 = vxor.u32 %v4041, 2147483648
    %v4230 = vxor.u32 %v4043, 2147483648
    %v4231 = vxor.u32 %v3466, 2147483648
    %v4232 = vxor.u32 %v3468, 2147483648
    %v4233 = vxor.u32 %v3659, 2147483648
    %v4234 = vxor.u32 %v3661, 2147483648
    %v4235 = vxor.u32 %v3852, 2147483648
    %v4236 = vxor.u32 %v3854, 2147483648
    %v4237 = vxor.u32 %v4045, 2147483648
    %v4238 = vxor.u32 %v4047, 2147483648
    %v4239 = vxor.u32 %v3472, 2147483648
    %v4240 = vxor.u32 %v3474, 2147483648
    %v4241 = vxor.u32 %v3665, 2147483648
    %v4242 = vxor.u32 %v3667, 2147483648
    %v4243 = vxor.u32 %v3858, 2147483648
    %v4244 = vxor.u32 %v3860, 2147483648
    %v4245 = vxor.u32 %v4051, 2147483648
    %v4246 = vxor.u32 %v4053, 2147483648
    %v4247 = vxor.u32 %v3476, 2147483648
    %v4248 = vxor.u32 %v3478, 2147483648
    %v4249 = vxor.u32 %v3669, 2147483648
    %v4250 = vxor.u32 %v3671, 2147483648
    %v4251 = vxor.u32 %v3862, 2147483648
    %v4252 = vxor.u32 %v3864, 2147483648
    %v4253 = vxor.u32 %v4055, 2147483648
    %v4254 = vxor.u32 %v4057, 2147483648
    %v4255 = vxor.u32 %v3482, 2147483648
    %v4256 = vxor.u32 %v3484, 2147483648
    %v4257 = vxor.u32 %v3675, 2147483648
    %v4258 = vxor.u32 %v3677, 2147483648
    %v4259 = vxor.u32 %v3868, 2147483648
    %v4260 = vxor.u32 %v3870, 2147483648
    %v4261 = vxor.u32 %v4061, 2147483648
    %v4262 = vxor.u32 %v4063, 2147483648
    %v4263 = vxor.u32 %v3486, 2147483648
    %v4264 = vxor.u32 %v3488, 2147483648
    %v4265 = vxor.u32 %v3679, 2147483648
    %v4266 = vxor.u32 %v3681, 2147483648
    %v4267 = vxor.u32 %v3872, 2147483648
    %v4268 = vxor.u32 %v3874, 2147483648
    %v4269 = vxor.u32 %v4065, 2147483648
    %v4270 = vxor.u32 %v4067, 2147483648
    %v4271 = vxor.u32 %v3492, 2147483648
    %v4272 = vxor.u32 %v3494, 2147483648
    %v4273 = vxor.u32 %v3685, 2147483648
    %v4274 = vxor.u32 %v3687, 2147483648
    %v4275 = vxor.u32 %v3878, 2147483648
    %v4276 = vxor.u32 %v3880, 2147483648
    %v4277 = vxor.u32 %v4071, 2147483648
    %v4278 = vxor.u32 %v4073, 2147483648
    %v4279 = vxor.u32 %v3496, 2147483648
    %v4280 = vxor.u32 %v3498, 2147483648
    %v4281 = vxor.u32 %v3689, 2147483648
    %v4282 = vxor.u32 %v3691, 2147483648
    %v4283 = vxor.u32 %v3882, 2147483648
    %v4284 = vxor.u32 %v3884, 2147483648
    %v4285 = vxor.u32 %v4075, 2147483648
    %v4286 = vxor.u32 %v4077, 2147483648
    %v4287 = vxor.u32 %v3502, 2147483648
    %v4288 = vxor.u32 %v3504, 2147483648
    %v4289 = vxor.u32 %v3695, 2147483648
    %v4290 = vxor.u32 %v3697, 2147483648
    %v4291 = vxor.u32 %v3888, 2147483648
    %v4292 = vxor.u32 %v3890, 2147483648
    %v4293 = vxor.u32 %v4081, 2147483648
    %v4294 = vxor.u32 %v4083, 2147483648
    %v4295 = vxor.u32 %v3506, 2147483648
    %v4296 = vxor.u32 %v3508, 2147483648
    %v4297 = vxor.u32 %v3699, 2147483648
    %v4298 = vxor.u32 %v3701, 2147483648
    %v4299 = vxor.u32 %v3892, 2147483648
    %v4300 = vxor.u32 %v3894, 2147483648
    %v4301 = vxor.u32 %v4085, 2147483648
    %v4302 = vxor.u32 %v4087, 2147483648
    %v4303 = vxor.u32 %v3512, 2147483648
    %v4304 = vxor.u32 %v3514, 2147483648
    %v4305 = vxor.u32 %v3705, 2147483648
    %v4306 = vxor.u32 %v3707, 2147483648
    %v4307 = vxor.u32 %v3898, 2147483648
    %v4308 = vxor.u32 %v3900, 2147483648
    %v4309 = vxor.u32 %v4091, 2147483648
    %v4310 = vxor.u32 %v4093, 2147483648
    %v4311 = vxor.u32 %v3516, 2147483648
    %v4312 = vxor.u32 %v3518, 2147483648
    %v4313 = vxor.u32 %v3709, 2147483648
    %v4314 = vxor.u32 %v3711, 2147483648
    %v4315 = vxor.u32 %v3902, 2147483648
    %v4316 = vxor.u32 %v3904, 2147483648
    %v4317 = vxor.u32 %v4095, 2147483648
    %v4318 = vxor.u32 %v4097, 2147483648
    %v4319 = vxor.u32 %v3522, 2147483648
    %v4320 = vxor.u32 %v3524, 2147483648
    %v4321 = vxor.u32 %v3715, 2147483648
    %v4322 = vxor.u32 %v3717, 2147483648
    %v4323 = vxor.u32 %v3908, 2147483648
    %v4324 = vxor.u32 %v3910, 2147483648
    %v4325 = vxor.u32 %v4101, 2147483648
    %v4326 = vxor.u32 %v4103, 2147483648
    %v4327 = vxor.u32 %v3526, 2147483648
    %v4328 = vxor.u32 %v3528, 2147483648
    %v4329 = vxor.u32 %v3719, 2147483648
    %v4330 = vxor.u32 %v3721, 2147483648
    %v4331 = vxor.u32 %v3912, 2147483648
    %v4332 = vxor.u32 %v3914, 2147483648
    %v4333 = vxor.u32 %v4105, 2147483648
    %v4334 = vxor.u32 %v4107, 2147483648
    %v4335 = vxor.u32 %v3532, 2147483648
    %v4336 = vxor.u32 %v3534, 2147483648
    %v4337 = vxor.u32 %v3725, 2147483648
    %v4338 = vxor.u32 %v3727, 2147483648
    %v4339 = vxor.u32 %v3918, 2147483648
    %v4340 = vxor.u32 %v3920, 2147483648
    %v4341 = vxor.u32 %v4111, 2147483648
    %v4342 = vxor.u32 %v4113, 2147483648
    %v4343 = vxor.u32 %v3536, 2147483648
    %v4344 = vxor.u32 %v3538, 2147483648
    %v4345 = vxor.u32 %v3729, 2147483648
    %v4346 = vxor.u32 %v3731, 2147483648
    %v4347 = vxor.u32 %v3922, 2147483648
    %v4348 = vxor.u32 %v3924, 2147483648
    %v4349 = vxor.u32 %v4115, 2147483648
    %v4350 = vxor.u32 %v4117, 2147483648
    %v4351 = vxor.u32 %v3542, 2147483648
    %v4352 = vxor.u32 %v3544, 2147483648
    %v4353 = vxor.u32 %v3735, 2147483648
    %v4354 = vxor.u32 %v3737, 2147483648
    %v4355 = vxor.u32 %v3928, 2147483648
    %v4356 = vxor.u32 %v3930, 2147483648
    %v4357 = vxor.u32 %v4121, 2147483648
    %v4358 = vxor.u32 %v4123, 2147483648
    %v4359 = vxor.u32 %v3546, 2147483648
    %v4360 = vxor.u32 %v3548, 2147483648
    %v4361 = vxor.u32 %v3739, 2147483648
    %v4362 = vxor.u32 %v3741, 2147483648
    %v4363 = vxor.u32 %v3932, 2147483648
    %v4364 = vxor.u32 %v3934, 2147483648
    %v4365 = vxor.u32 %v4125, 2147483648
    %v4366 = vxor.u32 %v4127, 2147483648
    %v4367 = vxor.u32 %v3552, 2147483648
    %v4368 = vxor.u32 %v3554, 2147483648
    %v4369 = vxor.u32 %v3745, 2147483648
    %v4370 = vxor.u32 %v3747, 2147483648
    %v4371 = vxor.u32 %v3938, 2147483648
    %v4372 = vxor.u32 %v3940, 2147483648
    %v4373 = vxor.u32 %v4131, 2147483648
    %v4374 = vxor.u32 %v4133, 2147483648
    %v4375 = vxor.u32 %v3556, 2147483648
    %v4376 = vxor.u32 %v3558, 2147483648
    %v4377 = vxor.u32 %v3749, 2147483648
    %v4378 = vxor.u32 %v3751, 2147483648
    %v4379 = vxor.u32 %v3942, 2147483648
    %v4380 = vxor.u32 %v3944, 2147483648
    %v4381 = vxor.u32 %v4135, 2147483648
    %v4382 = vxor.u32 %v4137, 2147483648
    %v4383 = vxor.u32 %v3562, 2147483648
    %v4384 = vxor.u32 %v3564, 2147483648
    %v4385 = vxor.u32 %v3755, 2147483648
    %v4386 = vxor.u32 %v3757, 2147483648
    %v4387 = vxor.u32 %v3948, 2147483648
    %v4388 = vxor.u32 %v3950, 2147483648
    %v4389 = vxor.u32 %v4141, 2147483648
    %v4390 = vxor.u32 %v4143, 2147483648
    %v4391 = vxor.u32 %v3566, 2147483648
    %v4392 = vxor.u32 %v3568, 2147483648
    %v4393 = vxor.u32 %v3759, 2147483648
    %v4394 = vxor.u32 %v3761, 2147483648
    %v4395 = vxor.u32 %v3952, 2147483648
    %v4396 = vxor.u32 %v3954, 2147483648
    %v4397 = vxor.u32 %v4145, 2147483648
    %v4398 = vxor.u32 %v4147, 2147483648
    %v4399 = vxor.u32 %v3572, 2147483648
    %v4400 = vxor.u32 %v3574, 2147483648
    %v4401 = vxor.u32 %v3765, 2147483648
    %v4402 = vxor.u32 %v3767, 2147483648
    %v4403 = vxor.u32 %v3958, 2147483648
    %v4404 = vxor.u32 %v3960, 2147483648
    %v4405 = vxor.u32 %v4151, 2147483648
    %v4406 = vxor.u32 %v4153, 2147483648
    %v4407 = vxor.u32 %v3576, 2147483648
    %v4408 = vxor.u32 %v3578, 2147483648
    %v4409 = vxor.u32 %v3769, 2147483648
    %v4410 = vxor.u32 %v3771, 2147483648
    %v4411 = vxor.u32 %v3962, 2147483648
    %v4412 = vxor.u32 %v3964, 2147483648
    %v4413 = vxor.u32 %v4155, 2147483648
    %v4414 = vxor.u32 %v4157, 2147483648
    %v4415 = vmul.f32 %v4159, 1.442695
    %v4416 = vpow.pop %v4415
    %v4417 = vmul.f32 %v4160, 1.442695
    %v4418 = vpow.pop %v4417
    %v4419 = vmul.f32 %v4161, 1.442695
    %v4420 = vpow.pop %v4419
    %v4421 = vmul.f32 %v4162, 1.442695
    %v4422 = vpow.pop %v4421
    %v4423 = vmul.f32 %v4163, 1.442695
    %v4424 = vpow.pop %v4423
    %v4425 = vmul.f32 %v4164, 1.442695
    %v4426 = vpow.pop %v4425
    %v4427 = vmul.f32 %v4165, 1.442695
    %v4428 = vpow.pop %v4427
    %v4429 = vmul.f32 %v4166, 1.442695
    %v4430 = vpow.pop %v4429
    %v4431 = vmul.f32 %v4167, 1.442695
    %v4432 = vpow.pop %v4431
    %v4433 = vmul.f32 %v4168, 1.442695
    %v4434 = vpow.pop %v4433
    %v4435 = vmul.f32 %v4169, 1.442695
    %v4436 = vpow.pop %v4435
    %v4437 = vmul.f32 %v4170, 1.442695
    %v4438 = vpow.pop %v4437
    %v4439 = vmul.f32 %v4171, 1.442695
    %v4440 = vpow.pop %v4439
    %v4441 = vmul.f32 %v4172, 1.442695
    %v4442 = vpow.pop %v4441
    %v4443 = vmul.f32 %v4173, 1.442695
    %v4444 = vpow.pop %v4443
    %v4445 = vmul.f32 %v4174, 1.442695
    %v4446 = vpow.pop %v4445
    %v4447 = vmul.f32 %v4175, 1.442695
    %v4448 = vpow.pop %v4447
    %v4449 = vmul.f32 %v4176, 1.442695
    %v4450 = vpow.pop %v4449
    %v4451 = vmul.f32 %v4177, 1.442695
    %v4452 = vpow.pop %v4451
    %v4453 = vmul.f32 %v4178, 1.442695
    %v4454 = vpow.pop %v4453
    %v4455 = vmul.f32 %v4179, 1.442695
    %v4456 = vpow.pop %v4455
    %v4457 = vmul.f32 %v4180, 1.442695
    %v4458 = vpow.pop %v4457
    %v4459 = vmul.f32 %v4181, 1.442695
    %v4460 = vpow.pop %v4459
    %v4461 = vmul.f32 %v4182, 1.442695
    %v4462 = vpow.pop %v4461
    %v4463 = vmul.f32 %v4183, 1.442695
    %v4464 = vpow.pop %v4463
    %v4465 = vmul.f32 %v4184, 1.442695
    %v4466 = vpow.pop %v4465
    %v4467 = vmul.f32 %v4185, 1.442695
    %v4468 = vpow.pop %v4467
    %v4469 = vmul.f32 %v4186, 1.442695
    %v4470 = vpow.pop %v4469
    %v4471 = vmul.f32 %v4187, 1.442695
    %v4472 = vpow.pop %v4471
    %v4473 = vmul.f32 %v4188, 1.442695
    %v4474 = vpow.pop %v4473
    %v4475 = vmul.f32 %v4189, 1.442695
    %v4476 = vpow.pop %v4475
    %v4477 = vmul.f32 %v4190, 1.442695
    %v4478 = vpow.pop %v4477
    %v4479 = vmul.f32 %v4191, 1.442695
    %v4480 = vpow.pop %v4479
    %v4481 = vmul.f32 %v4192, 1.442695
    %v4482 = vpow.pop %v4481
    %v4483 = vmul.f32 %v4193, 1.442695
    %v4484 = vpow.pop %v4483
    %v4485 = vmul.f32 %v4194, 1.442695
    %v4486 = vpow.pop %v4485
    %v4487 = vmul.f32 %v4195, 1.442695
    %v4488 = vpow.pop %v4487
    %v4489 = vmul.f32 %v4196, 1.442695
    %v4490 = vpow.pop %v4489
    %v4491 = vmul.f32 %v4197, 1.442695
    %v4492 = vpow.pop %v4491
    %v4493 = vmul.f32 %v4198, 1.442695
    %v4494 = vpow.pop %v4493
    %v4495 = vmul.f32 %v4199, 1.442695
    %v4496 = vpow.pop %v4495
    %v4497 = vmul.f32 %v4200, 1.442695
    %v4498 = vpow.pop %v4497
    %v4499 = vmul.f32 %v4201, 1.442695
    %v4500 = vpow.pop %v4499
    %v4501 = vmul.f32 %v4202, 1.442695
    %v4502 = vpow.pop %v4501
    %v4503 = vmul.f32 %v4203, 1.442695
    %v4504 = vpow.pop %v4503
    %v4505 = vmul.f32 %v4204, 1.442695
    %v4506 = vpow.pop %v4505
    %v4507 = vmul.f32 %v4205, 1.442695
    %v4508 = vpow.pop %v4507
    %v4509 = vmul.f32 %v4206, 1.442695
    %v4510 = vpow.pop %v4509
    %v4511 = vmul.f32 %v4207, 1.442695
    %v4512 = vpow.pop %v4511
    %v4513 = vmul.f32 %v4208, 1.442695
    %v4514 = vpow.pop %v4513
    %v4515 = vmul.f32 %v4209, 1.442695
    %v4516 = vpow.pop %v4515
    %v4517 = vmul.f32 %v4210, 1.442695
    %v4518 = vpow.pop %v4517
    %v4519 = vmul.f32 %v4211, 1.442695
    %v4520 = vpow.pop %v4519
    %v4521 = vmul.f32 %v4212, 1.442695
    %v4522 = vpow.pop %v4521
    %v4523 = vmul.f32 %v4213, 1.442695
    %v4524 = vpow.pop %v4523
    %v4525 = vmul.f32 %v4214, 1.442695
    %v4526 = vpow.pop %v4525
    %v4527 = vmul.f32 %v4215, 1.442695
    %v4528 = vpow.pop %v4527
    %v4529 = vmul.f32 %v4216, 1.442695
    %v4530 = vpow.pop %v4529
    %v4531 = vmul.f32 %v4217, 1.442695
    %v4532 = vpow.pop %v4531
    %v4533 = vmul.f32 %v4218, 1.442695
    %v4534 = vpow.pop %v4533
    %v4535 = vmul.f32 %v4219, 1.442695
    %v4536 = vpow.pop %v4535
    %v4537 = vmul.f32 %v4220, 1.442695
    %v4538 = vpow.pop %v4537
    %v4539 = vmul.f32 %v4221, 1.442695
    %v4540 = vpow.pop %v4539
    %v4541 = vmul.f32 %v4222, 1.442695
    %v4542 = vpow.pop %v4541
    %v4543 = vmul.f32 %v4223, 1.442695
    %v4544 = vpow.pop %v4543
    %v4545 = vmul.f32 %v4224, 1.442695
    %v4546 = vpow.pop %v4545
    %v4547 = vmul.f32 %v4225, 1.442695
    %v4548 = vpow.pop %v4547
    %v4549 = vmul.f32 %v4226, 1.442695
    %v4550 = vpow.pop %v4549
    %v4551 = vmul.f32 %v4227, 1.442695
    %v4552 = vpow.pop %v4551
    %v4553 = vmul.f32 %v4228, 1.442695
    %v4554 = vpow.pop %v4553
    %v4555 = vmul.f32 %v4229, 1.442695
    %v4556 = vpow.pop %v4555
    %v4557 = vmul.f32 %v4230, 1.442695
    %v4558 = vpow.pop %v4557
    %v4559 = vmul.f32 %v4231, 1.442695
    %v4560 = vpow.pop %v4559
    %v4561 = vmul.f32 %v4232, 1.442695
    %v4562 = vpow.pop %v4561
    %v4563 = vmul.f32 %v4233, 1.442695
    %v4564 = vpow.pop %v4563
    %v4565 = vmul.f32 %v4234, 1.442695
    %v4566 = vpow.pop %v4565
    %v4567 = vmul.f32 %v4235, 1.442695
    %v4568 = vpow.pop %v4567
    %v4569 = vmul.f32 %v4236, 1.442695
    %v4570 = vpow.pop %v4569
    %v4571 = vmul.f32 %v4237, 1.442695
    %v4572 = vpow.pop %v4571
    %v4573 = vmul.f32 %v4238, 1.442695
    %v4574 = vpow.pop %v4573
    %v4575 = vmul.f32 %v4239, 1.442695
    %v4576 = vpow.pop %v4575
    %v4577 = vmul.f32 %v4240, 1.442695
    %v4578 = vpow.pop %v4577
    %v4579 = vmul.f32 %v4241, 1.442695
    %v4580 = vpow.pop %v4579
    %v4581 = vmul.f32 %v4242, 1.442695
    %v4582 = vpow.pop %v4581
    %v4583 = vmul.f32 %v4243, 1.442695
    %v4584 = vpow.pop %v4583
    %v4585 = vmul.f32 %v4244, 1.442695
    %v4586 = vpow.pop %v4585
    %v4587 = vmul.f32 %v4245, 1.442695
    %v4588 = vpow.pop %v4587
    %v4589 = vmul.f32 %v4246, 1.442695
    %v4590 = vpow.pop %v4589
    %v4591 = vmul.f32 %v4247, 1.442695
    %v4592 = vpow.pop %v4591
    %v4593 = vmul.f32 %v4248, 1.442695
    %v4594 = vpow.pop %v4593
    %v4595 = vmul.f32 %v4249, 1.442695
    %v4596 = vpow.pop %v4595
    %v4597 = vmul.f32 %v4250, 1.442695
    %v4598 = vpow.pop %v4597
    %v4599 = vmul.f32 %v4251, 1.442695
    %v4600 = vpow.pop %v4599
    %v4601 = vmul.f32 %v4252, 1.442695
    %v4602 = vpow.pop %v4601
    %v4603 = vmul.f32 %v4253, 1.442695
    %v4604 = vpow.pop %v4603
    %v4605 = vmul.f32 %v4254, 1.442695
    %v4606 = vpow.pop %v4605
    %v4607 = vmul.f32 %v4255, 1.442695
    %v4608 = vpow.pop %v4607
    %v4609 = vmul.f32 %v4256, 1.442695
    %v4610 = vpow.pop %v4609
    %v4611 = vmul.f32 %v4257, 1.442695
    %v4612 = vpow.pop %v4611
    %v4613 = vmul.f32 %v4258, 1.442695
    %v4614 = vpow.pop %v4613
    %v4615 = vmul.f32 %v4259, 1.442695
    %v4616 = vpow.pop %v4615
    %v4617 = vmul.f32 %v4260, 1.442695
    %v4618 = vpow.pop %v4617
    %v4619 = vmul.f32 %v4261, 1.442695
    %v4620 = vpow.pop %v4619
    %v4621 = vmul.f32 %v4262, 1.442695
    %v4622 = vpow.pop %v4621
    %v4623 = vmul.f32 %v4263, 1.442695
    %v4624 = vpow.pop %v4623
    %v4625 = vmul.f32 %v4264, 1.442695
    %v4626 = vpow.pop %v4625
    %v4627 = vmul.f32 %v4265, 1.442695
    %v4628 = vpow.pop %v4627
    %v4629 = vmul.f32 %v4266, 1.442695
    %v4630 = vpow.pop %v4629
    %v4631 = vmul.f32 %v4267, 1.442695
    %v4632 = vpow.pop %v4631
    %v4633 = vmul.f32 %v4268, 1.442695
    %v4634 = vpow.pop %v4633
    %v4635 = vmul.f32 %v4269, 1.442695
    %v4636 = vpow.pop %v4635
    %v4637 = vmul.f32 %v4270, 1.442695
    %v4638 = vpow.pop %v4637
    %v4639 = vmul.f32 %v4271, 1.442695
    %v4640 = vpow.pop %v4639
    %v4641 = vmul.f32 %v4272, 1.442695
    %v4642 = vpow.pop %v4641
    %v4643 = vmul.f32 %v4273, 1.442695
    %v4644 = vpow.pop %v4643
    %v4645 = vmul.f32 %v4274, 1.442695
    %v4646 = vpow.pop %v4645
    %v4647 = vmul.f32 %v4275, 1.442695
    %v4648 = vpow.pop %v4647
    %v4649 = vmul.f32 %v4276, 1.442695
    %v4650 = vpow.pop %v4649
    %v4651 = vmul.f32 %v4277, 1.442695
    %v4652 = vpow.pop %v4651
    %v4653 = vmul.f32 %v4278, 1.442695
    %v4654 = vpow.pop %v4653
    %v4655 = vmul.f32 %v4279, 1.442695
    %v4656 = vpow.pop %v4655
    %v4657 = vmul.f32 %v4280, 1.442695
    %v4658 = vpow.pop %v4657
    %v4659 = vmul.f32 %v4281, 1.442695
    %v4660 = vpow.pop %v4659
    %v4661 = vmul.f32 %v4282, 1.442695
    %v4662 = vpow.pop %v4661
    %v4663 = vmul.f32 %v4283, 1.442695
    %v4664 = vpow.pop %v4663
    %v4665 = vmul.f32 %v4284, 1.442695
    %v4666 = vpow.pop %v4665
    %v4667 = vmul.f32 %v4285, 1.442695
    %v4668 = vpow.pop %v4667
    %v4669 = vmul.f32 %v4286, 1.442695
    %v4670 = vpow.pop %v4669
    %v4671 = vmul.f32 %v4287, 1.442695
    %v4672 = vpow.pop %v4671
    %v4673 = vmul.f32 %v4288, 1.442695
    %v4674 = vpow.pop %v4673
    %v4675 = vmul.f32 %v4289, 1.442695
    %v4676 = vpow.pop %v4675
    %v4677 = vmul.f32 %v4290, 1.442695
    %v4678 = vpow.pop %v4677
    %v4679 = vmul.f32 %v4291, 1.442695
    %v4680 = vpow.pop %v4679
    %v4681 = vmul.f32 %v4292, 1.442695
    %v4682 = vpow.pop %v4681
    %v4683 = vmul.f32 %v4293, 1.442695
    %v4684 = vpow.pop %v4683
    %v4685 = vmul.f32 %v4294, 1.442695
    %v4686 = vpow.pop %v4685
    %v4687 = vmul.f32 %v4295, 1.442695
    %v4688 = vpow.pop %v4687
    %v4689 = vmul.f32 %v4296, 1.442695
    %v4690 = vpow.pop %v4689
    %v4691 = vmul.f32 %v4297, 1.442695
    %v4692 = vpow.pop %v4691
    %v4693 = vmul.f32 %v4298, 1.442695
    %v4694 = vpow.pop %v4693
    %v4695 = vmul.f32 %v4299, 1.442695
    %v4696 = vpow.pop %v4695
    %v4697 = vmul.f32 %v4300, 1.442695
    %v4698 = vpow.pop %v4697
    %v4699 = vmul.f32 %v4301, 1.442695
    %v4700 = vpow.pop %v4699
    %v4701 = vmul.f32 %v4302, 1.442695
    %v4702 = vpow.pop %v4701
    %v4703 = vmul.f32 %v4303, 1.442695
    %v4704 = vpow.pop %v4703
    %v4705 = vmul.f32 %v4304, 1.442695
    %v4706 = vpow.pop %v4705
    %v4707 = vmul.f32 %v4305, 1.442695
    %v4708 = vpow.pop %v4707
    %v4709 = vmul.f32 %v4306, 1.442695
    %v4710 = vpow.pop %v4709
    %v4711 = vmul.f32 %v4307, 1.442695
    %v4712 = vpow.pop %v4711
    %v4713 = vmul.f32 %v4308, 1.442695
    %v4714 = vpow.pop %v4713
    %v4715 = vmul.f32 %v4309, 1.442695
    %v4716 = vpow.pop %v4715
    %v4717 = vmul.f32 %v4310, 1.442695
    %v4718 = vpow.pop %v4717
    %v4719 = vmul.f32 %v4311, 1.442695
    %v4720 = vpow.pop %v4719
    %v4721 = vmul.f32 %v4312, 1.442695
    %v4722 = vpow.pop %v4721
    %v4723 = vmul.f32 %v4313, 1.442695
    %v4724 = vpow.pop %v4723
    %v4725 = vmul.f32 %v4314, 1.442695
    %v4726 = vpow.pop %v4725
    %v4727 = vmul.f32 %v4315, 1.442695
    %v4728 = vpow.pop %v4727
    %v4729 = vmul.f32 %v4316, 1.442695
    %v4730 = vpow.pop %v4729
    %v4731 = vmul.f32 %v4317, 1.442695
    %v4732 = vpow.pop %v4731
    %v4733 = vmul.f32 %v4318, 1.442695
    %v4734 = vpow.pop %v4733
    %v4735 = vmul.f32 %v4319, 1.442695
    %v4736 = vpow.pop %v4735
    %v4737 = vmul.f32 %v4320, 1.442695
    %v4738 = vpow.pop %v4737
    %v4739 = vmul.f32 %v4321, 1.442695
    %v4740 = vpow.pop %v4739
    %v4741 = vmul.f32 %v4322, 1.442695
    %v4742 = vpow.pop %v4741
    %v4743 = vmul.f32 %v4323, 1.442695
    %v4744 = vpow.pop %v4743
    %v4745 = vmul.f32 %v4324, 1.442695
    %v4746 = vpow.pop %v4745
    %v4747 = vmul.f32 %v4325, 1.442695
    %v4748 = vpow.pop %v4747
    %v4749 = vmul.f32 %v4326, 1.442695
    %v4750 = vpow.pop %v4749
    %v4751 = vmul.f32 %v4327, 1.442695
    %v4752 = vpow.pop %v4751
    %v4753 = vmul.f32 %v4328, 1.442695
    %v4754 = vpow.pop %v4753
    %v4755 = vmul.f32 %v4329, 1.442695
    %v4756 = vpow.pop %v4755
    %v4757 = vmul.f32 %v4330, 1.442695
    %v4758 = vpow.pop %v4757
    %v4759 = vmul.f32 %v4331, 1.442695
    %v4760 = vpow.pop %v4759
    %v4761 = vmul.f32 %v4332, 1.442695
    %v4762 = vpow.pop %v4761
    %v4763 = vmul.f32 %v4333, 1.442695
    %v4764 = vpow.pop %v4763
    %v4765 = vmul.f32 %v4334, 1.442695
    %v4766 = vpow.pop %v4765
    %v4767 = vmul.f32 %v4335, 1.442695
    %v4768 = vpow.pop %v4767
    %v4769 = vmul.f32 %v4336, 1.442695
    %v4770 = vpow.pop %v4769
    %v4771 = vmul.f32 %v4337, 1.442695
    %v4772 = vpow.pop %v4771
    %v4773 = vmul.f32 %v4338, 1.442695
    %v4774 = vpow.pop %v4773
    %v4775 = vmul.f32 %v4339, 1.442695
    %v4776 = vpow.pop %v4775
    %v4777 = vmul.f32 %v4340, 1.442695
    %v4778 = vpow.pop %v4777
    %v4779 = vmul.f32 %v4341, 1.442695
    %v4780 = vpow.pop %v4779
    %v4781 = vmul.f32 %v4342, 1.442695
    %v4782 = vpow.pop %v4781
    %v4783 = vmul.f32 %v4343, 1.442695
    %v4784 = vpow.pop %v4783
    %v4785 = vmul.f32 %v4344, 1.442695
    %v4786 = vpow.pop %v4785
    %v4787 = vmul.f32 %v4345, 1.442695
    %v4788 = vpow.pop %v4787
    %v4789 = vmul.f32 %v4346, 1.442695
    %v4790 = vpow.pop %v4789
    %v4791 = vmul.f32 %v4347, 1.442695
    %v4792 = vpow.pop %v4791
    %v4793 = vmul.f32 %v4348, 1.442695
    %v4794 = vpow.pop %v4793
    %v4795 = vmul.f32 %v4349, 1.442695
    %v4796 = vpow.pop %v4795
    %v4797 = vmul.f32 %v4350, 1.442695
    %v4798 = vpow.pop %v4797
    %v4799 = vmul.f32 %v4351, 1.442695
    %v4800 = vpow.pop %v4799
    %v4801 = vmul.f32 %v4352, 1.442695
    %v4802 = vpow.pop %v4801
    %v4803 = vmul.f32 %v4353, 1.442695
    %v4804 = vpow.pop %v4803
    %v4805 = vmul.f32 %v4354, 1.442695
    %v4806 = vpow.pop %v4805
    %v4807 = vmul.f32 %v4355, 1.442695
    %v4808 = vpow.pop %v4807
    %v4809 = vmul.f32 %v4356, 1.442695
    %v4810 = vpow.pop %v4809
    %v4811 = vmul.f32 %v4357, 1.442695
    %v4812 = vpow.pop %v4811
    %v4813 = vmul.f32 %v4358, 1.442695
    %v4814 = vpow.pop %v4813
    %v4815 = vmul.f32 %v4359, 1.442695
    %v4816 = vpow.pop %v4815
    %v4817 = vmul.f32 %v4360, 1.442695
    %v4818 = vpow.pop %v4817
    %v4819 = vmul.f32 %v4361, 1.442695
    %v4820 = vpow.pop %v4819
    %v4821 = vmul.f32 %v4362, 1.442695
    %v4822 = vpow.pop %v4821
    %v4823 = vmul.f32 %v4363, 1.442695
    %v4824 = vpow.pop %v4823
    %v4825 = vmul.f32 %v4364, 1.442695
    %v4826 = vpow.pop %v4825
    %v4827 = vmul.f32 %v4365, 1.442695
    %v4828 = vpow.pop %v4827
    %v4829 = vmul.f32 %v4366, 1.442695
    %v4830 = vpow.pop %v4829
    %v4831 = vmul.f32 %v4367, 1.442695
    %v4832 = vpow.pop %v4831
    %v4833 = vmul.f32 %v4368, 1.442695
    %v4834 = vpow.pop %v4833
    %v4835 = vmul.f32 %v4369, 1.442695
    %v4836 = vpow.pop %v4835
    %v4837 = vmul.f32 %v4370, 1.442695
    %v4838 = vpow.pop %v4837
    %v4839 = vmul.f32 %v4371, 1.442695
    %v4840 = vpow.pop %v4839
    %v4841 = vmul.f32 %v4372, 1.442695
    %v4842 = vpow.pop %v4841
    %v4843 = vmul.f32 %v4373, 1.442695
    %v4844 = vpow.pop %v4843
    %v4845 = vmul.f32 %v4374, 1.442695
    %v4846 = vpow.pop %v4845
    %v4847 = vmul.f32 %v4375, 1.442695
    %v4848 = vpow.pop %v4847
    %v4849 = vmul.f32 %v4376, 1.442695
    %v4850 = vpow.pop %v4849
    %v4851 = vmul.f32 %v4377, 1.442695
    %v4852 = vpow.pop %v4851
    %v4853 = vmul.f32 %v4378, 1.442695
    %v4854 = vpow.pop %v4853
    %v4855 = vmul.f32 %v4379, 1.442695
    %v4856 = vpow.pop %v4855
    %v4857 = vmul.f32 %v4380, 1.442695
    %v4858 = vpow.pop %v4857
    %v4859 = vmul.f32 %v4381, 1.442695
    %v4860 = vpow.pop %v4859
    %v4861 = vmul.f32 %v4382, 1.442695
    %v4862 = vpow.pop %v4861
    %v4863 = vmul.f32 %v4383, 1.442695
    %v4864 = vpow.pop %v4863
    %v4865 = vmul.f32 %v4384, 1.442695
    %v4866 = vpow.pop %v4865
    %v4867 = vmul.f32 %v4385, 1.442695
    %v4868 = vpow.pop %v4867
    %v4869 = vmul.f32 %v4386, 1.442695
    %v4870 = vpow.pop %v4869
    %v4871 = vmul.f32 %v4387, 1.442695
    %v4872 = vpow.pop %v4871
    %v4873 = vmul.f32 %v4388, 1.442695
    %v4874 = vpow.pop %v4873
    %v4875 = vmul.f32 %v4389, 1.442695
    %v4876 = vpow.pop %v4875
    %v4877 = vmul.f32 %v4390, 1.442695
    %v4878 = vpow.pop %v4877
    %v4879 = vmul.f32 %v4391, 1.442695
    %v4880 = vpow.pop %v4879
    %v4881 = vmul.f32 %v4392, 1.442695
    %v4882 = vpow.pop %v4881
    %v4883 = vmul.f32 %v4393, 1.442695
    %v4884 = vpow.pop %v4883
    %v4885 = vmul.f32 %v4394, 1.442695
    %v4886 = vpow.pop %v4885
    %v4887 = vmul.f32 %v4395, 1.442695
    %v4888 = vpow.pop %v4887
    %v4889 = vmul.f32 %v4396, 1.442695
    %v4890 = vpow.pop %v4889
    %v4891 = vmul.f32 %v4397, 1.442695
    %v4892 = vpow.pop %v4891
    %v4893 = vmul.f32 %v4398, 1.442695
    %v4894 = vpow.pop %v4893
    %v4895 = vmul.f32 %v4399, 1.442695
    %v4896 = vpow.pop %v4895
    %v4897 = vmul.f32 %v4400, 1.442695
    %v4898 = vpow.pop %v4897
    %v4899 = vmul.f32 %v4401, 1.442695
    %v4900 = vpow.pop %v4899
    %v4901 = vmul.f32 %v4402, 1.442695
    %v4902 = vpow.pop %v4901
    %v4903 = vmul.f32 %v4403, 1.442695
    %v4904 = vpow.pop %v4903
    %v4905 = vmul.f32 %v4404, 1.442695
    %v4906 = vpow.pop %v4905
    %v4907 = vmul.f32 %v4405, 1.442695
    %v4908 = vpow.pop %v4907
    %v4909 = vmul.f32 %v4406, 1.442695
    %v4910 = vpow.pop %v4909
    %v4911 = vmul.f32 %v4407, 1.442695
    %v4912 = vpow.pop %v4911
    %v4913 = vmul.f32 %v4408, 1.442695
    %v4914 = vpow.pop %v4913
    %v4915 = vmul.f32 %v4409, 1.442695
    %v4916 = vpow.pop %v4915
    %v4917 = vmul.f32 %v4410, 1.442695
    %v4918 = vpow.pop %v4917
    %v4919 = vmul.f32 %v4411, 1.442695
    %v4920 = vpow.pop %v4919
    %v4921 = vmul.f32 %v4412, 1.442695
    %v4922 = vpow.pop %v4921
    %v4923 = vmul.f32 %v4413, 1.442695
    %v4924 = vpow.pop %v4923
    %v4925 = vmul.f32 %v4414, 1.442695
    %v4926 = vpow.pop %v4925
    %v4927 = vadd.f32 %v4416, 1.0
    %v4928 = vadd.f32 %v4418, 1.0
    %v4929 = vadd.f32 %v4420, 1.0
    %v4930 = vadd.f32 %v4422, 1.0
    %v4931 = vadd.f32 %v4424, 1.0
    %v4932 = vadd.f32 %v4426, 1.0
    %v4933 = vadd.f32 %v4428, 1.0
    %v4934 = vadd.f32 %v4430, 1.0
    %v4935 = vadd.f32 %v4432, 1.0
    %v4936 = vadd.f32 %v4434, 1.0
    %v4937 = vadd.f32 %v4436, 1.0
    %v4938 = vadd.f32 %v4438, 1.0
    %v4939 = vadd.f32 %v4440, 1.0
    %v4940 = vadd.f32 %v4442, 1.0
    %v4941 = vadd.f32 %v4444, 1.0
    %v4942 = vadd.f32 %v4446, 1.0
    %v4943 = vadd.f32 %v4448, 1.0
    %v4944 = vadd.f32 %v4450, 1.0
    %v4945 = vadd.f32 %v4452, 1.0
    %v4946 = vadd.f32 %v4454, 1.0
    %v4947 = vadd.f32 %v4456, 1.0
    %v4948 = vadd.f32 %v4458, 1.0
    %v4949 = vadd.f32 %v4460, 1.0
    %v4950 = vadd.f32 %v4462, 1.0
    %v4951 = vadd.f32 %v4464, 1.0
    %v4952 = vadd.f32 %v4466, 1.0
    %v4953 = vadd.f32 %v4468, 1.0
    %v4954 = vadd.f32 %v4470, 1.0
    %v4955 = vadd.f32 %v4472, 1.0
    %v4956 = vadd.f32 %v4474, 1.0
    %v4957 = vadd.f32 %v4476, 1.0
    %v4958 = vadd.f32 %v4478, 1.0
    %v4959 = vadd.f32 %v4480, 1.0
    %v4960 = vadd.f32 %v4482, 1.0
    %v4961 = vadd.f32 %v4484, 1.0
    %v4962 = vadd.f32 %v4486, 1.0
    %v4963 = vadd.f32 %v4488, 1.0
    %v4964 = vadd.f32 %v4490, 1.0
    %v4965 = vadd.f32 %v4492, 1.0
    %v4966 = vadd.f32 %v4494, 1.0
    %v4967 = vadd.f32 %v4496, 1.0
    %v4968 = vadd.f32 %v4498, 1.0
    %v4969 = vadd.f32 %v4500, 1.0
    %v4970 = vadd.f32 %v4502, 1.0
    %v4971 = vadd.f32 %v4504, 1.0
    %v4972 = vadd.f32 %v4506, 1.0
    %v4973 = vadd.f32 %v4508, 1.0
    %v4974 = vadd.f32 %v4510, 1.0
    %v4975 = vadd.f32 %v4512, 1.0
    %v4976 = vadd.f32 %v4514, 1.0
    %v4977 = vadd.f32 %v4516, 1.0
    %v4978 = vadd.f32 %v4518, 1.0
    %v4979 = vadd.f32 %v4520, 1.0
    %v4980 = vadd.f32 %v4522, 1.0
    %v4981 = vadd.f32 %v4524, 1.0
    %v4982 = vadd.f32 %v4526, 1.0
    %v4983 = vadd.f32 %v4528, 1.0
    %v4984 = vadd.f32 %v4530, 1.0
    %v4985 = vadd.f32 %v4532, 1.0
    %v4986 = vadd.f32 %v4534, 1.0
    %v4987 = vadd.f32 %v4536, 1.0
    %v4988 = vadd.f32 %v4538, 1.0
    %v4989 = vadd.f32 %v4540, 1.0
    %v4990 = vadd.f32 %v4542, 1.0
    %v4991 = vadd.f32 %v4544, 1.0
    %v4992 = vadd.f32 %v4546, 1.0
    %v4993 = vadd.f32 %v4548, 1.0
    %v4994 = vadd.f32 %v4550, 1.0
    %v4995 = vadd.f32 %v4552, 1.0
    %v4996 = vadd.f32 %v4554, 1.0
    %v4997 = vadd.f32 %v4556, 1.0
    %v4998 = vadd.f32 %v4558, 1.0
    %v4999 = vadd.f32 %v4560, 1.0
    %v5000 = vadd.f32 %v4562, 1.0
    %v5001 = vadd.f32 %v4564, 1.0
    %v5002 = vadd.f32 %v4566, 1.0
    %v5003 = vadd.f32 %v4568, 1.0
    %v5004 = vadd.f32 %v4570, 1.0
    %v5005 = vadd.f32 %v4572, 1.0
    %v5006 = vadd.f32 %v4574, 1.0
    %v5007 = vadd.f32 %v4576, 1.0
    %v5008 = vadd.f32 %v4578, 1.0
    %v5009 = vadd.f32 %v4580, 1.0
    %v5010 = vadd.f32 %v4582, 1.0
    %v5011 = vadd.f32 %v4584, 1.0
    %v5012 = vadd.f32 %v4586, 1.0
    %v5013 = vadd.f32 %v4588, 1.0
    %v5014 = vadd.f32 %v4590, 1.0
    %v5015 = vadd.f32 %v4592, 1.0
    %v5016 = vadd.f32 %v4594, 1.0
    %v5017 = vadd.f32 %v4596, 1.0
    %v5018 = vadd.f32 %v4598, 1.0
    %v5019 = vadd.f32 %v4600, 1.0
    %v5020 = vadd.f32 %v4602, 1.0
    %v5021 = vadd.f32 %v4604, 1.0
    %v5022 = vadd.f32 %v4606, 1.0
    %v5023 = vadd.f32 %v4608, 1.0
    %v5024 = vadd.f32 %v4610, 1.0
    %v5025 = vadd.f32 %v4612, 1.0
    %v5026 = vadd.f32 %v4614, 1.0
    %v5027 = vadd.f32 %v4616, 1.0
    %v5028 = vadd.f32 %v4618, 1.0
    %v5029 = vadd.f32 %v4620, 1.0
    %v5030 = vadd.f32 %v4622, 1.0
    %v5031 = vadd.f32 %v4624, 1.0
    %v5032 = vadd.f32 %v4626, 1.0
    %v5033 = vadd.f32 %v4628, 1.0
    %v5034 = vadd.f32 %v4630, 1.0
    %v5035 = vadd.f32 %v4632, 1.0
    %v5036 = vadd.f32 %v4634, 1.0
    %v5037 = vadd.f32 %v4636, 1.0
    %v5038 = vadd.f32 %v4638, 1.0
    %v5039 = vadd.f32 %v4640, 1.0
    %v5040 = vadd.f32 %v4642, 1.0
    %v5041 = vadd.f32 %v4644, 1.0
    %v5042 = vadd.f32 %v4646, 1.0
    %v5043 = vadd.f32 %v4648, 1.0
    %v5044 = vadd.f32 %v4650, 1.0
    %v5045 = vadd.f32 %v4652, 1.0
    %v5046 = vadd.f32 %v4654, 1.0
    %v5047 = vadd.f32 %v4656, 1.0
    %v5048 = vadd.f32 %v4658, 1.0
    %v5049 = vadd.f32 %v4660, 1.0
    %v5050 = vadd.f32 %v4662, 1.0
    %v5051 = vadd.f32 %v4664, 1.0
    %v5052 = vadd.f32 %v4666, 1.0
    %v5053 = vadd.f32 %v4668, 1.0
    %v5054 = vadd.f32 %v4670, 1.0
    %v5055 = vadd.f32 %v4672, 1.0
    %v5056 = vadd.f32 %v4674, 1.0
    %v5057 = vadd.f32 %v4676, 1.0
    %v5058 = vadd.f32 %v4678, 1.0
    %v5059 = vadd.f32 %v4680, 1.0
    %v5060 = vadd.f32 %v4682, 1.0
    %v5061 = vadd.f32 %v4684, 1.0
    %v5062 = vadd.f32 %v4686, 1.0
    %v5063 = vadd.f32 %v4688, 1.0
    %v5064 = vadd.f32 %v4690, 1.0
    %v5065 = vadd.f32 %v4692, 1.0
    %v5066 = vadd.f32 %v4694, 1.0
    %v5067 = vadd.f32 %v4696, 1.0
    %v5068 = vadd.f32 %v4698, 1.0
    %v5069 = vadd.f32 %v4700, 1.0
    %v5070 = vadd.f32 %v4702, 1.0
    %v5071 = vadd.f32 %v4704, 1.0
    %v5072 = vadd.f32 %v4706, 1.0
    %v5073 = vadd.f32 %v4708, 1.0
    %v5074 = vadd.f32 %v4710, 1.0
    %v5075 = vadd.f32 %v4712, 1.0
    %v5076 = vadd.f32 %v4714, 1.0
    %v5077 = vadd.f32 %v4716, 1.0
    %v5078 = vadd.f32 %v4718, 1.0
    %v5079 = vadd.f32 %v4720, 1.0
    %v5080 = vadd.f32 %v4722, 1.0
    %v5081 = vadd.f32 %v4724, 1.0
    %v5082 = vadd.f32 %v4726, 1.0
    %v5083 = vadd.f32 %v4728, 1.0
    %v5084 = vadd.f32 %v4730, 1.0
    %v5085 = vadd.f32 %v4732, 1.0
    %v5086 = vadd.f32 %v4734, 1.0
    %v5087 = vadd.f32 %v4736, 1.0
    %v5088 = vadd.f32 %v4738, 1.0
    %v5089 = vadd.f32 %v4740, 1.0
    %v5090 = vadd.f32 %v4742, 1.0
    %v5091 = vadd.f32 %v4744, 1.0
    %v5092 = vadd.f32 %v4746, 1.0
    %v5093 = vadd.f32 %v4748, 1.0
    %v5094 = vadd.f32 %v4750, 1.0
    %v5095 = vadd.f32 %v4752, 1.0
    %v5096 = vadd.f32 %v4754, 1.0
    %v5097 = vadd.f32 %v4756, 1.0
    %v5098 = vadd.f32 %v4758, 1.0
    %v5099 = vadd.f32 %v4760, 1.0
    %v5100 = vadd.f32 %v4762, 1.0
    %v5101 = vadd.f32 %v4764, 1.0
    %v5102 = vadd.f32 %v4766, 1.0
    %v5103 = vadd.f32 %v4768, 1.0
    %v5104 = vadd.f32 %v4770, 1.0
    %v5105 = vadd.f32 %v4772, 1.0
    %v5106 = vadd.f32 %v4774, 1.0
    %v5107 = vadd.f32 %v4776, 1.0
    %v5108 = vadd.f32 %v4778, 1.0
    %v5109 = vadd.f32 %v4780, 1.0
    %v5110 = vadd.f32 %v4782, 1.0
    %v5111 = vadd.f32 %v4784, 1.0
    %v5112 = vadd.f32 %v4786, 1.0
    %v5113 = vadd.f32 %v4788, 1.0
    %v5114 = vadd.f32 %v4790, 1.0
    %v5115 = vadd.f32 %v4792, 1.0
    %v5116 = vadd.f32 %v4794, 1.0
    %v5117 = vadd.f32 %v4796, 1.0
    %v5118 = vadd.f32 %v4798, 1.0
    %v5119 = vadd.f32 %v4800, 1.0
    %v5120 = vadd.f32 %v4802, 1.0
    %v5121 = vadd.f32 %v4804, 1.0
    %v5122 = vadd.f32 %v4806, 1.0
    %v5123 = vadd.f32 %v4808, 1.0
    %v5124 = vadd.f32 %v4810, 1.0
    %v5125 = vadd.f32 %v4812, 1.0
    %v5126 = vadd.f32 %v4814, 1.0
    %v5127 = vadd.f32 %v4816, 1.0
    %v5128 = vadd.f32 %v4818, 1.0
    %v5129 = vadd.f32 %v4820, 1.0
    %v5130 = vadd.f32 %v4822, 1.0
    %v5131 = vadd.f32 %v4824, 1.0
    %v5132 = vadd.f32 %v4826, 1.0
    %v5133 = vadd.f32 %v4828, 1.0
    %v5134 = vadd.f32 %v4830, 1.0
    %v5135 = vadd.f32 %v4832, 1.0
    %v5136 = vadd.f32 %v4834, 1.0
    %v5137 = vadd.f32 %v4836, 1.0
    %v5138 = vadd.f32 %v4838, 1.0
    %v5139 = vadd.f32 %v4840, 1.0
    %v5140 = vadd.f32 %v4842, 1.0
    %v5141 = vadd.f32 %v4844, 1.0
    %v5142 = vadd.f32 %v4846, 1.0
    %v5143 = vadd.f32 %v4848, 1.0
    %v5144 = vadd.f32 %v4850, 1.0
    %v5145 = vadd.f32 %v4852, 1.0
    %v5146 = vadd.f32 %v4854, 1.0
    %v5147 = vadd.f32 %v4856, 1.0
    %v5148 = vadd.f32 %v4858, 1.0
    %v5149 = vadd.f32 %v4860, 1.0
    %v5150 = vadd.f32 %v4862, 1.0
    %v5151 = vadd.f32 %v4864, 1.0
    %v5152 = vadd.f32 %v4866, 1.0
    %v5153 = vadd.f32 %v4868, 1.0
    %v5154 = vadd.f32 %v4870, 1.0
    %v5155 = vadd.f32 %v4872, 1.0
    %v5156 = vadd.f32 %v4874, 1.0
    %v5157 = vadd.f32 %v4876, 1.0
    %v5158 = vadd.f32 %v4878, 1.0
    %v5159 = vadd.f32 %v4880, 1.0
    %v5160 = vadd.f32 %v4882, 1.0
    %v5161 = vadd.f32 %v4884, 1.0
    %v5162 = vadd.f32 %v4886, 1.0
    %v5163 = vadd.f32 %v4888, 1.0
    %v5164 = vadd.f32 %v4890, 1.0
    %v5165 = vadd.f32 %v4892, 1.0
    %v5166 = vadd.f32 %v4894, 1.0
    %v5167 = vadd.f32 %v4896, 1.0
    %v5168 = vadd.f32 %v4898, 1.0
    %v5169 = vadd.f32 %v4900, 1.0
    %v5170 = vadd.f32 %v4902, 1.0
    %v5171 = vadd.f32 %v4904, 1.0
    %v5172 = vadd.f32 %v4906, 1.0
    %v5173 = vadd.f32 %v4908, 1.0
    %v5174 = vadd.f32 %v4910, 1.0
    %v5175 = vadd.f32 %v4912, 1.0
    %v5176 = vadd.f32 %v4914, 1.0
    %v5177 = vadd.f32 %v4916, 1.0
    %v5178 = vadd.f32 %v4918, 1.0
    %v5179 = vadd.f32 %v4920, 1.0
    %v5180 = vadd.f32 %v4922, 1.0
    %v5181 = vadd.f32 %v4924, 1.0
    %v5182 = vadd.f32 %v4926, 1.0
    %v5183 = vrcp.pop %v4927
    %v5184 = vmul.f32 1.0, %v5183
    %v5185 = vrcp.pop %v4928
    %v5186 = vmul.f32 1.0, %v5185
    %v5187 = vrcp.pop %v4929
    %v5188 = vmul.f32 1.0, %v5187
    %v5189 = vrcp.pop %v4930
    %v5190 = vmul.f32 1.0, %v5189
    %v5191 = vrcp.pop %v4931
    %v5192 = vmul.f32 1.0, %v5191
    %v5193 = vrcp.pop %v4932
    %v5194 = vmul.f32 1.0, %v5193
    %v5195 = vrcp.pop %v4933
    %v5196 = vmul.f32 1.0, %v5195
    %v5197 = vrcp.pop %v4934
    %v5198 = vmul.f32 1.0, %v5197
    %v5199 = vrcp.pop %v4935
    %v5200 = vmul.f32 1.0, %v5199
    %v5201 = vrcp.pop %v4936
    %v5202 = vmul.f32 1.0, %v5201
    %v5203 = vrcp.pop %v4937
    %v5204 = vmul.f32 1.0, %v5203
    %v5205 = vrcp.pop %v4938
    %v5206 = vmul.f32 1.0, %v5205
    %v5207 = vrcp.pop %v4939
    %v5208 = vmul.f32 1.0, %v5207
    %v5209 = vrcp.pop %v4940
    %v5210 = vmul.f32 1.0, %v5209
    %v5211 = vrcp.pop %v4941
    %v5212 = vmul.f32 1.0, %v5211
    %v5213 = vrcp.pop %v4942
    %v5214 = vmul.f32 1.0, %v5213
    %v5215 = vrcp.pop %v4943
    %v5216 = vmul.f32 1.0, %v5215
    %v5217 = vrcp.pop %v4944
    %v5218 = vmul.f32 1.0, %v5217
    %v5219 = vrcp.pop %v4945
    %v5220 = vmul.f32 1.0, %v5219
    %v5221 = vrcp.pop %v4946
    %v5222 = vmul.f32 1.0, %v5221
    %v5223 = vrcp.pop %v4947
    %v5224 = vmul.f32 1.0, %v5223
    %v5225 = vrcp.pop %v4948
    %v5226 = vmul.f32 1.0, %v5225
    %v5227 = vrcp.pop %v4949
    %v5228 = vmul.f32 1.0, %v5227
    %v5229 = vrcp.pop %v4950
    %v5230 = vmul.f32 1.0, %v5229
    %v5231 = vrcp.pop %v4951
    %v5232 = vmul.f32 1.0, %v5231
    %v5233 = vrcp.pop %v4952
    %v5234 = vmul.f32 1.0, %v5233
    %v5235 = vrcp.pop %v4953
    %v5236 = vmul.f32 1.0, %v5235
    %v5237 = vrcp.pop %v4954
    %v5238 = vmul.f32 1.0, %v5237
    %v5239 = vrcp.pop %v4955
    %v5240 = vmul.f32 1.0, %v5239
    %v5241 = vrcp.pop %v4956
    %v5242 = vmul.f32 1.0, %v5241
    %v5243 = vrcp.pop %v4957
    %v5244 = vmul.f32 1.0, %v5243
    %v5245 = vrcp.pop %v4958
    %v5246 = vmul.f32 1.0, %v5245
    %v5247 = vrcp.pop %v4959
    %v5248 = vmul.f32 1.0, %v5247
    %v5249 = vrcp.pop %v4960
    %v5250 = vmul.f32 1.0, %v5249
    %v5251 = vrcp.pop %v4961
    %v5252 = vmul.f32 1.0, %v5251
    %v5253 = vrcp.pop %v4962
    %v5254 = vmul.f32 1.0, %v5253
    %v5255 = vrcp.pop %v4963
    %v5256 = vmul.f32 1.0, %v5255
    %v5257 = vrcp.pop %v4964
    %v5258 = vmul.f32 1.0, %v5257
    %v5259 = vrcp.pop %v4965
    %v5260 = vmul.f32 1.0, %v5259
    %v5261 = vrcp.pop %v4966
    %v5262 = vmul.f32 1.0, %v5261
    %v5263 = vrcp.pop %v4967
    %v5264 = vmul.f32 1.0, %v5263
    %v5265 = vrcp.pop %v4968
    %v5266 = vmul.f32 1.0, %v5265
    %v5267 = vrcp.pop %v4969
    %v5268 = vmul.f32 1.0, %v5267
    %v5269 = vrcp.pop %v4970
    %v5270 = vmul.f32 1.0, %v5269
    %v5271 = vrcp.pop %v4971
    %v5272 = vmul.f32 1.0, %v5271
    %v5273 = vrcp.pop %v4972
    %v5274 = vmul.f32 1.0, %v5273
    %v5275 = vrcp.pop %v4973
    %v5276 = vmul.f32 1.0, %v5275
    %v5277 = vrcp.pop %v4974
    %v5278 = vmul.f32 1.0, %v5277
    %v5279 = vrcp.pop %v4975
    %v5280 = vmul.f32 1.0, %v5279
    %v5281 = vrcp.pop %v4976
    %v5282 = vmul.f32 1.0, %v5281
    %v5283 = vrcp.pop %v4977
    %v5284 = vmul.f32 1.0, %v5283
    %v5285 = vrcp.pop %v4978
    %v5286 = vmul.f32 1.0, %v5285
    %v5287 = vrcp.pop %v4979
    %v5288 = vmul.f32 1.0, %v5287
    %v5289 = vrcp.pop %v4980
    %v5290 = vmul.f32 1.0, %v5289
    %v5291 = vrcp.pop %v4981
    %v5292 = vmul.f32 1.0, %v5291
    %v5293 = vrcp.pop %v4982
    %v5294 = vmul.f32 1.0, %v5293
    %v5295 = vrcp.pop %v4983
    %v5296 = vmul.f32 1.0, %v5295
    %v5297 = vrcp.pop %v4984
    %v5298 = vmul.f32 1.0, %v5297
    %v5299 = vrcp.pop %v4985
    %v5300 = vmul.f32 1.0, %v5299
    %v5301 = vrcp.pop %v4986
    %v5302 = vmul.f32 1.0, %v5301
    %v5303 = vrcp.pop %v4987
    %v5304 = vmul.f32 1.0, %v5303
    %v5305 = vrcp.pop %v4988
    %v5306 = vmul.f32 1.0, %v5305
    %v5307 = vrcp.pop %v4989
    %v5308 = vmul.f32 1.0, %v5307
    %v5309 = vrcp.pop %v4990
    %v5310 = vmul.f32 1.0, %v5309
    %v5311 = vrcp.pop %v4991
    %v5312 = vmul.f32 1.0, %v5311
    %v5313 = vrcp.pop %v4992
    %v5314 = vmul.f32 1.0, %v5313
    %v5315 = vrcp.pop %v4993
    %v5316 = vmul.f32 1.0, %v5315
    %v5317 = vrcp.pop %v4994
    %v5318 = vmul.f32 1.0, %v5317
    %v5319 = vrcp.pop %v4995
    %v5320 = vmul.f32 1.0, %v5319
    %v5321 = vrcp.pop %v4996
    %v5322 = vmul.f32 1.0, %v5321
    %v5323 = vrcp.pop %v4997
    %v5324 = vmul.f32 1.0, %v5323
    %v5325 = vrcp.pop %v4998
    %v5326 = vmul.f32 1.0, %v5325
    %v5327 = vrcp.pop %v4999
    %v5328 = vmul.f32 1.0, %v5327
    %v5329 = vrcp.pop %v5000
    %v5330 = vmul.f32 1.0, %v5329
    %v5331 = vrcp.pop %v5001
    %v5332 = vmul.f32 1.0, %v5331
    %v5333 = vrcp.pop %v5002
    %v5334 = vmul.f32 1.0, %v5333
    %v5335 = vrcp.pop %v5003
    %v5336 = vmul.f32 1.0, %v5335
    %v5337 = vrcp.pop %v5004
    %v5338 = vmul.f32 1.0, %v5337
    %v5339 = vrcp.pop %v5005
    %v5340 = vmul.f32 1.0, %v5339
    %v5341 = vrcp.pop %v5006
    %v5342 = vmul.f32 1.0, %v5341
    %v5343 = vrcp.pop %v5007
    %v5344 = vmul.f32 1.0, %v5343
    %v5345 = vrcp.pop %v5008
    %v5346 = vmul.f32 1.0, %v5345
    %v5347 = vrcp.pop %v5009
    %v5348 = vmul.f32 1.0, %v5347
    %v5349 = vrcp.pop %v5010
    %v5350 = vmul.f32 1.0, %v5349
    %v5351 = vrcp.pop %v5011
    %v5352 = vmul.f32 1.0, %v5351
    %v5353 = vrcp.pop %v5012
    %v5354 = vmul.f32 1.0, %v5353
    %v5355 = vrcp.pop %v5013
    %v5356 = vmul.f32 1.0, %v5355
    %v5357 = vrcp.pop %v5014
    %v5358 = vmul.f32 1.0, %v5357
    %v5359 = vrcp.pop %v5015
    %v5360 = vmul.f32 1.0, %v5359
    %v5361 = vrcp.pop %v5016
    %v5362 = vmul.f32 1.0, %v5361
    %v5363 = vrcp.pop %v5017
    %v5364 = vmul.f32 1.0, %v5363
    %v5365 = vrcp.pop %v5018
    %v5366 = vmul.f32 1.0, %v5365
    %v5367 = vrcp.pop %v5019
    %v5368 = vmul.f32 1.0, %v5367
    %v5369 = vrcp.pop %v5020
    %v5370 = vmul.f32 1.0, %v5369
    %v5371 = vrcp.pop %v5021
    %v5372 = vmul.f32 1.0, %v5371
    %v5373 = vrcp.pop %v5022
    %v5374 = vmul.f32 1.0, %v5373
    %v5375 = vrcp.pop %v5023
    %v5376 = vmul.f32 1.0, %v5375
    %v5377 = vrcp.pop %v5024
    %v5378 = vmul.f32 1.0, %v5377
    %v5379 = vrcp.pop %v5025
    %v5380 = vmul.f32 1.0, %v5379
    %v5381 = vrcp.pop %v5026
    %v5382 = vmul.f32 1.0, %v5381
    %v5383 = vrcp.pop %v5027
    %v5384 = vmul.f32 1.0, %v5383
    %v5385 = vrcp.pop %v5028
    %v5386 = vmul.f32 1.0, %v5385
    %v5387 = vrcp.pop %v5029
    %v5388 = vmul.f32 1.0, %v5387
    %v5389 = vrcp.pop %v5030
    %v5390 = vmul.f32 1.0, %v5389
    %v5391 = vrcp.pop %v5031
    %v5392 = vmul.f32 1.0, %v5391
    %v5393 = vrcp.pop %v5032
    %v5394 = vmul.f32 1.0, %v5393
    %v5395 = vrcp.pop %v5033
    %v5396 = vmul.f32 1.0, %v5395
    %v5397 = vrcp.pop %v5034
    %v5398 = vmul.f32 1.0, %v5397
    %v5399 = vrcp.pop %v5035
    %v5400 = vmul.f32 1.0, %v5399
    %v5401 = vrcp.pop %v5036
    %v5402 = vmul.f32 1.0, %v5401
    %v5403 = vrcp.pop %v5037
    %v5404 = vmul.f32 1.0, %v5403
    %v5405 = vrcp.pop %v5038
    %v5406 = vmul.f32 1.0, %v5405
    %v5407 = vrcp.pop %v5039
    %v5408 = vmul.f32 1.0, %v5407
    %v5409 = vrcp.pop %v5040
    %v5410 = vmul.f32 1.0, %v5409
    %v5411 = vrcp.pop %v5041
    %v5412 = vmul.f32 1.0, %v5411
    %v5413 = vrcp.pop %v5042
    %v5414 = vmul.f32 1.0, %v5413
    %v5415 = vrcp.pop %v5043
    %v5416 = vmul.f32 1.0, %v5415
    %v5417 = vrcp.pop %v5044
    %v5418 = vmul.f32 1.0, %v5417
    %v5419 = vrcp.pop %v5045
    %v5420 = vmul.f32 1.0, %v5419
    %v5421 = vrcp.pop %v5046
    %v5422 = vmul.f32 1.0, %v5421
    %v5423 = vrcp.pop %v5047
    %v5424 = vmul.f32 1.0, %v5423
    %v5425 = vrcp.pop %v5048
    %v5426 = vmul.f32 1.0, %v5425
    %v5427 = vrcp.pop %v5049
    %v5428 = vmul.f32 1.0, %v5427
    %v5429 = vrcp.pop %v5050
    %v5430 = vmul.f32 1.0, %v5429
    %v5431 = vrcp.pop %v5051
    %v5432 = vmul.f32 1.0, %v5431
    %v5433 = vrcp.pop %v5052
    %v5434 = vmul.f32 1.0, %v5433
    %v5435 = vrcp.pop %v5053
    %v5436 = vmul.f32 1.0, %v5435
    %v5437 = vrcp.pop %v5054
    %v5438 = vmul.f32 1.0, %v5437
    %v5439 = vrcp.pop %v5055
    %v5440 = vmul.f32 1.0, %v5439
    %v5441 = vrcp.pop %v5056
    %v5442 = vmul.f32 1.0, %v5441
    %v5443 = vrcp.pop %v5057
    %v5444 = vmul.f32 1.0, %v5443
    %v5445 = vrcp.pop %v5058
    %v5446 = vmul.f32 1.0, %v5445
    %v5447 = vrcp.pop %v5059
    %v5448 = vmul.f32 1.0, %v5447
    %v5449 = vrcp.pop %v5060
    %v5450 = vmul.f32 1.0, %v5449
    %v5451 = vrcp.pop %v5061
    %v5452 = vmul.f32 1.0, %v5451
    %v5453 = vrcp.pop %v5062
    %v5454 = vmul.f32 1.0, %v5453
    %v5455 = vrcp.pop %v5063
    %v5456 = vmul.f32 1.0, %v5455
    %v5457 = vrcp.pop %v5064
    %v5458 = vmul.f32 1.0, %v5457
    %v5459 = vrcp.pop %v5065
    %v5460 = vmul.f32 1.0, %v5459
    %v5461 = vrcp.pop %v5066
    %v5462 = vmul.f32 1.0, %v5461
    %v5463 = vrcp.pop %v5067
    %v5464 = vmul.f32 1.0, %v5463
    %v5465 = vrcp.pop %v5068
    %v5466 = vmul.f32 1.0, %v5465
    %v5467 = vrcp.pop %v5069
    %v5468 = vmul.f32 1.0, %v5467
    %v5469 = vrcp.pop %v5070
    %v5470 = vmul.f32 1.0, %v5469
    %v5471 = vrcp.pop %v5071
    %v5472 = vmul.f32 1.0, %v5471
    %v5473 = vrcp.pop %v5072
    %v5474 = vmul.f32 1.0, %v5473
    %v5475 = vrcp.pop %v5073
    %v5476 = vmul.f32 1.0, %v5475
    %v5477 = vrcp.pop %v5074
    %v5478 = vmul.f32 1.0, %v5477
    %v5479 = vrcp.pop %v5075
    %v5480 = vmul.f32 1.0, %v5479
    %v5481 = vrcp.pop %v5076
    %v5482 = vmul.f32 1.0, %v5481
    %v5483 = vrcp.pop %v5077
    %v5484 = vmul.f32 1.0, %v5483
    %v5485 = vrcp.pop %v5078
    %v5486 = vmul.f32 1.0, %v5485
    %v5487 = vrcp.pop %v5079
    %v5488 = vmul.f32 1.0, %v5487
    %v5489 = vrcp.pop %v5080
    %v5490 = vmul.f32 1.0, %v5489
    %v5491 = vrcp.pop %v5081
    %v5492 = vmul.f32 1.0, %v5491
    %v5493 = vrcp.pop %v5082
    %v5494 = vmul.f32 1.0, %v5493
    %v5495 = vrcp.pop %v5083
    %v5496 = vmul.f32 1.0, %v5495
    %v5497 = vrcp.pop %v5084
    %v5498 = vmul.f32 1.0, %v5497
    %v5499 = vrcp.pop %v5085
    %v5500 = vmul.f32 1.0, %v5499
    %v5501 = vrcp.pop %v5086
    %v5502 = vmul.f32 1.0, %v5501
    %v5503 = vrcp.pop %v5087
    %v5504 = vmul.f32 1.0, %v5503
    %v5505 = vrcp.pop %v5088
    %v5506 = vmul.f32 1.0, %v5505
    %v5507 = vrcp.pop %v5089
    %v5508 = vmul.f32 1.0, %v5507
    %v5509 = vrcp.pop %v5090
    %v5510 = vmul.f32 1.0, %v5509
    %v5511 = vrcp.pop %v5091
    %v5512 = vmul.f32 1.0, %v5511
    %v5513 = vrcp.pop %v5092
    %v5514 = vmul.f32 1.0, %v5513
    %v5515 = vrcp.pop %v5093
    %v5516 = vmul.f32 1.0, %v5515
    %v5517 = vrcp.pop %v5094
    %v5518 = vmul.f32 1.0, %v5517
    %v5519 = vrcp.pop %v5095
    %v5520 = vmul.f32 1.0, %v5519
    %v5521 = vrcp.pop %v5096
    %v5522 = vmul.f32 1.0, %v5521
    %v5523 = vrcp.pop %v5097
    %v5524 = vmul.f32 1.0, %v5523
    %v5525 = vrcp.pop %v5098
    %v5526 = vmul.f32 1.0, %v5525
    %v5527 = vrcp.pop %v5099
    %v5528 = vmul.f32 1.0, %v5527
    %v5529 = vrcp.pop %v5100
    %v5530 = vmul.f32 1.0, %v5529
    %v5531 = vrcp.pop %v5101
    %v5532 = vmul.f32 1.0, %v5531
    %v5533 = vrcp.pop %v5102
    %v5534 = vmul.f32 1.0, %v5533
    %v5535 = vrcp.pop %v5103
    %v5536 = vmul.f32 1.0, %v5535
    %v5537 = vrcp.pop %v5104
    %v5538 = vmul.f32 1.0, %v5537
    %v5539 = vrcp.pop %v5105
    %v5540 = vmul.f32 1.0, %v5539
    %v5541 = vrcp.pop %v5106
    %v5542 = vmul.f32 1.0, %v5541
    %v5543 = vrcp.pop %v5107
    %v5544 = vmul.f32 1.0, %v5543
    %v5545 = vrcp.pop %v5108
    %v5546 = vmul.f32 1.0, %v5545
    %v5547 = vrcp.pop %v5109
    %v5548 = vmul.f32 1.0, %v5547
    %v5549 = vrcp.pop %v5110
    %v5550 = vmul.f32 1.0, %v5549
    %v5551 = vrcp.pop %v5111
    %v5552 = vmul.f32 1.0, %v5551
    %v5553 = vrcp.pop %v5112
    %v5554 = vmul.f32 1.0, %v5553
    %v5555 = vrcp.pop %v5113
    %v5556 = vmul.f32 1.0, %v5555
    %v5557 = vrcp.pop %v5114
    %v5558 = vmul.f32 1.0, %v5557
    %v5559 = vrcp.pop %v5115
    %v5560 = vmul.f32 1.0, %v5559
    %v5561 = vrcp.pop %v5116
    %v5562 = vmul.f32 1.0, %v5561
    %v5563 = vrcp.pop %v5117
    %v5564 = vmul.f32 1.0, %v5563
    %v5565 = vrcp.pop %v5118
    %v5566 = vmul.f32 1.0, %v5565
    %v5567 = vrcp.pop %v5119
    %v5568 = vmul.f32 1.0, %v5567
    %v5569 = vrcp.pop %v5120
    %v5570 = vmul.f32 1.0, %v5569
    %v5571 = vrcp.pop %v5121
    %v5572 = vmul.f32 1.0, %v5571
    %v5573 = vrcp.pop %v5122
    %v5574 = vmul.f32 1.0, %v5573
    %v5575 = vrcp.pop %v5123
    %v5576 = vmul.f32 1.0, %v5575
    %v5577 = vrcp.pop %v5124
    %v5578 = vmul.f32 1.0, %v5577
    %v5579 = vrcp.pop %v5125
    %v5580 = vmul.f32 1.0, %v5579
    %v5581 = vrcp.pop %v5126
    %v5582 = vmul.f32 1.0, %v5581
    %v5583 = vrcp.pop %v5127
    %v5584 = vmul.f32 1.0, %v5583
    %v5585 = vrcp.pop %v5128
    %v5586 = vmul.f32 1.0, %v5585
    %v5587 = vrcp.pop %v5129
    %v5588 = vmul.f32 1.0, %v5587
    %v5589 = vrcp.pop %v5130
    %v5590 = vmul.f32 1.0, %v5589
    %v5591 = vrcp.pop %v5131
    %v5592 = vmul.f32 1.0, %v5591
    %v5593 = vrcp.pop %v5132
    %v5594 = vmul.f32 1.0, %v5593
    %v5595 = vrcp.pop %v5133
    %v5596 = vmul.f32 1.0, %v5595
    %v5597 = vrcp.pop %v5134
    %v5598 = vmul.f32 1.0, %v5597
    %v5599 = vrcp.pop %v5135
    %v5600 = vmul.f32 1.0, %v5599
    %v5601 = vrcp.pop %v5136
    %v5602 = vmul.f32 1.0, %v5601
    %v5603 = vrcp.pop %v5137
    %v5604 = vmul.f32 1.0, %v5603
    %v5605 = vrcp.pop %v5138
    %v5606 = vmul.f32 1.0, %v5605
    %v5607 = vrcp.pop %v5139
    %v5608 = vmul.f32 1.0, %v5607
    %v5609 = vrcp.pop %v5140
    %v5610 = vmul.f32 1.0, %v5609
    %v5611 = vrcp.pop %v5141
    %v5612 = vmul.f32 1.0, %v5611
    %v5613 = vrcp.pop %v5142
    %v5614 = vmul.f32 1.0, %v5613
    %v5615 = vrcp.pop %v5143
    %v5616 = vmul.f32 1.0, %v5615
    %v5617 = vrcp.pop %v5144
    %v5618 = vmul.f32 1.0, %v5617
    %v5619 = vrcp.pop %v5145
    %v5620 = vmul.f32 1.0, %v5619
    %v5621 = vrcp.pop %v5146
    %v5622 = vmul.f32 1.0, %v5621
    %v5623 = vrcp.pop %v5147
    %v5624 = vmul.f32 1.0, %v5623
    %v5625 = vrcp.pop %v5148
    %v5626 = vmul.f32 1.0, %v5625
    %v5627 = vrcp.pop %v5149
    %v5628 = vmul.f32 1.0, %v5627
    %v5629 = vrcp.pop %v5150
    %v5630 = vmul.f32 1.0, %v5629
    %v5631 = vrcp.pop %v5151
    %v5632 = vmul.f32 1.0, %v5631
    %v5633 = vrcp.pop %v5152
    %v5634 = vmul.f32 1.0, %v5633
    %v5635 = vrcp.pop %v5153
    %v5636 = vmul.f32 1.0, %v5635
    %v5637 = vrcp.pop %v5154
    %v5638 = vmul.f32 1.0, %v5637
    %v5639 = vrcp.pop %v5155
    %v5640 = vmul.f32 1.0, %v5639
    %v5641 = vrcp.pop %v5156
    %v5642 = vmul.f32 1.0, %v5641
    %v5643 = vrcp.pop %v5157
    %v5644 = vmul.f32 1.0, %v5643
    %v5645 = vrcp.pop %v5158
    %v5646 = vmul.f32 1.0, %v5645
    %v5647 = vrcp.pop %v5159
    %v5648 = vmul.f32 1.0, %v5647
    %v5649 = vrcp.pop %v5160
    %v5650 = vmul.f32 1.0, %v5649
    %v5651 = vrcp.pop %v5161
    %v5652 = vmul.f32 1.0, %v5651
    %v5653 = vrcp.pop %v5162
    %v5654 = vmul.f32 1.0, %v5653
    %v5655 = vrcp.pop %v5163
    %v5656 = vmul.f32 1.0, %v5655
    %v5657 = vrcp.pop %v5164
    %v5658 = vmul.f32 1.0, %v5657
    %v5659 = vrcp.pop %v5165
    %v5660 = vmul.f32 1.0, %v5659
    %v5661 = vrcp.pop %v5166
    %v5662 = vmul.f32 1.0, %v5661
    %v5663 = vrcp.pop %v5167
    %v5664 = vmul.f32 1.0, %v5663
    %v5665 = vrcp.pop %v5168
    %v5666 = vmul.f32 1.0, %v5665
    %v5667 = vrcp.pop %v5169
    %v5668 = vmul.f32 1.0, %v5667
    %v5669 = vrcp.pop %v5170
    %v5670 = vmul.f32 1.0, %v5669
    %v5671 = vrcp.pop %v5171
    %v5672 = vmul.f32 1.0, %v5671
    %v5673 = vrcp.pop %v5172
    %v5674 = vmul.f32 1.0, %v5673
    %v5675 = vrcp.pop %v5173
    %v5676 = vmul.f32 1.0, %v5675
    %v5677 = vrcp.pop %v5174
    %v5678 = vmul.f32 1.0, %v5677
    %v5679 = vrcp.pop %v5175
    %v5680 = vmul.f32 1.0, %v5679
    %v5681 = vrcp.pop %v5176
    %v5682 = vmul.f32 1.0, %v5681
    %v5683 = vrcp.pop %v5177
    %v5684 = vmul.f32 1.0, %v5683
    %v5685 = vrcp.pop %v5178
    %v5686 = vmul.f32 1.0, %v5685
    %v5687 = vrcp.pop %v5179
    %v5688 = vmul.f32 1.0, %v5687
    %v5689 = vrcp.pop %v5180
    %v5690 = vmul.f32 1.0, %v5689
    %v5691 = vrcp.pop %v5181
    %v5692 = vmul.f32 1.0, %v5691
    %v5693 = vrcp.pop %v5182
    %v5694 = vmul.f32 1.0, %v5693
    %5695 = vst [vmem:[#allocation11] sm:$0xff] %v5184
    %5696 = vst [vmem:[#allocation11 + $0x8] sm:$0xff] %v5186
    %5697 = vst [vmem:[#allocation11 + $0x10] sm:$0xff] %v5188
    %5698 = vst [vmem:[#allocation11 + $0x18] sm:$0xff] %v5190
    %5699 = vst [vmem:[#allocation11 + $0x20] sm:$0xff] %v5192
    %5700 = vst [vmem:[#allocation11 + $0x28] sm:$0xff] %v5194
    %5701 = vst [vmem:[#allocation11 + $0x30] sm:$0xff] %v5196
    %5702 = vst [vmem:[#allocation11 + $0x38] sm:$0xff] %v5198
    %5703 = vst [vmem:[#allocation11 + $0x40] sm:$0xff] %v5200
    %5704 = vst [vmem:[#allocation11 + $0x48] sm:$0xff] %v5202
    %5705 = vst [vmem:[#allocation11 + $0x50] sm:$0xff] %v5204
    %5706 = vst [vmem:[#allocation11 + $0x58] sm:$0xff] %v5206
    %5707 = vst [vmem:[#allocation11 + $0x60] sm:$0xff] %v5208
    %5708 = vst [vmem:[#allocation11 + $0x68] sm:$0xff] %v5210
    %5709 = vst [vmem:[#allocation11 + $0x70] sm:$0xff] %v5212
    %5710 = vst [vmem:[#allocation11 + $0x78] sm:$0xff] %v5214
    %5711 = vst [vmem:[#allocation11 + $0x80] sm:$0xff] %v5216
    %5712 = vst [vmem:[#allocation11 + $0x88] sm:$0xff] %v5218
    %5713 = vst [vmem:[#allocation11 + $0x90] sm:$0xff] %v5220
    %5714 = vst [vmem:[#allocation11 + $0x98] sm:$0xff] %v5222
    %5715 = vst [vmem:[#allocation11 + $0xa0] sm:$0xff] %v5224
    %5716 = vst [vmem:[#allocation11 + $0xa8] sm:$0xff] %v5226
    %5717 = vst [vmem:[#allocation11 + $0xb0] sm:$0xff] %v5228
    %5718 = vst [vmem:[#allocation11 + $0xb8] sm:$0xff] %v5230
    %5719 = vst [vmem:[#allocation11 + $0xc0] sm:$0xff] %v5232
    %5720 = vst [vmem:[#allocation11 + $0xc8] sm:$0xff] %v5234
    %5721 = vst [vmem:[#allocation11 + $0xd0] sm:$0xff] %v5236
    %5722 = vst [vmem:[#allocation11 + $0xd8] sm:$0xff] %v5238
    %5723 = vst [vmem:[#allocation11 + $0xe0] sm:$0xff] %v5240
    %5724 = vst [vmem:[#allocation11 + $0xe8] sm:$0xff] %v5242
    %5725 = vst [vmem:[#allocation11 + $0xf0] sm:$0xff] %v5244
    %5726 = vst [vmem:[#allocation11 + $0xf8] sm:$0xff] %v5246
    %5727 = vst [vmem:[#allocation11 + $0x100] sm:$0xff] %v5248
    %5728 = vst [vmem:[#allocation11 + $0x108] sm:$0xff] %v5250
    %5729 = vst [vmem:[#allocation11 + $0x110] sm:$0xff] %v5252
    %5730 = vst [vmem:[#allocation11 + $0x118] sm:$0xff] %v5254
    %5731 = vst [vmem:[#allocation11 + $0x120] sm:$0xff] %v5256
    %5732 = vst [vmem:[#allocation11 + $0x128] sm:$0xff] %v5258
    %5733 = vst [vmem:[#allocation11 + $0x130] sm:$0xff] %v5260
    %5734 = vst [vmem:[#allocation11 + $0x138] sm:$0xff] %v5262
    %5735 = vst [vmem:[#allocation11 + $0x140] sm:$0xff] %v5264
    %5736 = vst [vmem:[#allocation11 + $0x148] sm:$0xff] %v5266
    %5737 = vst [vmem:[#allocation11 + $0x150] sm:$0xff] %v5268
    %5738 = vst [vmem:[#allocation11 + $0x158] sm:$0xff] %v5270
    %5739 = vst [vmem:[#allocation11 + $0x160] sm:$0xff] %v5272
    %5740 = vst [vmem:[#allocation11 + $0x168] sm:$0xff] %v5274
    %5741 = vst [vmem:[#allocation11 + $0x170] sm:$0xff] %v5276
    %5742 = vst [vmem:[#allocation11 + $0x178] sm:$0xff] %v5278
    %5743 = vst [vmem:[#allocation11 + $0x180] sm:$0xff] %v5280
    %5744 = vst [vmem:[#allocation11 + $0x188] sm:$0xff] %v5282
    %5745 = vst [vmem:[#allocation11 + $0x190] sm:$0xff] %v5284
    %5746 = vst [vmem:[#allocation11 + $0x198] sm:$0xff] %v5286
    %5747 = vst [vmem:[#allocation11 + $0x1a0] sm:$0xff] %v5288
    %5748 = vst [vmem:[#allocation11 + $0x1a8] sm:$0xff] %v5290
    %5749 = vst [vmem:[#allocation11 + $0x1b0] sm:$0xff] %v5292
    %5750 = vst [vmem:[#allocation11 + $0x1b8] sm:$0xff] %v5294
    %5751 = vst [vmem:[#allocation11 + $0x1c0] sm:$0xff] %v5296
    %5752 = vst [vmem:[#allocation11 + $0x1c8] sm:$0xff] %v5298
    %5753 = vst [vmem:[#allocation11 + $0x1d0] sm:$0xff] %v5300
    %5754 = vst [vmem:[#allocation11 + $0x1d8] sm:$0xff] %v5302
    %5755 = vst [vmem:[#allocation11 + $0x1e0] sm:$0xff] %v5304
    %5756 = vst [vmem:[#allocation11 + $0x1e8] sm:$0xff] %v5306
    %5757 = vst [vmem:[#allocation11 + $0x1f0] sm:$0xff] %v5308
    %5758 = vst [vmem:[#allocation11 + $0x1f8] sm:$0xff] %v5310
    %5759 = vst [vmem:[#allocation11 + $0x200] sm:$0xff] %v5312
    %5760 = vst [vmem:[#allocation11 + $0x208] sm:$0xff] %v5314
    %5761 = vst [vmem:[#allocation11 + $0x210] sm:$0xff] %v5316
    %5762 = vst [vmem:[#allocation11 + $0x218] sm:$0xff] %v5318
    %5763 = vst [vmem:[#allocation11 + $0x220] sm:$0xff] %v5320
    %5764 = vst [vmem:[#allocation11 + $0x228] sm:$0xff] %v5322
    %5765 = vst [vmem:[#allocation11 + $0x230] sm:$0xff] %v5324
    %5766 = vst [vmem:[#allocation11 + $0x238] sm:$0xff] %v5326
    %5767 = vst [vmem:[#allocation11 + $0x240] sm:$0xff] %v5328
    %5768 = vst [vmem:[#allocation11 + $0x248] sm:$0xff] %v5330
    %5769 = vst [vmem:[#allocation11 + $0x250] sm:$0xff] %v5332
    %5770 = vst [vmem:[#allocation11 + $0x258] sm:$0xff] %v5334
    %5771 = vst [vmem:[#allocation11 + $0x260] sm:$0xff] %v5336
    %5772 = vst [vmem:[#allocation11 + $0x268] sm:$0xff] %v5338
    %5773 = vst [vmem:[#allocation11 + $0x270] sm:$0xff] %v5340
    %5774 = vst [vmem:[#allocation11 + $0x278] sm:$0xff] %v5342
    %5775 = vst [vmem:[#allocation11 + $0x280] sm:$0xff] %v5344
    %5776 = vst [vmem:[#allocation11 + $0x288] sm:$0xff] %v5346
    %5777 = vst [vmem:[#allocation11 + $0x290] sm:$0xff] %v5348
    %5778 = vst [vmem:[#allocation11 + $0x298] sm:$0xff] %v5350
    %5779 = vst [vmem:[#allocation11 + $0x2a0] sm:$0xff] %v5352
    %5780 = vst [vmem:[#allocation11 + $0x2a8] sm:$0xff] %v5354
    %5781 = vst [vmem:[#allocation11 + $0x2b0] sm:$0xff] %v5356
    %5782 = vst [vmem:[#allocation11 + $0x2b8] sm:$0xff] %v5358
    %5783 = vst [vmem:[#allocation11 + $0x2c0] sm:$0xff] %v5360
    %5784 = vst [vmem:[#allocation11 + $0x2c8] sm:$0xff] %v5362
    %5785 = vst [vmem:[#allocation11 + $0x2d0] sm:$0xff] %v5364
    %5786 = vst [vmem:[#allocation11 + $0x2d8] sm:$0xff] %v5366
    %5787 = vst [vmem:[#allocation11 + $0x2e0] sm:$0xff] %v5368
    %5788 = vst [vmem:[#allocation11 + $0x2e8] sm:$0xff] %v5370
    %5789 = vst [vmem:[#allocation11 + $0x2f0] sm:$0xff] %v5372
    %5790 = vst [vmem:[#allocation11 + $0x2f8] sm:$0xff] %v5374
    %5791 = vst [vmem:[#allocation11 + $0x300] sm:$0xff] %v5376
    %5792 = vst [vmem:[#allocation11 + $0x308] sm:$0xff] %v5378
    %5793 = vst [vmem:[#allocation11 + $0x310] sm:$0xff] %v5380
    %5794 = vst [vmem:[#allocation11 + $0x318] sm:$0xff] %v5382
    %5795 = vst [vmem:[#allocation11 + $0x320] sm:$0xff] %v5384
    %5796 = vst [vmem:[#allocation11 + $0x328] sm:$0xff] %v5386
    %5797 = vst [vmem:[#allocation11 + $0x330] sm:$0xff] %v5388
    %5798 = vst [vmem:[#allocation11 + $0x338] sm:$0xff] %v5390
    %5799 = vst [vmem:[#allocation11 + $0x340] sm:$0xff] %v5392
    %5800 = vst [vmem:[#allocation11 + $0x348] sm:$0xff] %v5394
    %5801 = vst [vmem:[#allocation11 + $0x350] sm:$0xff] %v5396
    %5802 = vst [vmem:[#allocation11 + $0x358] sm:$0xff] %v5398
    %5803 = vst [vmem:[#allocation11 + $0x360] sm:$0xff] %v5400
    %5804 = vst [vmem:[#allocation11 + $0x368] sm:$0xff] %v5402
    %5805 = vst [vmem:[#allocation11 + $0x370] sm:$0xff] %v5404
    %5806 = vst [vmem:[#allocation11 + $0x378] sm:$0xff] %v5406
    %5807 = vst [vmem:[#allocation11 + $0x380] sm:$0xff] %v5408
    %5808 = vst [vmem:[#allocation11 + $0x388] sm:$0xff] %v5410
    %5809 = vst [vmem:[#allocation11 + $0x390] sm:$0xff] %v5412
    %5810 = vst [vmem:[#allocation11 + $0x398] sm:$0xff] %v5414
    %5811 = vst [vmem:[#allocation11 + $0x3a0] sm:$0xff] %v5416
    %5812 = vst [vmem:[#allocation11 + $0x3a8] sm:$0xff] %v5418
    %5813 = vst [vmem:[#allocation11 + $0x3b0] sm:$0xff] %v5420
    %5814 = vst [vmem:[#allocation11 + $0x3b8] sm:$0xff] %v5422
    %5815 = vst [vmem:[#allocation11 + $0x3c0] sm:$0xff] %v5424
    %5816 = vst [vmem:[#allocation11 + $0x3c8] sm:$0xff] %v5426
    %5817 = vst [vmem:[#allocation11 + $0x3d0] sm:$0xff] %v5428
    %5818 = vst [vmem:[#allocation11 + $0x3d8] sm:$0xff] %v5430
    %5819 = vst [vmem:[#allocation11 + $0x3e0] sm:$0xff] %v5432
    %5820 = vst [vmem:[#allocation11 + $0x3e8] sm:$0xff] %v5434
    %5821 = vst [vmem:[#allocation11 + $0x3f0] sm:$0xff] %v5436
    %5822 = vst [vmem:[#allocation11 + $0x3f8] sm:$0xff] %v5438
    %5823 = vst [vmem:[#allocation11 + $0x400] sm:$0xff] %v5440
    %5824 = vst [vmem:[#allocation11 + $0x408] sm:$0xff] %v5442
    %5825 = vst [vmem:[#allocation11 + $0x410] sm:$0xff] %v5444
    %5826 = vst [vmem:[#allocation11 + $0x418] sm:$0xff] %v5446
    %5827 = vst [vmem:[#allocation11 + $0x420] sm:$0xff] %v5448
    %5828 = vst [vmem:[#allocation11 + $0x428] sm:$0xff] %v5450
    %5829 = vst [vmem:[#allocation11 + $0x430] sm:$0xff] %v5452
    %5830 = vst [vmem:[#allocation11 + $0x438] sm:$0xff] %v5454
    %5831 = vst [vmem:[#allocation11 + $0x440] sm:$0xff] %v5456
    %5832 = vst [vmem:[#allocation11 + $0x448] sm:$0xff] %v5458
    %5833 = vst [vmem:[#allocation11 + $0x450] sm:$0xff] %v5460
    %5834 = vst [vmem:[#allocation11 + $0x458] sm:$0xff] %v5462
    %5835 = vst [vmem:[#allocation11 + $0x460] sm:$0xff] %v5464
    %5836 = vst [vmem:[#allocation11 + $0x468] sm:$0xff] %v5466
    %5837 = vst [vmem:[#allocation11 + $0x470] sm:$0xff] %v5468
    %5838 = vst [vmem:[#allocation11 + $0x478] sm:$0xff] %v5470
    %5839 = vst [vmem:[#allocation11 + $0x480] sm:$0xff] %v5472
    %5840 = vst [vmem:[#allocation11 + $0x488] sm:$0xff] %v5474
    %5841 = vst [vmem:[#allocation11 + $0x490] sm:$0xff] %v5476
    %5842 = vst [vmem:[#allocation11 + $0x498] sm:$0xff] %v5478
    %5843 = vst [vmem:[#allocation11 + $0x4a0] sm:$0xff] %v5480
    %5844 = vst [vmem:[#allocation11 + $0x4a8] sm:$0xff] %v5482
    %5845 = vst [vmem:[#allocation11 + $0x4b0] sm:$0xff] %v5484
    %5846 = vst [vmem:[#allocation11 + $0x4b8] sm:$0xff] %v5486
    %5847 = vst [vmem:[#allocation11 + $0x4c0] sm:$0xff] %v5488
    %5848 = vst [vmem:[#allocation11 + $0x4c8] sm:$0xff] %v5490
    %5849 = vst [vmem:[#allocation11 + $0x4d0] sm:$0xff] %v5492
    %5850 = vst [vmem:[#allocation11 + $0x4d8] sm:$0xff] %v5494
    %5851 = vst [vmem:[#allocation11 + $0x4e0] sm:$0xff] %v5496
    %5852 = vst [vmem:[#allocation11 + $0x4e8] sm:$0xff] %v5498
    %5853 = vst [vmem:[#allocation11 + $0x4f0] sm:$0xff] %v5500
    %5854 = vst [vmem:[#allocation11 + $0x4f8] sm:$0xff] %v5502
    %5855 = vst [vmem:[#allocation11 + $0x500] sm:$0xff] %v5504
    %5856 = vst [vmem:[#allocation11 + $0x508] sm:$0xff] %v5506
    %5857 = vst [vmem:[#allocation11 + $0x510] sm:$0xff] %v5508
    %5858 = vst [vmem:[#allocation11 + $0x518] sm:$0xff] %v5510
    %5859 = vst [vmem:[#allocation11 + $0x520] sm:$0xff] %v5512
    %5860 = vst [vmem:[#allocation11 + $0x528] sm:$0xff] %v5514
    %5861 = vst [vmem:[#allocation11 + $0x530] sm:$0xff] %v5516
    %5862 = vst [vmem:[#allocation11 + $0x538] sm:$0xff] %v5518
    %5863 = vst [vmem:[#allocation11 + $0x540] sm:$0xff] %v5520
    %5864 = vst [vmem:[#allocation11 + $0x548] sm:$0xff] %v5522
    %5865 = vst [vmem:[#allocation11 + $0x550] sm:$0xff] %v5524
    %5866 = vst [vmem:[#allocation11 + $0x558] sm:$0xff] %v5526
    %5867 = vst [vmem:[#allocation11 + $0x560] sm:$0xff] %v5528
    %5868 = vst [vmem:[#allocation11 + $0x568] sm:$0xff] %v5530
    %5869 = vst [vmem:[#allocation11 + $0x570] sm:$0xff] %v5532
    %5870 = vst [vmem:[#allocation11 + $0x578] sm:$0xff] %v5534
    %5871 = vst [vmem:[#allocation11 + $0x580] sm:$0xff] %v5536
    %5872 = vst [vmem:[#allocation11 + $0x588] sm:$0xff] %v5538
    %5873 = vst [vmem:[#allocation11 + $0x590] sm:$0xff] %v5540
    %5874 = vst [vmem:[#allocation11 + $0x598] sm:$0xff] %v5542
    %5875 = vst [vmem:[#allocation11 + $0x5a0] sm:$0xff] %v5544
    %5876 = vst [vmem:[#allocation11 + $0x5a8] sm:$0xff] %v5546
    %5877 = vst [vmem:[#allocation11 + $0x5b0] sm:$0xff] %v5548
    %5878 = vst [vmem:[#allocation11 + $0x5b8] sm:$0xff] %v5550
    %5879 = vst [vmem:[#allocation11 + $0x5c0] sm:$0xff] %v5552
    %5880 = vst [vmem:[#allocation11 + $0x5c8] sm:$0xff] %v5554
    %5881 = vst [vmem:[#allocation11 + $0x5d0] sm:$0xff] %v5556
    %5882 = vst [vmem:[#allocation11 + $0x5d8] sm:$0xff] %v5558
    %5883 = vst [vmem:[#allocation11 + $0x5e0] sm:$0xff] %v5560
    %5884 = vst [vmem:[#allocation11 + $0x5e8] sm:$0xff] %v5562
    %5885 = vst [vmem:[#allocation11 + $0x5f0] sm:$0xff] %v5564
    %5886 = vst [vmem:[#allocation11 + $0x5f8] sm:$0xff] %v5566
    %5887 = vst [vmem:[#allocation11 + $0x600] sm:$0xff] %v5568
    %5888 = vst [vmem:[#allocation11 + $0x608] sm:$0xff] %v5570
    %5889 = vst [vmem:[#allocation11 + $0x610] sm:$0xff] %v5572
    %5890 = vst [vmem:[#allocation11 + $0x618] sm:$0xff] %v5574
    %5891 = vst [vmem:[#allocation11 + $0x620] sm:$0xff] %v5576
    %5892 = vst [vmem:[#allocation11 + $0x628] sm:$0xff] %v5578
    %5893 = vst [vmem:[#allocation11 + $0x630] sm:$0xff] %v5580
    %5894 = vst [vmem:[#allocation11 + $0x638] sm:$0xff] %v5582
    %5895 = vst [vmem:[#allocation11 + $0x640] sm:$0xff] %v5584
    %5896 = vst [vmem:[#allocation11 + $0x648] sm:$0xff] %v5586
    %5897 = vst [vmem:[#allocation11 + $0x650] sm:$0xff] %v5588
    %5898 = vst [vmem:[#allocation11 + $0x658] sm:$0xff] %v5590
    %5899 = vst [vmem:[#allocation11 + $0x660] sm:$0xff] %v5592
    %5900 = vst [vmem:[#allocation11 + $0x668] sm:$0xff] %v5594
    %5901 = vst [vmem:[#allocation11 + $0x670] sm:$0xff] %v5596
    %5902 = vst [vmem:[#allocation11 + $0x678] sm:$0xff] %v5598
    %5903 = vst [vmem:[#allocation11 + $0x680] sm:$0xff] %v5600
    %5904 = vst [vmem:[#allocation11 + $0x688] sm:$0xff] %v5602
    %5905 = vst [vmem:[#allocation11 + $0x690] sm:$0xff] %v5604
    %5906 = vst [vmem:[#allocation11 + $0x698] sm:$0xff] %v5606
    %5907 = vst [vmem:[#allocation11 + $0x6a0] sm:$0xff] %v5608
    %5908 = vst [vmem:[#allocation11 + $0x6a8] sm:$0xff] %v5610
    %5909 = vst [vmem:[#allocation11 + $0x6b0] sm:$0xff] %v5612
    %5910 = vst [vmem:[#allocation11 + $0x6b8] sm:$0xff] %v5614
    %5911 = vst [vmem:[#allocation11 + $0x6c0] sm:$0xff] %v5616
    %5912 = vst [vmem:[#allocation11 + $0x6c8] sm:$0xff] %v5618
    %5913 = vst [vmem:[#allocation11 + $0x6d0] sm:$0xff] %v5620
    %5914 = vst [vmem:[#allocation11 + $0x6d8] sm:$0xff] %v5622
    %5915 = vst [vmem:[#allocation11 + $0x6e0] sm:$0xff] %v5624
    %5916 = vst [vmem:[#allocation11 + $0x6e8] sm:$0xff] %v5626
    %5917 = vst [vmem:[#allocation11 + $0x6f0] sm:$0xff] %v5628
    %5918 = vst [vmem:[#allocation11 + $0x6f8] sm:$0xff] %v5630
    %5919 = vst [vmem:[#allocation11 + $0x700] sm:$0xff] %v5632
    %5920 = vst [vmem:[#allocation11 + $0x708] sm:$0xff] %v5634
    %5921 = vst [vmem:[#allocation11 + $0x710] sm:$0xff] %v5636
    %5922 = vst [vmem:[#allocation11 + $0x718] sm:$0xff] %v5638
    %5923 = vst [vmem:[#allocation11 + $0x720] sm:$0xff] %v5640
    %5924 = vst [vmem:[#allocation11 + $0x728] sm:$0xff] %v5642
    %5925 = vst [vmem:[#allocation11 + $0x730] sm:$0xff] %v5644
    %5926 = vst [vmem:[#allocation11 + $0x738] sm:$0xff] %v5646
    %5927 = vst [vmem:[#allocation11 + $0x740] sm:$0xff] %v5648
    %5928 = vst [vmem:[#allocation11 + $0x748] sm:$0xff] %v5650
    %5929 = vst [vmem:[#allocation11 + $0x750] sm:$0xff] %v5652
    %5930 = vst [vmem:[#allocation11 + $0x758] sm:$0xff] %v5654
    %5931 = vst [vmem:[#allocation11 + $0x760] sm:$0xff] %v5656
    %5932 = vst [vmem:[#allocation11 + $0x768] sm:$0xff] %v5658
    %5933 = vst [vmem:[#allocation11 + $0x770] sm:$0xff] %v5660
    %5934 = vst [vmem:[#allocation11 + $0x778] sm:$0xff] %v5662
    %5935 = vst [vmem:[#allocation11 + $0x780] sm:$0xff] %v5664
    %5936 = vst [vmem:[#allocation11 + $0x788] sm:$0xff] %v5666
    %5937 = vst [vmem:[#allocation11 + $0x790] sm:$0xff] %v5668
    %5938 = vst [vmem:[#allocation11 + $0x798] sm:$0xff] %v5670
    %5939 = vst [vmem:[#allocation11 + $0x7a0] sm:$0xff] %v5672
    %5940 = vst [vmem:[#allocation11 + $0x7a8] sm:$0xff] %v5674
    %5941 = vst [vmem:[#allocation11 + $0x7b0] sm:$0xff] %v5676
    %5942 = vst [vmem:[#allocation11 + $0x7b8] sm:$0xff] %v5678
    %5943 = vst [vmem:[#allocation11 + $0x7c0] sm:$0xff] %v5680
    %5944 = vst [vmem:[#allocation11 + $0x7c8] sm:$0xff] %v5682
    %5945 = vst [vmem:[#allocation11 + $0x7d0] sm:$0xff] %v5684
    %5946 = vst [vmem:[#allocation11 + $0x7d8] sm:$0xff] %v5686
    %5947 = vst [vmem:[#allocation11 + $0x7e0] sm:$0xff] %v5688
    %5948 = vst [vmem:[#allocation11 + $0x7e8] sm:$0xff] %v5690
    %5949 = vst [vmem:[#allocation11 + $0x7f0] sm:$0xff] %v5692
    %5950 = vst [vmem:[#allocation11 + $0x7f8] sm:$0xff] %v5694
    // Predicated region
    $region54: #{tpu_custom_call.1} parent=1 // pred_check
      _
    $region55: #{tpu_custom_call.1} parent=1 // pred_check_branch
      %5952 = sbr.rel (0) target = $region57
    $region56: #{tpu_custom_call.1} parent=1 // pred_region
      %s5954 = ssub.s32 8192, 8192
      %5955 = vsyncadd [#allocation4], %s5954
      %s5956 = sshll.u32 [#allocation10], 4
      %s5957 = int_to_ptr.vmem [resolvable:$true] %s5956
      %5962 = dma.vmem_to_hbm [thread:$0]  %s5957, 8192, %s9, [#allocation4], 256, 256, 16
    $region57: #{tpu_custom_call.1} parent=1 // pred_fallthru
      _
    // Predicated region
    $region58: #{tpu_custom_call.1} parent=1 // pred_check
      _
    $region59: #{tpu_custom_call.1} parent=1 // pred_check_branch
      %5964 = sbr.rel (0) target = $region61
    $region60: #{tpu_custom_call.1} parent=1 // pred_region
      %s5966 = ssub.s32 32768, 32768
      %5967 = vsyncadd [#allocation12], %s5966
      %s5968 = sshll.u32 [#allocation11], 4
      %s5969 = int_to_ptr.vmem [resolvable:$true] %s5968
      %5974 = dma.vmem_to_hbm [thread:$0]  %s5969, 32768, %s10, [#allocation12], 1024, 1024, 64
    $region61: #{tpu_custom_call.1} parent=1 // pred_fallthru
      _
    // Predicated region
    $region62: #{tpu_custom_call.1} parent=1 // pred_check
      _
    $region63: #{tpu_custom_call.1} parent=1 // pred_check_branch
      %5976 = sbr.rel (0) target = $region65
    $region64: #{tpu_custom_call.1} parent=1 // pred_region
      %5977 = dma.done [#allocation4], 8192
    $region65: #{tpu_custom_call.1} parent=1 // pred_fallthru
      _
    // Predicated region
    $region66: #{tpu_custom_call.1} parent=1 // pred_check
      _
    $region67: #{tpu_custom_call.1} parent=1 // pred_check_branch
      %5979 = sbr.rel (0) target = $region69
    $region68: #{tpu_custom_call.1} parent=1 // pred_region
      %5980 = dma.done [#allocation12], 32768
    $region69: #{tpu_custom_call.1} parent=1 // pred_fallthru
      _
    %5981 = vsyncpa [#allocation3], 1
    %5982 = vsyncpa [#allocation6], 1
    %5983 = vsyncpa [#allocation9], 1
    %5984 = vsyncpa [#allocation4], 1
    %5985 = vsyncpa [#allocation12], 1

</llo_original>
